<compile_context>
chip_gen: v6e
topology: v6e:2x2x1
jax: 0.10.0
libtpu: 0.0.40
codegen_flags: <defaults>
</compile_context>

<pallas_src>
import math
from functools import partial

import jax
import jax.numpy as jnp
from jax.experimental import pallas as pl
from jax.experimental.pallas import tpu as pltpu

EMBED_DIM = 32
NUM_HEADS = 4
DEPTH = 2
MLP_DIM = 64
NUM_CLASSES = 10
PATCH = 16
LN_EPS = 1e-5
INIT_VALUES = 1e-5
S_PAD = 8            # sequence length padded to a sublane multiple
C_PAD = 128          # lane-dense classifier output slab
QKV_PAD = 128        # fused QKV output lanes (3*D = 96 padded to 128)


# ---------------------------------------------------------------- helpers (traced inside kernel)

def _layernorm(x, w, b):
    mu = jnp.mean(x, axis=-1, keepdims=True)
    var = jnp.mean((x - mu) ** 2, axis=-1, keepdims=True)
    return (x - mu) * jax.lax.rsqrt(var + LN_EPS) * w + b


def _gelu_exact(x):
    # matches torch.nn.GELU() default (erf formulation)
    return 0.5 * x * (1.0 + jax.lax.erf(x * (1.0 / math.sqrt(2.0))))


# ---------------------------------------------------------------- fused Pallas kernel

def vit_fused_kernel(patches_ref, patch_w_ref, tok_init_ref,
                     wqkv_ref, wproj_ref, w1_ref, b1_ref, w2_ref, vec_ref,
                     normh_ref, head_w_ref, head_b_ref,
                     out_ref, *, num_heads, depth, s_real, bb, out_rows):
    B = bb                                   # batch rows handled by this grid step
    S = S_PAD
    D = patch_w_ref.shape[1]
    H = num_heads
    hd = D // H

    # ---- patch embedding; cls token, pos embed and conv bias are folded into tok_init ----
    x = jnp.dot(patches_ref[...], patch_w_ref[...],
                preferred_element_type=jnp.float32)                    # (B*S, D)
    x = (x.reshape(B, S, D) + tok_init_ref[...][None]).reshape(B * S, D)

    # additive key-pad mask, hoisted & fully broadcast ONCE (0 real keys, -1e30 pad keys)
    key_ids = jax.lax.broadcasted_iota(jnp.int32, (1, S, S), 2)
    mask_bias = jnp.where(key_ids < s_real, 0.0, -1e30).astype(jnp.float32)
    mask_bias = jnp.broadcast_to(mask_bias, (B, S, S))

    for l in range(depth):                                             # static unroll (DEPTH=2)
        vec = vec_ref[l]                                               # (8, D)
        n1w, n1b, ls1 = vec[0:1], vec[1:2], vec[2:3]
        n2w, n2b, ls2 = vec[3:4], vec[4:5], vec[5:6]
        bproj, b2 = vec[6:7], vec[7:8]

        # ---- attention branch: x + ls1 * proj(softmax(q k^T) v) ----
        h = _layernorm(x, n1w, n1b)                                    # (B*S, D)
        # single fused QKV matmul; 1/sqrt(hd) already folded into the Q columns at pack time
        qkv = jnp.dot(h, wqkv_ref[l], preferred_element_type=jnp.float32)  # (B*S, 128)
        heads_out = []
        for hi in range(H):                                            # static unroll over heads
            q3 = qkv[:, hi * hd:(hi + 1) * hd].reshape(B, S, hd)
            k3 = qkv[:, D + hi * hd:D + (hi + 1) * hd].reshape(B, S, hd)
            v3 = qkv[:, 2 * D + hi * hd:2 * D + (hi + 1) * hd].reshape(B, S, hd)
            s_bst = jnp.einsum('bse,bte->bst', q3, k3,
                               preferred_element_type=jnp.float32) + mask_bias
            s_bst = s_bst - jnp.max(s_bst, axis=-1, keepdims=True)
            p = jnp.exp(s_bst)
            p = p / jnp.sum(p, axis=-1, keepdims=True)
            o3 = jnp.einsum('bst,bte->bse', p, v3,
                            preferred_element_type=jnp.float32)        # (B, S, hd)
            heads_out.append(o3.reshape(B * S, hd))
        # fold heads back with one lane concat + ONE (D, D) projection matmul
        attn = jnp.concatenate(heads_out, axis=-1)                     # (B*S, D), (h d) order
        attn = jnp.dot(attn, wproj_ref[l],
                       preferred_element_type=jnp.float32) + bproj
        x = x + attn * ls1

        # ---- MLP branch: x + ls2 * (W2(GELU(W1 h + b1)) + b2) ----
        h = _layernorm(x, n2w, n2b)
        z = jnp.dot(h, w1_ref[l], preferred_element_type=jnp.float32) + b1_ref[l]
        z = _gelu_exact(z)
        z = jnp.dot(z, w2_ref[l], preferred_element_type=jnp.float32) + b2
        x = x + z * ls2

    # ---- final LayerNorm + classification head on the CLS token (lane-dense output) ----
    normh = normh_ref[...]                                             # (2, D)
    cls = x.reshape(B, S, D)[:, 0, :]                                  # (B, D)
    cls = _layernorm(cls, normh[0:1], normh[1:2])
    logits = (jnp.dot(cls, head_w_ref[...], preferred_element_type=jnp.float32)
              + head_b_ref[...])                                       # (B, 128)
    if out_rows > B:                                                   # full-sublane store
        logits = jnp.concatenate(
            [logits, jnp.zeros((out_rows - B, logits.shape[1]), jnp.float32)], axis=0)
    out_ref[...] = logits


# ---------------------------------------------------------------- wrappers / parameter packing

def extract_patches(x):
    # (B, 3, H, W) -> (B, Np, 3*P*P); patch vector ordered (c, i, j) to match the
    # Conv2d(k=16, s=16) weight flatten; patches row-major (ph, pw) == flatten(2).transpose(1,2).
    B, C, Him, Wim = x.shape
    ph, pw = Him // PATCH, Wim // PATCH
    x = x.reshape(B, C, ph, PATCH, pw, PATCH)
    x = x.transpose(0, 2, 4, 1, 3, 5)
    return x.reshape(B, ph * pw, C * PATCH * PATCH)


def pack_params(params, num_patches):
    """One-time repack of parameters into a few VMEM-friendly slabs (outside the hot path)."""
    D, H, M = EMBED_DIM, NUM_HEADS, MLP_DIM
    hd = D // H
    scale = hd ** -0.5
    s_real = num_patches + 1
    assert s_real <= S_PAD

    # fold cls token, positional embedding slice and the conv bias into one (S_PAD, D) init slab
    pos = params['pos_embed'][0, :s_real, :]
    tok_init = jnp.zeros((S_PAD, D), jnp.float32)
    tok_init = tok_init.at[0, :].set(params['cls_token'][0, 0] + pos[0])
    tok_init = tok_init.at[1:s_real, :].set(pos[1:] + params['patch_b'][None, :])

    layers = params['layers']

    def fuse_qkv(w):
        # (D, 3*D) with column order (qkv, head, hd); fold attention scale into Q columns,
        # pad lanes 96 -> 128 so the fused-QKV matmul result store is unmasked.
        w = w.reshape(D, 3, H * hd)
        w = w.at[:, 0, :].multiply(scale)
        w = w.reshape(D, 3 * D)
        return jnp.pad(w, ((0, 0), (0, QKV_PAD - 3 * D)))

    wqkv_pack = jnp.stack([fuse_qkv(lp['wqkv']) for lp in layers])       # (L, D, 128)
    wproj_pack = jnp.stack([lp['wproj'] for lp in layers])               # (L, D, D)
    w1_pack = jnp.stack([lp['w1'] for lp in layers])                     # (L, D, M)
    b1_pack = jnp.stack([lp['b1'] for lp in layers])                     # (L, 1, M)
    w2_pack = jnp.stack([lp['w2'] for lp in layers])                     # (L, M, D)
    vec_pack = jnp.stack([jnp.concatenate(
        [lp['n1w'], lp['n1b'], lp['ls1'], lp['n2w'], lp['n2b'], lp['ls2'],
         lp['bproj'], lp['b2']], axis=0) for lp in layers])              # (L, 8, D)

    normh = jnp.concatenate([params['norm_w'], params['norm_b']], axis=0)      # (2, D)
    head_w = jnp.pad(params['head_w'], ((0, 0), (0, C_PAD - NUM_CLASSES)))     # (D, 128)
    head_b = jnp.pad(params['head_b'], ((0, 0), (0, C_PAD - NUM_CLASSES)))     # (1, 128)

    return dict(patch_w=params['patch_w'], tok_init=tok_init,
                wqkv=wqkv_pack, wproj=wproj_pack, w1=w1_pack, b1=b1_pack,
                w2=w2_pack, vec=vec_pack, normh=normh, head_w=head_w, head_b=head_b)


@partial(jax.jit, static_argnames=('s_real', 'batch_block'))
def vit_forward(x_img, packed, s_real, batch_block=1):
    B = x_img.shape[0]
    bb = batch_block
    nblocks = -(-B // bb)
    B_pad = nblocks * bb

    patches = extract_patches(x_img)                                   # (B, Np, 768)
    Np = patches.shape[1]
    # token grid rows per image: 0 = cls slot (zero patch), 1..Np = patches, rest = pad
    # TODO(synk): for large batches, drop this wrapper-side pad (extra HBM copy of the only
    # batch-scaling input) and place the patch embedding into rows 1..Np in-kernel.
    patches_padded = jnp.pad(patches, ((0, B_pad - B), (1, S_PAD - 1 - Np), (0, 0)))
    patches_padded = patches_padded.reshape(B_pad * S_PAD, -1)

    out_rows = max(8, ((bb + 7) // 8) * 8)

    def full_spec(a):
        return pl.BlockSpec(a.shape, lambda i, _nd=a.ndim: (0,) * _nd)

    out = pl.pallas_call(
        partial(vit_fused_kernel, num_heads=NUM_HEADS, depth=DEPTH,
                s_real=s_real, bb=bb, out_rows=out_rows),
        grid=(nblocks,),
        in_specs=[
            pl.BlockSpec((bb * S_PAD, patches_padded.shape[1]), lambda i: (i, 0)),
            full_spec(packed['patch_w']), full_spec(packed['tok_init']),
            full_spec(packed['wqkv']), full_spec(packed['wproj']),
            full_spec(packed['w1']), full_spec(packed['b1']), full_spec(packed['w2']),
            full_spec(packed['vec']), full_spec(packed['normh']),
            full_spec(packed['head_w']), full_spec(packed['head_b']),
        ],
        out_specs=pl.BlockSpec((out_rows, C_PAD), lambda i: (i, 0)),
        out_shape=jax.ShapeDtypeStruct((nblocks * out_rows, C_PAD), jnp.float32),
        compiler_params=pltpu.CompilerParams(dimension_semantics=("parallel",)),
    )(patches_padded, packed['patch_w'], packed['tok_init'],
      packed['wqkv'], packed['wproj'], packed['w1'], packed['b1'],
      packed['w2'], packed['vec'], packed['normh'],
      packed['head_w'], packed['head_b'])

    out = out.reshape(nblocks, out_rows, C_PAD)[:, :bb, :NUM_CLASSES]
    return out.reshape(nblocks * bb, NUM_CLASSES)[:B]
    # TODO(synk): pos_dropout / attention dropout / DropPath are identity in eval mode (skipped).


# ---------------------------------------------------------------- deterministic parameter init

def xavier_uniform(key, shape):
    fan_in, fan_out = shape
    limit = math.sqrt(6.0 / (fan_in + fan_out))
    return jax.random.uniform(key, shape, jnp.float32, -limit, limit)


if __name__ == "__main__":
    kit = iter(jax.random.split(jax.random.PRNGKey(0), 64))
    D, M, C = EMBED_DIM, MLP_DIM, NUM_CLASSES

    params = {
        'cls_token': jax.random.normal(next(kit), (1, 1, D), jnp.float32) * 0.02,
        'pos_embed': jax.random.normal(next(kit), (1, 1025, D), jnp.float32) * 0.02,
        'patch_w': jax.random.normal(next(kit), (3 * PATCH * PATCH, D), jnp.float32) * 0.02,
        'patch_b': jnp.zeros((D,), jnp.float32),
        'norm_w': jnp.ones((1, D), jnp.float32),
        'norm_b': jnp.zeros((1, D), jnp.float32),
        'head_w': xavier_uniform(next(kit), (D, C)),
        'head_b': jnp.zeros((1, C), jnp.float32),
        'layers': [],
    }
    for _ in range(DEPTH):
        params['layers'].append({
            'n1w': jnp.ones((1, D), jnp.float32), 'n1b': jnp.zeros((1, D), jnp.float32),
            'wqkv': xavier_uniform(next(kit), (D, 3 * D)),
            'wproj': xavier_uniform(next(kit), (D, D)),
            'bproj': jnp.zeros((1, D), jnp.float32),
            'ls1': jnp.full((1, D), INIT_VALUES, jnp.float32),
            'n2w': jnp.ones((1, D), jnp.float32), 'n2b': jnp.zeros((1, D), jnp.float32),
            'w1': xavier_uniform(next(kit), (D, M)), 'b1': jnp.zeros((1, M), jnp.float32),
            'w2': xavier_uniform(next(kit), (M, D)), 'b2': jnp.zeros((1, D), jnp.float32),
            'ls2': jnp.full((1, D), INIT_VALUES, jnp.float32),
        })

    # small image: B=2, 3x32x32 -> 2x2 = 4 patches -> sequence length 5 (padded to 8)
    x_img = jax.random.normal(next(kit), (2, 3, 32, 32), jnp.float32)
    num_patches = (32 // PATCH) * (32 // PATCH)
    s_real = num_patches + 1

    packed = pack_params(params, num_patches)
    packed = {k: jax.block_until_ready(v) for k, v in packed.items()}

    out = vit_forward(x_img, packed, s_real=s_real, batch_block=1)      # (2, NUM_CLASSES)
    jax.block_until_ready(out)
    assert out.shape == (2, NUM_CLASSES)
    assert bool(jnp.all(jnp.isfinite(out)))
    print("KERNEL_OK")
</pallas_src>

<mosaic_0001>
module attributes {stable_mosaic.version = 11 : i64} {
  func.func @vit_fused_kernel(%arg0: i32, %arg1: memref<8x768xf32, #tpu.memory_space<vmem>>, %arg2: memref<768x32xf32, #tpu.memory_space<vmem>>, %arg3: memref<8x32xf32, #tpu.memory_space<vmem>>, %arg4: memref<2x32x128xf32, #tpu.memory_space<vmem>>, %arg5: memref<2x32x32xf32, #tpu.memory_space<vmem>>, %arg6: memref<2x32x64xf32, #tpu.memory_space<vmem>>, %arg7: memref<2x1x64xf32, #tpu.memory_space<vmem>>, %arg8: memref<2x64x32xf32, #tpu.memory_space<vmem>>, %arg9: memref<2x8x32xf32, #tpu.memory_space<vmem>>, %arg10: memref<2x32xf32, #tpu.memory_space<vmem>>, %arg11: memref<32x128xf32, #tpu.memory_space<vmem>>, %arg12: memref<1x128xf32, #tpu.memory_space<vmem>>, %arg13: memref<8x128xf32, #tpu.memory_space<vmem>>) attributes {dimension_semantics = [#tpu.dimension_semantics<parallel>], iteration_bounds = array<i64: 2>, scalar_prefetch = 0 : i64, scratch_operands = 0 : i64, tpu.core_type = #tpu.core_type<tc>, window_params = [{transform_indices = @transform_0, window_bounds = array<i64: 8, 768>}, {pipeline_mode = #tpu.pipeline_mode<synchronous>, transform_indices = @transform_1, window_bounds = array<i64: 768, 32>}, {pipeline_mode = #tpu.pipeline_mode<synchronous>, transform_indices = @transform_2, window_bounds = array<i64: 8, 32>}, {pipeline_mode = #tpu.pipeline_mode<synchronous>, transform_indices = @transform_3, window_bounds = array<i64: 2, 32, 128>}, {pipeline_mode = #tpu.pipeline_mode<synchronous>, transform_indices = @transform_4, window_bounds = array<i64: 2, 32, 32>}, {pipeline_mode = #tpu.pipeline_mode<synchronous>, transform_indices = @transform_5, window_bounds = array<i64: 2, 32, 64>}, {pipeline_mode = #tpu.pipeline_mode<synchronous>, transform_indices = @transform_6, window_bounds = array<i64: 2, 1, 64>}, {pipeline_mode = #tpu.pipeline_mode<synchronous>, transform_indices = @transform_7, window_bounds = array<i64: 2, 64, 32>}, {pipeline_mode = #tpu.pipeline_mode<synchronous>, transform_indices = @transform_8, window_bounds = array<i64: 2, 8, 32>}, {pipeline_mode = #tpu.pipeline_mode<synchronous>, transform_indices = @transform_9, window_bounds = array<i64: 2, 32>}, {pipeline_mode = #tpu.pipeline_mode<synchronous>, transform_indices = @transform_10, window_bounds = array<i64: 32, 128>}, {pipeline_mode = #tpu.pipeline_mode<synchronous>, transform_indices = @transform_11, window_bounds = array<i64: 1, 128>}, {transform_indices = @transform_12, window_bounds = array<i64: 8, 128>}]} {
    %c0 = arith.constant 0 : index
    %c0_0 = arith.constant 0 : index
    %0 = vector.load %arg1[%c0, %c0_0] : memref<8x768xf32, #tpu.memory_space<vmem>>, vector<8x768xf32>
    %c0_1 = arith.constant 0 : index
    %c0_2 = arith.constant 0 : index
    %1 = vector.load %arg2[%c0_1, %c0_2] : memref<768x32xf32, #tpu.memory_space<vmem>>, vector<768x32xf32>
    %cst = arith.constant dense<0.000000e+00> : vector<8x32xf32>
    %2 = tpu.matmul %0, %1, %cst {dimension_numbers = #tpu.dot_dimension_numbers<[1], [0], [0], [1], [0, 0, 1, 1], [], []>} : vector<8x768xf32>, vector<768x32xf32>, vector<8x32xf32> -> vector<8x32xf32>
    %3 = vector.shape_cast %2 : vector<8x32xf32> to vector<1x8x32xf32>
    %c0_3 = arith.constant 0 : index
    %c0_4 = arith.constant 0 : index
    %4 = vector.load %arg3[%c0_3, %c0_4] : memref<8x32xf32, #tpu.memory_space<vmem>>, vector<8x32xf32>
    %5 = vector.shape_cast %4 : vector<8x32xf32> to vector<1x8x32xf32>
    %6 = arith.addf %3, %5 : vector<1x8x32xf32>
    %7 = vector.shape_cast %6 : vector<1x8x32xf32> to vector<8x32xf32>
    %8 = tpu.iota {dimensions = array<i32: 2>} : vector<1x8x8xi32>
    %c5_i32 = arith.constant 5 : i32
    %9 = vector.broadcast %c5_i32 : i32 to vector<1x8x8xi32>
    %10 = arith.cmpi slt, %8, %9 : vector<1x8x8xi32>
    %cst_5 = arith.constant 0.000000e+00 : f32
    %cst_6 = arith.constant -1.000000e+30 : f32
    %11 = vector.broadcast %cst_5 : f32 to vector<1x8x8xf32>
    %12 = vector.broadcast %cst_6 : f32 to vector<1x8x8xf32>
    %13 = arith.select %10, %11, %12 : vector<1x8x8xi1>, vector<1x8x8xf32>
    %c0_7 = arith.constant 0 : index
    %c0_8 = arith.constant 0 : index
    %c0_9 = arith.constant 0 : index
    %14 = vector.load %arg9[%c0_7, %c0_8, %c0_9] : memref<2x8x32xf32, #tpu.memory_space<vmem>>, vector<1x8x32xf32>
    %15 = vector.shape_cast %14 : vector<1x8x32xf32> to vector<8x32xf32>
    %16 = vector.extract_strided_slice %15 {offsets = [0, 0], sizes = [1, 32], strides = [1, 1]} : vector<8x32xf32> to vector<1x32xf32>
    %17 = vector.extract_strided_slice %15 {offsets = [1, 0], sizes = [1, 32], strides = [1, 1]} : vector<8x32xf32> to vector<1x32xf32>
    %18 = vector.extract_strided_slice %15 {offsets = [2, 0], sizes = [1, 32], strides = [1, 1]} : vector<8x32xf32> to vector<1x32xf32>
    %19 = vector.extract_strided_slice %15 {offsets = [3, 0], sizes = [1, 32], strides = [1, 1]} : vector<8x32xf32> to vector<1x32xf32>
    %20 = vector.extract_strided_slice %15 {offsets = [4, 0], sizes = [1, 32], strides = [1, 1]} : vector<8x32xf32> to vector<1x32xf32>
    %21 = vector.extract_strided_slice %15 {offsets = [5, 0], sizes = [1, 32], strides = [1, 1]} : vector<8x32xf32> to vector<1x32xf32>
    %22 = vector.extract_strided_slice %15 {offsets = [6, 0], sizes = [1, 32], strides = [1, 1]} : vector<8x32xf32> to vector<1x32xf32>
    %23 = vector.extract_strided_slice %15 {offsets = [7, 0], sizes = [1, 32], strides = [1, 1]} : vector<8x32xf32> to vector<1x32xf32>
    %cst_10 = arith.constant dense<0.000000e+00> : vector<8xf32>
    %24 = vector.multi_reduction <add>, %7, %cst_10 [1] : vector<8x32xf32> to vector<8xf32>
    %25 = vector.shape_cast %24 : vector<8xf32> to vector<8x1xf32>
    %cst_11 = arith.constant 3.200000e+01 : f32
    %26 = vector.broadcast %cst_11 : f32 to vector<8x1xf32>
    %27 = arith.divf %25, %26 : vector<8x1xf32>
    %28 = vector.broadcast %27 : vector<8x1xf32> to vector<8x32xf32>
    %29 = arith.subf %7, %28 : vector<8x32xf32>
    %30 = arith.mulf %29, %29 : vector<8x32xf32>
    %cst_12 = arith.constant dense<0.000000e+00> : vector<8xf32>
    %31 = vector.multi_reduction <add>, %30, %cst_12 [1] : vector<8x32xf32> to vector<8xf32>
    %32 = vector.shape_cast %31 : vector<8xf32> to vector<8x1xf32>
    %cst_13 = arith.constant 3.200000e+01 : f32
    %33 = vector.broadcast %cst_13 : f32 to vector<8x1xf32>
    %34 = arith.divf %32, %33 : vector<8x1xf32>
    %35 = vector.broadcast %27 : vector<8x1xf32> to vector<8x32xf32>
    %36 = arith.subf %7, %35 : vector<8x32xf32>
    %cst_14 = arith.constant 9.99999974E-6 : f32
    %37 = vector.broadcast %cst_14 : f32 to vector<8x1xf32>
    %38 = arith.addf %34, %37 : vector<8x1xf32>
    %39 = math.rsqrt %38 : vector<8x1xf32>
    %40 = vector.broadcast %39 : vector<8x1xf32> to vector<8x32xf32>
    %41 = arith.mulf %36, %40 : vector<8x32xf32>
    %42 = vector.broadcast %16 : vector<1x32xf32> to vector<8x32xf32>
    %43 = arith.mulf %41, %42 : vector<8x32xf32>
    %44 = vector.broadcast %17 : vector<1x32xf32> to vector<8x32xf32>
    %45 = arith.addf %43, %44 : vector<8x32xf32>
    %c0_15 = arith.constant 0 : index
    %c0_16 = arith.constant 0 : index
    %c0_17 = arith.constant 0 : index
    %46 = vector.load %arg4[%c0_15, %c0_16, %c0_17] : memref<2x32x128xf32, #tpu.memory_space<vmem>>, vector<1x32x128xf32>
    %47 = vector.shape_cast %46 : vector<1x32x128xf32> to vector<32x128xf32>
    %cst_18 = arith.constant dense<0.000000e+00> : vector<8x128xf32>
    %48 = tpu.matmul %45, %47, %cst_18 {dimension_numbers = #tpu.dot_dimension_numbers<[1], [0], [0], [1], [0, 0, 1, 1], [], []>} : vector<8x32xf32>, vector<32x128xf32>, vector<8x128xf32> -> vector<8x128xf32>
    %49 = vector.extract_strided_slice %48 {offsets = [0, 0], sizes = [8, 8], strides = [1, 1]} : vector<8x128xf32> to vector<8x8xf32>
    %50 = vector.shape_cast %49 : vector<8x8xf32> to vector<1x8x8xf32>
    %51 = vector.extract_strided_slice %48 {offsets = [0, 32], sizes = [8, 8], strides = [1, 1]} : vector<8x128xf32> to vector<8x8xf32>
    %52 = vector.shape_cast %51 : vector<8x8xf32> to vector<1x8x8xf32>
    %53 = vector.extract_strided_slice %48 {offsets = [0, 64], sizes = [8, 8], strides = [1, 1]} : vector<8x128xf32> to vector<8x8xf32>
    %54 = vector.shape_cast %53 : vector<8x8xf32> to vector<1x8x8xf32>
    "tpu.trace_start"() <{level = 10 : i32, message = "bse,bte->bst"}> : () -> ()
    %cst_19 = arith.constant dense<0.000000e+00> : vector<1x8x8xf32>
    %55 = tpu.matmul %50, %52, %cst_19 {dimension_numbers = #tpu.dot_dimension_numbers<[2], [2], [1], [1], [0, 0, 0, 1, 1, 1], [0], [0]>} : vector<1x8x8xf32>, vector<1x8x8xf32>, vector<1x8x8xf32> -> vector<1x8x8xf32>
    "tpu.trace_stop"() : () -> ()
    %56 = arith.addf %55, %13 : vector<1x8x8xf32>
    %cst_20 = arith.constant dense<0xFF800000> : vector<1x8xf32>
    %57 = vector.multi_reduction <maximumf>, %56, %cst_20 [2] : vector<1x8x8xf32> to vector<1x8xf32>
    %58 = vector.shape_cast %57 : vector<1x8xf32> to vector<1x8x1xf32>
    %59 = vector.broadcast %58 : vector<1x8x1xf32> to vector<1x8x8xf32>
    %60 = arith.subf %56, %59 : vector<1x8x8xf32>
    %61 = math.exp %60 : vector<1x8x8xf32>
    %cst_21 = arith.constant dense<0.000000e+00> : vector<1x8xf32>
    %62 = vector.multi_reduction <add>, %61, %cst_21 [2] : vector<1x8x8xf32> to vector<1x8xf32>
    %63 = vector.shape_cast %62 : vector<1x8xf32> to vector<1x8x1xf32>
    %64 = vector.broadcast %63 : vector<1x8x1xf32> to vector<1x8x8xf32>
    %65 = arith.divf %61, %64 : vector<1x8x8xf32>
    "tpu.trace_start"() <{level = 10 : i32, message = "bst,bte->bse"}> : () -> ()
    %cst_22 = arith.constant dense<0.000000e+00> : vector<1x8x8xf32>
    %66 = tpu.matmul %65, %54, %cst_22 {dimension_numbers = #tpu.dot_dimension_numbers<[2], [1], [1], [2], [0, 0, 0, 1, 1, 2], [0], [0]>} : vector<1x8x8xf32>, vector<1x8x8xf32>, vector<1x8x8xf32> -> vector<1x8x8xf32>
    "tpu.trace_stop"() : () -> ()
    %67 = vector.shape_cast %66 : vector<1x8x8xf32> to vector<8x8xf32>
    %68 = vector.extract_strided_slice %48 {offsets = [0, 8], sizes = [8, 8], strides = [1, 1]} : vector<8x128xf32> to vector<8x8xf32>
    %69 = vector.shape_cast %68 : vector<8x8xf32> to vector<1x8x8xf32>
    %70 = vector.extract_strided_slice %48 {offsets = [0, 40], sizes = [8, 8], strides = [1, 1]} : vector<8x128xf32> to vector<8x8xf32>
    %71 = vector.shape_cast %70 : vector<8x8xf32> to vector<1x8x8xf32>
    %72 = vector.extract_strided_slice %48 {offsets = [0, 72], sizes = [8, 8], strides = [1, 1]} : vector<8x128xf32> to vector<8x8xf32>
    %73 = vector.shape_cast %72 : vector<8x8xf32> to vector<1x8x8xf32>
    "tpu.trace_start"() <{level = 10 : i32, message = "bse,bte->bst"}> : () -> ()
    %cst_23 = arith.constant dense<0.000000e+00> : vector<1x8x8xf32>
    %74 = tpu.matmul %69, %71, %cst_23 {dimension_numbers = #tpu.dot_dimension_numbers<[2], [2], [1], [1], [0, 0, 0, 1, 1, 1], [0], [0]>} : vector<1x8x8xf32>, vector<1x8x8xf32>, vector<1x8x8xf32> -> vector<1x8x8xf32>
    "tpu.trace_stop"() : () -> ()
    %75 = arith.addf %74, %13 : vector<1x8x8xf32>
    %cst_24 = arith.constant dense<0xFF800000> : vector<1x8xf32>
    %76 = vector.multi_reduction <maximumf>, %75, %cst_24 [2] : vector<1x8x8xf32> to vector<1x8xf32>
    %77 = vector.shape_cast %76 : vector<1x8xf32> to vector<1x8x1xf32>
    %78 = vector.broadcast %77 : vector<1x8x1xf32> to vector<1x8x8xf32>
    %79 = arith.subf %75, %78 : vector<1x8x8xf32>
    %80 = math.exp %79 : vector<1x8x8xf32>
    %cst_25 = arith.constant dense<0.000000e+00> : vector<1x8xf32>
    %81 = vector.multi_reduction <add>, %80, %cst_25 [2] : vector<1x8x8xf32> to vector<1x8xf32>
    %82 = vector.shape_cast %81 : vector<1x8xf32> to vector<1x8x1xf32>
    %83 = vector.broadcast %82 : vector<1x8x1xf32> to vector<1x8x8xf32>
    %84 = arith.divf %80, %83 : vector<1x8x8xf32>
    "tpu.trace_start"() <{level = 10 : i32, message = "bst,bte->bse"}> : () -> ()
    %cst_26 = arith.constant dense<0.000000e+00> : vector<1x8x8xf32>
    %85 = tpu.matmul %84, %73, %cst_26 {dimension_numbers = #tpu.dot_dimension_numbers<[2], [1], [1], [2], [0, 0, 0, 1, 1, 2], [0], [0]>} : vector<1x8x8xf32>, vector<1x8x8xf32>, vector<1x8x8xf32> -> vector<1x8x8xf32>
    "tpu.trace_stop"() : () -> ()
    %86 = vector.shape_cast %85 : vector<1x8x8xf32> to vector<8x8xf32>
    %87 = vector.extract_strided_slice %48 {offsets = [0, 16], sizes = [8, 8], strides = [1, 1]} : vector<8x128xf32> to vector<8x8xf32>
    %88 = vector.shape_cast %87 : vector<8x8xf32> to vector<1x8x8xf32>
    %89 = vector.extract_strided_slice %48 {offsets = [0, 48], sizes = [8, 8], strides = [1, 1]} : vector<8x128xf32> to vector<8x8xf32>
    %90 = vector.shape_cast %89 : vector<8x8xf32> to vector<1x8x8xf32>
    %91 = vector.extract_strided_slice %48 {offsets = [0, 80], sizes = [8, 8], strides = [1, 1]} : vector<8x128xf32> to vector<8x8xf32>
    %92 = vector.shape_cast %91 : vector<8x8xf32> to vector<1x8x8xf32>
    "tpu.trace_start"() <{level = 10 : i32, message = "bse,bte->bst"}> : () -> ()
    %cst_27 = arith.constant dense<0.000000e+00> : vector<1x8x8xf32>
    %93 = tpu.matmul %88, %90, %cst_27 {dimension_numbers = #tpu.dot_dimension_numbers<[2], [2], [1], [1], [0, 0, 0, 1, 1, 1], [0], [0]>} : vector<1x8x8xf32>, vector<1x8x8xf32>, vector<1x8x8xf32> -> vector<1x8x8xf32>
    "tpu.trace_stop"() : () -> ()
    %94 = arith.addf %93, %13 : vector<1x8x8xf32>
    %cst_28 = arith.constant dense<0xFF800000> : vector<1x8xf32>
    %95 = vector.multi_reduction <maximumf>, %94, %cst_28 [2] : vector<1x8x8xf32> to vector<1x8xf32>
    %96 = vector.shape_cast %95 : vector<1x8xf32> to vector<1x8x1xf32>
    %97 = vector.broadcast %96 : vector<1x8x1xf32> to vector<1x8x8xf32>
    %98 = arith.subf %94, %97 : vector<1x8x8xf32>
    %99 = math.exp %98 : vector<1x8x8xf32>
    %cst_29 = arith.constant dense<0.000000e+00> : vector<1x8xf32>
    %100 = vector.multi_reduction <add>, %99, %cst_29 [2] : vector<1x8x8xf32> to vector<1x8xf32>
    %101 = vector.shape_cast %100 : vector<1x8xf32> to vector<1x8x1xf32>
    %102 = vector.broadcast %101 : vector<1x8x1xf32> to vector<1x8x8xf32>
    %103 = arith.divf %99, %102 : vector<1x8x8xf32>
    "tpu.trace_start"() <{level = 10 : i32, message = "bst,bte->bse"}> : () -> ()
    %cst_30 = arith.constant dense<0.000000e+00> : vector<1x8x8xf32>
    %104 = tpu.matmul %103, %92, %cst_30 {dimension_numbers = #tpu.dot_dimension_numbers<[2], [1], [1], [2], [0, 0, 0, 1, 1, 2], [0], [0]>} : vector<1x8x8xf32>, vector<1x8x8xf32>, vector<1x8x8xf32> -> vector<1x8x8xf32>
    "tpu.trace_stop"() : () -> ()
    %105 = vector.shape_cast %104 : vector<1x8x8xf32> to vector<8x8xf32>
    %106 = vector.extract_strided_slice %48 {offsets = [0, 24], sizes = [8, 8], strides = [1, 1]} : vector<8x128xf32> to vector<8x8xf32>
    %107 = vector.shape_cast %106 : vector<8x8xf32> to vector<1x8x8xf32>
    %108 = vector.extract_strided_slice %48 {offsets = [0, 56], sizes = [8, 8], strides = [1, 1]} : vector<8x128xf32> to vector<8x8xf32>
    %109 = vector.shape_cast %108 : vector<8x8xf32> to vector<1x8x8xf32>
    %110 = vector.extract_strided_slice %48 {offsets = [0, 88], sizes = [8, 8], strides = [1, 1]} : vector<8x128xf32> to vector<8x8xf32>
    %111 = vector.shape_cast %110 : vector<8x8xf32> to vector<1x8x8xf32>
    "tpu.trace_start"() <{level = 10 : i32, message = "bse,bte->bst"}> : () -> ()
    %cst_31 = arith.constant dense<0.000000e+00> : vector<1x8x8xf32>
    %112 = tpu.matmul %107, %109, %cst_31 {dimension_numbers = #tpu.dot_dimension_numbers<[2], [2], [1], [1], [0, 0, 0, 1, 1, 1], [0], [0]>} : vector<1x8x8xf32>, vector<1x8x8xf32>, vector<1x8x8xf32> -> vector<1x8x8xf32>
    "tpu.trace_stop"() : () -> ()
    %113 = arith.addf %112, %13 : vector<1x8x8xf32>
    %cst_32 = arith.constant dense<0xFF800000> : vector<1x8xf32>
    %114 = vector.multi_reduction <maximumf>, %113, %cst_32 [2] : vector<1x8x8xf32> to vector<1x8xf32>
    %115 = vector.shape_cast %114 : vector<1x8xf32> to vector<1x8x1xf32>
    %116 = vector.broadcast %115 : vector<1x8x1xf32> to vector<1x8x8xf32>
    %117 = arith.subf %113, %116 : vector<1x8x8xf32>
    %118 = math.exp %117 : vector<1x8x8xf32>
    %cst_33 = arith.constant dense<0.000000e+00> : vector<1x8xf32>
    %119 = vector.multi_reduction <add>, %118, %cst_33 [2] : vector<1x8x8xf32> to vector<1x8xf32>
    %120 = vector.shape_cast %119 : vector<1x8xf32> to vector<1x8x1xf32>
    %121 = vector.broadcast %120 : vector<1x8x1xf32> to vector<1x8x8xf32>
    %122 = arith.divf %118, %121 : vector<1x8x8xf32>
    "tpu.trace_start"() <{level = 10 : i32, message = "bst,bte->bse"}> : () -> ()
    %cst_34 = arith.constant dense<0.000000e+00> : vector<1x8x8xf32>
    %123 = tpu.matmul %122, %111, %cst_34 {dimension_numbers = #tpu.dot_dimension_numbers<[2], [1], [1], [2], [0, 0, 0, 1, 1, 2], [0], [0]>} : vector<1x8x8xf32>, vector<1x8x8xf32>, vector<1x8x8xf32> -> vector<1x8x8xf32>
    "tpu.trace_stop"() : () -> ()
    %124 = vector.shape_cast %123 : vector<1x8x8xf32> to vector<8x8xf32>
    %125 = tpu.concatenate %67, %86, %105, %124 in 1 : vector<8x8xf32>, vector<8x8xf32>, vector<8x8xf32>, vector<8x8xf32> -> vector<8x32xf32>
    %c0_35 = arith.constant 0 : index
    %c0_36 = arith.constant 0 : index
    %c0_37 = arith.constant 0 : index
    %126 = vector.load %arg5[%c0_35, %c0_36, %c0_37] : memref<2x32x32xf32, #tpu.memory_space<vmem>>, vector<1x32x32xf32>
    %127 = vector.shape_cast %126 : vector<1x32x32xf32> to vector<32x32xf32>
    %cst_38 = arith.constant dense<0.000000e+00> : vector<8x32xf32>
    %128 = tpu.matmul %125, %127, %cst_38 {dimension_numbers = #tpu.dot_dimension_numbers<[1], [0], [0], [1], [0, 0, 1, 1], [], []>} : vector<8x32xf32>, vector<32x32xf32>, vector<8x32xf32> -> vector<8x32xf32>
    %129 = vector.broadcast %22 : vector<1x32xf32> to vector<8x32xf32>
    %130 = arith.addf %128, %129 : vector<8x32xf32>
    %131 = vector.broadcast %18 : vector<1x32xf32> to vector<8x32xf32>
    %132 = arith.mulf %130, %131 : vector<8x32xf32>
    %133 = arith.addf %7, %132 : vector<8x32xf32>
    %cst_39 = arith.constant dense<0.000000e+00> : vector<8xf32>
    %134 = vector.multi_reduction <add>, %133, %cst_39 [1] : vector<8x32xf32> to vector<8xf32>
    %135 = vector.shape_cast %134 : vector<8xf32> to vector<8x1xf32>
    %cst_40 = arith.constant 3.200000e+01 : f32
    %136 = vector.broadcast %cst_40 : f32 to vector<8x1xf32>
    %137 = arith.divf %135, %136 : vector<8x1xf32>
    %138 = vector.broadcast %137 : vector<8x1xf32> to vector<8x32xf32>
    %139 = arith.subf %133, %138 : vector<8x32xf32>
    %140 = arith.mulf %139, %139 : vector<8x32xf32>
    %cst_41 = arith.constant dense<0.000000e+00> : vector<8xf32>
    %141 = vector.multi_reduction <add>, %140, %cst_41 [1] : vector<8x32xf32> to vector<8xf32>
    %142 = vector.shape_cast %141 : vector<8xf32> to vector<8x1xf32>
    %cst_42 = arith.constant 3.200000e+01 : f32
    %143 = vector.broadcast %cst_42 : f32 to vector<8x1xf32>
    %144 = arith.divf %142, %143 : vector<8x1xf32>
    %145 = vector.broadcast %137 : vector<8x1xf32> to vector<8x32xf32>
    %146 = arith.subf %133, %145 : vector<8x32xf32>
    %cst_43 = arith.constant 9.99999974E-6 : f32
    %147 = vector.broadcast %cst_43 : f32 to vector<8x1xf32>
    %148 = arith.addf %144, %147 : vector<8x1xf32>
    %149 = math.rsqrt %148 : vector<8x1xf32>
    %150 = vector.broadcast %149 : vector<8x1xf32> to vector<8x32xf32>
    %151 = arith.mulf %146, %150 : vector<8x32xf32>
    %152 = vector.broadcast %19 : vector<1x32xf32> to vector<8x32xf32>
    %153 = arith.mulf %151, %152 : vector<8x32xf32>
    %154 = vector.broadcast %20 : vector<1x32xf32> to vector<8x32xf32>
    %155 = arith.addf %153, %154 : vector<8x32xf32>
    %c0_44 = arith.constant 0 : index
    %c0_45 = arith.constant 0 : index
    %c0_46 = arith.constant 0 : index
    %156 = vector.load %arg6[%c0_44, %c0_45, %c0_46] : memref<2x32x64xf32, #tpu.memory_space<vmem>>, vector<1x32x64xf32>
    %157 = vector.shape_cast %156 : vector<1x32x64xf32> to vector<32x64xf32>
    %cst_47 = arith.constant dense<0.000000e+00> : vector<8x64xf32>
    %158 = tpu.matmul %155, %157, %cst_47 {dimension_numbers = #tpu.dot_dimension_numbers<[1], [0], [0], [1], [0, 0, 1, 1], [], []>} : vector<8x32xf32>, vector<32x64xf32>, vector<8x64xf32> -> vector<8x64xf32>
    %c0_48 = arith.constant 0 : index
    %c0_49 = arith.constant 0 : index
    %c0_50 = arith.constant 0 : index
    %159 = vector.load %arg7[%c0_48, %c0_49, %c0_50] : memref<2x1x64xf32, #tpu.memory_space<vmem>>, vector<1x1x64xf32>
    %160 = vector.shape_cast %159 : vector<1x1x64xf32> to vector<1x64xf32>
    %161 = vector.broadcast %160 : vector<1x64xf32> to vector<8x64xf32>
    %162 = arith.addf %158, %161 : vector<8x64xf32>
    %cst_51 = arith.constant 5.000000e-01 : f32
    %163 = vector.broadcast %cst_51 : f32 to vector<8x64xf32>
    %164 = arith.mulf %163, %162 : vector<8x64xf32>
    %cst_52 = arith.constant 0.707106769 : f32
    %165 = vector.broadcast %cst_52 : f32 to vector<8x64xf32>
    %166 = arith.mulf %162, %165 : vector<8x64xf32>
    %167 = math.erf %166 : vector<8x64xf32>
    %cst_53 = arith.constant 1.000000e+00 : f32
    %168 = vector.broadcast %cst_53 : f32 to vector<8x64xf32>
    %169 = arith.addf %168, %167 : vector<8x64xf32>
    %170 = arith.mulf %164, %169 : vector<8x64xf32>
    %c0_54 = arith.constant 0 : index
    %c0_55 = arith.constant 0 : index
    %c0_56 = arith.constant 0 : index
    %171 = vector.load %arg8[%c0_54, %c0_55, %c0_56] : memref<2x64x32xf32, #tpu.memory_space<vmem>>, vector<1x64x32xf32>
    %172 = vector.shape_cast %171 : vector<1x64x32xf32> to vector<64x32xf32>
    %cst_57 = arith.constant dense<0.000000e+00> : vector<8x32xf32>
    %173 = tpu.matmul %170, %172, %cst_57 {dimension_numbers = #tpu.dot_dimension_numbers<[1], [0], [0], [1], [0, 0, 1, 1], [], []>} : vector<8x64xf32>, vector<64x32xf32>, vector<8x32xf32> -> vector<8x32xf32>
    %174 = vector.broadcast %23 : vector<1x32xf32> to vector<8x32xf32>
    %175 = arith.addf %173, %174 : vector<8x32xf32>
    %176 = vector.broadcast %21 : vector<1x32xf32> to vector<8x32xf32>
    %177 = arith.mulf %175, %176 : vector<8x32xf32>
    %178 = arith.addf %133, %177 : vector<8x32xf32>
    %c1 = arith.constant 1 : index
    %c0_58 = arith.constant 0 : index
    %c0_59 = arith.constant 0 : index
    %179 = vector.load %arg9[%c1, %c0_58, %c0_59] : memref<2x8x32xf32, #tpu.memory_space<vmem>>, vector<1x8x32xf32>
    %180 = vector.shape_cast %179 : vector<1x8x32xf32> to vector<8x32xf32>
    %181 = vector.extract_strided_slice %180 {offsets = [0, 0], sizes = [1, 32], strides = [1, 1]} : vector<8x32xf32> to vector<1x32xf32>
    %182 = vector.extract_strided_slice %180 {offsets = [1, 0], sizes = [1, 32], strides = [1, 1]} : vector<8x32xf32> to vector<1x32xf32>
    %183 = vector.extract_strided_slice %180 {offsets = [2, 0], sizes = [1, 32], strides = [1, 1]} : vector<8x32xf32> to vector<1x32xf32>
    %184 = vector.extract_strided_slice %180 {offsets = [3, 0], sizes = [1, 32], strides = [1, 1]} : vector<8x32xf32> to vector<1x32xf32>
    %185 = vector.extract_strided_slice %180 {offsets = [4, 0], sizes = [1, 32], strides = [1, 1]} : vector<8x32xf32> to vector<1x32xf32>
    %186 = vector.extract_strided_slice %180 {offsets = [5, 0], sizes = [1, 32], strides = [1, 1]} : vector<8x32xf32> to vector<1x32xf32>
    %187 = vector.extract_strided_slice %180 {offsets = [6, 0], sizes = [1, 32], strides = [1, 1]} : vector<8x32xf32> to vector<1x32xf32>
    %188 = vector.extract_strided_slice %180 {offsets = [7, 0], sizes = [1, 32], strides = [1, 1]} : vector<8x32xf32> to vector<1x32xf32>
    %cst_60 = arith.constant dense<0.000000e+00> : vector<8xf32>
    %189 = vector.multi_reduction <add>, %178, %cst_60 [1] : vector<8x32xf32> to vector<8xf32>
    %190 = vector.shape_cast %189 : vector<8xf32> to vector<8x1xf32>
    %cst_61 = arith.constant 3.200000e+01 : f32
    %191 = vector.broadcast %cst_61 : f32 to vector<8x1xf32>
    %192 = arith.divf %190, %191 : vector<8x1xf32>
    %193 = vector.broadcast %192 : vector<8x1xf32> to vector<8x32xf32>
    %194 = arith.subf %178, %193 : vector<8x32xf32>
    %195 = arith.mulf %194, %194 : vector<8x32xf32>
    %cst_62 = arith.constant dense<0.000000e+00> : vector<8xf32>
    %196 = vector.multi_reduction <add>, %195, %cst_62 [1] : vector<8x32xf32> to vector<8xf32>
    %197 = vector.shape_cast %196 : vector<8xf32> to vector<8x1xf32>
    %cst_63 = arith.constant 3.200000e+01 : f32
    %198 = vector.broadcast %cst_63 : f32 to vector<8x1xf32>
    %199 = arith.divf %197, %198 : vector<8x1xf32>
    %200 = vector.broadcast %192 : vector<8x1xf32> to vector<8x32xf32>
    %201 = arith.subf %178, %200 : vector<8x32xf32>
    %cst_64 = arith.constant 9.99999974E-6 : f32
    %202 = vector.broadcast %cst_64 : f32 to vector<8x1xf32>
    %203 = arith.addf %199, %202 : vector<8x1xf32>
    %204 = math.rsqrt %203 : vector<8x1xf32>
    %205 = vector.broadcast %204 : vector<8x1xf32> to vector<8x32xf32>
    %206 = arith.mulf %201, %205 : vector<8x32xf32>
    %207 = vector.broadcast %181 : vector<1x32xf32> to vector<8x32xf32>
    %208 = arith.mulf %206, %207 : vector<8x32xf32>
    %209 = vector.broadcast %182 : vector<1x32xf32> to vector<8x32xf32>
    %210 = arith.addf %208, %209 : vector<8x32xf32>
    %c1_65 = arith.constant 1 : index
    %c0_66 = arith.constant 0 : index
    %c0_67 = arith.constant 0 : index
    %211 = vector.load %arg4[%c1_65, %c0_66, %c0_67] : memref<2x32x128xf32, #tpu.memory_space<vmem>>, vector<1x32x128xf32>
    %212 = vector.shape_cast %211 : vector<1x32x128xf32> to vector<32x128xf32>
    %cst_68 = arith.constant dense<0.000000e+00> : vector<8x128xf32>
    %213 = tpu.matmul %210, %212, %cst_68 {dimension_numbers = #tpu.dot_dimension_numbers<[1], [0], [0], [1], [0, 0, 1, 1], [], []>} : vector<8x32xf32>, vector<32x128xf32>, vector<8x128xf32> -> vector<8x128xf32>
    %214 = vector.extract_strided_slice %213 {offsets = [0, 0], sizes = [8, 8], strides = [1, 1]} : vector<8x128xf32> to vector<8x8xf32>
    %215 = vector.shape_cast %214 : vector<8x8xf32> to vector<1x8x8xf32>
    %216 = vector.extract_strided_slice %213 {offsets = [0, 32], sizes = [8, 8], strides = [1, 1]} : vector<8x128xf32> to vector<8x8xf32>
    %217 = vector.shape_cast %216 : vector<8x8xf32> to vector<1x8x8xf32>
    %218 = vector.extract_strided_slice %213 {offsets = [0, 64], sizes = [8, 8], strides = [1, 1]} : vector<8x128xf32> to vector<8x8xf32>
    %219 = vector.shape_cast %218 : vector<8x8xf32> to vector<1x8x8xf32>
    "tpu.trace_start"() <{level = 10 : i32, message = "bse,bte->bst"}> : () -> ()
    %cst_69 = arith.constant dense<0.000000e+00> : vector<1x8x8xf32>
    %220 = tpu.matmul %215, %217, %cst_69 {dimension_numbers = #tpu.dot_dimension_numbers<[2], [2], [1], [1], [0, 0, 0, 1, 1, 1], [0], [0]>} : vector<1x8x8xf32>, vector<1x8x8xf32>, vector<1x8x8xf32> -> vector<1x8x8xf32>
    "tpu.trace_stop"() : () -> ()
    %221 = arith.addf %220, %13 : vector<1x8x8xf32>
    %cst_70 = arith.constant dense<0xFF800000> : vector<1x8xf32>
    %222 = vector.multi_reduction <maximumf>, %221, %cst_70 [2] : vector<1x8x8xf32> to vector<1x8xf32>
    %223 = vector.shape_cast %222 : vector<1x8xf32> to vector<1x8x1xf32>
    %224 = vector.broadcast %223 : vector<1x8x1xf32> to vector<1x8x8xf32>
    %225 = arith.subf %221, %224 : vector<1x8x8xf32>
    %226 = math.exp %225 : vector<1x8x8xf32>
    %cst_71 = arith.constant dense<0.000000e+00> : vector<1x8xf32>
    %227 = vector.multi_reduction <add>, %226, %cst_71 [2] : vector<1x8x8xf32> to vector<1x8xf32>
    %228 = vector.shape_cast %227 : vector<1x8xf32> to vector<1x8x1xf32>
    %229 = vector.broadcast %228 : vector<1x8x1xf32> to vector<1x8x8xf32>
    %230 = arith.divf %226, %229 : vector<1x8x8xf32>
    "tpu.trace_start"() <{level = 10 : i32, message = "bst,bte->bse"}> : () -> ()
    %cst_72 = arith.constant dense<0.000000e+00> : vector<1x8x8xf32>
    %231 = tpu.matmul %230, %219, %cst_72 {dimension_numbers = #tpu.dot_dimension_numbers<[2], [1], [1], [2], [0, 0, 0, 1, 1, 2], [0], [0]>} : vector<1x8x8xf32>, vector<1x8x8xf32>, vector<1x8x8xf32> -> vector<1x8x8xf32>
    "tpu.trace_stop"() : () -> ()
    %232 = vector.shape_cast %231 : vector<1x8x8xf32> to vector<8x8xf32>
    %233 = vector.extract_strided_slice %213 {offsets = [0, 8], sizes = [8, 8], strides = [1, 1]} : vector<8x128xf32> to vector<8x8xf32>
    %234 = vector.shape_cast %233 : vector<8x8xf32> to vector<1x8x8xf32>
    %235 = vector.extract_strided_slice %213 {offsets = [0, 40], sizes = [8, 8], strides = [1, 1]} : vector<8x128xf32> to vector<8x8xf32>
    %236 = vector.shape_cast %235 : vector<8x8xf32> to vector<1x8x8xf32>
    %237 = vector.extract_strided_slice %213 {offsets = [0, 72], sizes = [8, 8], strides = [1, 1]} : vector<8x128xf32> to vector<8x8xf32>
    %238 = vector.shape_cast %237 : vector<8x8xf32> to vector<1x8x8xf32>
    "tpu.trace_start"() <{level = 10 : i32, message = "bse,bte->bst"}> : () -> ()
    %cst_73 = arith.constant dense<0.000000e+00> : vector<1x8x8xf32>
    %239 = tpu.matmul %234, %236, %cst_73 {dimension_numbers = #tpu.dot_dimension_numbers<[2], [2], [1], [1], [0, 0, 0, 1, 1, 1], [0], [0]>} : vector<1x8x8xf32>, vector<1x8x8xf32>, vector<1x8x8xf32> -> vector<1x8x8xf32>
    "tpu.trace_stop"() : () -> ()
    %240 = arith.addf %239, %13 : vector<1x8x8xf32>
    %cst_74 = arith.constant dense<0xFF800000> : vector<1x8xf32>
    %241 = vector.multi_reduction <maximumf>, %240, %cst_74 [2] : vector<1x8x8xf32> to vector<1x8xf32>
    %242 = vector.shape_cast %241 : vector<1x8xf32> to vector<1x8x1xf32>
    %243 = vector.broadcast %242 : vector<1x8x1xf32> to vector<1x8x8xf32>
    %244 = arith.subf %240, %243 : vector<1x8x8xf32>
    %245 = math.exp %244 : vector<1x8x8xf32>
    %cst_75 = arith.constant dense<0.000000e+00> : vector<1x8xf32>
    %246 = vector.multi_reduction <add>, %245, %cst_75 [2] : vector<1x8x8xf32> to vector<1x8xf32>
    %247 = vector.shape_cast %246 : vector<1x8xf32> to vector<1x8x1xf32>
    %248 = vector.broadcast %247 : vector<1x8x1xf32> to vector<1x8x8xf32>
    %249 = arith.divf %245, %248 : vector<1x8x8xf32>
    "tpu.trace_start"() <{level = 10 : i32, message = "bst,bte->bse"}> : () -> ()
    %cst_76 = arith.constant dense<0.000000e+00> : vector<1x8x8xf32>
    %250 = tpu.matmul %249, %238, %cst_76 {dimension_numbers = #tpu.dot_dimension_numbers<[2], [1], [1], [2], [0, 0, 0, 1, 1, 2], [0], [0]>} : vector<1x8x8xf32>, vector<1x8x8xf32>, vector<1x8x8xf32> -> vector<1x8x8xf32>
    "tpu.trace_stop"() : () -> ()
    %251 = vector.shape_cast %250 : vector<1x8x8xf32> to vector<8x8xf32>
    %252 = vector.extract_strided_slice %213 {offsets = [0, 16], sizes = [8, 8], strides = [1, 1]} : vector<8x128xf32> to vector<8x8xf32>
    %253 = vector.shape_cast %252 : vector<8x8xf32> to vector<1x8x8xf32>
    %254 = vector.extract_strided_slice %213 {offsets = [0, 48], sizes = [8, 8], strides = [1, 1]} : vector<8x128xf32> to vector<8x8xf32>
    %255 = vector.shape_cast %254 : vector<8x8xf32> to vector<1x8x8xf32>
    %256 = vector.extract_strided_slice %213 {offsets = [0, 80], sizes = [8, 8], strides = [1, 1]} : vector<8x128xf32> to vector<8x8xf32>
    %257 = vector.shape_cast %256 : vector<8x8xf32> to vector<1x8x8xf32>
    "tpu.trace_start"() <{level = 10 : i32, message = "bse,bte->bst"}> : () -> ()
    %cst_77 = arith.constant dense<0.000000e+00> : vector<1x8x8xf32>
    %258 = tpu.matmul %253, %255, %cst_77 {dimension_numbers = #tpu.dot_dimension_numbers<[2], [2], [1], [1], [0, 0, 0, 1, 1, 1], [0], [0]>} : vector<1x8x8xf32>, vector<1x8x8xf32>, vector<1x8x8xf32> -> vector<1x8x8xf32>
    "tpu.trace_stop"() : () -> ()
    %259 = arith.addf %258, %13 : vector<1x8x8xf32>
    %cst_78 = arith.constant dense<0xFF800000> : vector<1x8xf32>
    %260 = vector.multi_reduction <maximumf>, %259, %cst_78 [2] : vector<1x8x8xf32> to vector<1x8xf32>
    %261 = vector.shape_cast %260 : vector<1x8xf32> to vector<1x8x1xf32>
    %262 = vector.broadcast %261 : vector<1x8x1xf32> to vector<1x8x8xf32>
    %263 = arith.subf %259, %262 : vector<1x8x8xf32>
    %264 = math.exp %263 : vector<1x8x8xf32>
    %cst_79 = arith.constant dense<0.000000e+00> : vector<1x8xf32>
    %265 = vector.multi_reduction <add>, %264, %cst_79 [2] : vector<1x8x8xf32> to vector<1x8xf32>
    %266 = vector.shape_cast %265 : vector<1x8xf32> to vector<1x8x1xf32>
    %267 = vector.broadcast %266 : vector<1x8x1xf32> to vector<1x8x8xf32>
    %268 = arith.divf %264, %267 : vector<1x8x8xf32>
    "tpu.trace_start"() <{level = 10 : i32, message = "bst,bte->bse"}> : () -> ()
    %cst_80 = arith.constant dense<0.000000e+00> : vector<1x8x8xf32>
    %269 = tpu.matmul %268, %257, %cst_80 {dimension_numbers = #tpu.dot_dimension_numbers<[2], [1], [1], [2], [0, 0, 0, 1, 1, 2], [0], [0]>} : vector<1x8x8xf32>, vector<1x8x8xf32>, vector<1x8x8xf32> -> vector<1x8x8xf32>
    "tpu.trace_stop"() : () -> ()
    %270 = vector.shape_cast %269 : vector<1x8x8xf32> to vector<8x8xf32>
    %271 = vector.extract_strided_slice %213 {offsets = [0, 24], sizes = [8, 8], strides = [1, 1]} : vector<8x128xf32> to vector<8x8xf32>
    %272 = vector.shape_cast %271 : vector<8x8xf32> to vector<1x8x8xf32>
    %273 = vector.extract_strided_slice %213 {offsets = [0, 56], sizes = [8, 8], strides = [1, 1]} : vector<8x128xf32> to vector<8x8xf32>
    %274 = vector.shape_cast %273 : vector<8x8xf32> to vector<1x8x8xf32>
    %275 = vector.extract_strided_slice %213 {offsets = [0, 88], sizes = [8, 8], strides = [1, 1]} : vector<8x128xf32> to vector<8x8xf32>
    %276 = vector.shape_cast %275 : vector<8x8xf32> to vector<1x8x8xf32>
    "tpu.trace_start"() <{level = 10 : i32, message = "bse,bte->bst"}> : () -> ()
    %cst_81 = arith.constant dense<0.000000e+00> : vector<1x8x8xf32>
    %277 = tpu.matmul %272, %274, %cst_81 {dimension_numbers = #tpu.dot_dimension_numbers<[2], [2], [1], [1], [0, 0, 0, 1, 1, 1], [0], [0]>} : vector<1x8x8xf32>, vector<1x8x8xf32>, vector<1x8x8xf32> -> vector<1x8x8xf32>
    "tpu.trace_stop"() : () -> ()
    %278 = arith.addf %277, %13 : vector<1x8x8xf32>
    %cst_82 = arith.constant dense<0xFF800000> : vector<1x8xf32>
    %279 = vector.multi_reduction <maximumf>, %278, %cst_82 [2] : vector<1x8x8xf32> to vector<1x8xf32>
    %280 = vector.shape_cast %279 : vector<1x8xf32> to vector<1x8x1xf32>
    %281 = vector.broadcast %280 : vector<1x8x1xf32> to vector<1x8x8xf32>
    %282 = arith.subf %278, %281 : vector<1x8x8xf32>
    %283 = math.exp %282 : vector<1x8x8xf32>
    %cst_83 = arith.constant dense<0.000000e+00> : vector<1x8xf32>
    %284 = vector.multi_reduction <add>, %283, %cst_83 [2] : vector<1x8x8xf32> to vector<1x8xf32>
    %285 = vector.shape_cast %284 : vector<1x8xf32> to vector<1x8x1xf32>
    %286 = vector.broadcast %285 : vector<1x8x1xf32> to vector<1x8x8xf32>
    %287 = arith.divf %283, %286 : vector<1x8x8xf32>
    "tpu.trace_start"() <{level = 10 : i32, message = "bst,bte->bse"}> : () -> ()
    %cst_84 = arith.constant dense<0.000000e+00> : vector<1x8x8xf32>
    %288 = tpu.matmul %287, %276, %cst_84 {dimension_numbers = #tpu.dot_dimension_numbers<[2], [1], [1], [2], [0, 0, 0, 1, 1, 2], [0], [0]>} : vector<1x8x8xf32>, vector<1x8x8xf32>, vector<1x8x8xf32> -> vector<1x8x8xf32>
    "tpu.trace_stop"() : () -> ()
    %289 = vector.shape_cast %288 : vector<1x8x8xf32> to vector<8x8xf32>
    %290 = tpu.concatenate %232, %251, %270, %289 in 1 : vector<8x8xf32>, vector<8x8xf32>, vector<8x8xf32>, vector<8x8xf32> -> vector<8x32xf32>
    %c1_85 = arith.constant 1 : index
    %c0_86 = arith.constant 0 : index
    %c0_87 = arith.constant 0 : index
    %291 = vector.load %arg5[%c1_85, %c0_86, %c0_87] : memref<2x32x32xf32, #tpu.memory_space<vmem>>, vector<1x32x32xf32>
    %292 = vector.shape_cast %291 : vector<1x32x32xf32> to vector<32x32xf32>
    %cst_88 = arith.constant dense<0.000000e+00> : vector<8x32xf32>
    %293 = tpu.matmul %290, %292, %cst_88 {dimension_numbers = #tpu.dot_dimension_numbers<[1], [0], [0], [1], [0, 0, 1, 1], [], []>} : vector<8x32xf32>, vector<32x32xf32>, vector<8x32xf32> -> vector<8x32xf32>
    %294 = vector.broadcast %187 : vector<1x32xf32> to vector<8x32xf32>
    %295 = arith.addf %293, %294 : vector<8x32xf32>
    %296 = vector.broadcast %183 : vector<1x32xf32> to vector<8x32xf32>
    %297 = arith.mulf %295, %296 : vector<8x32xf32>
    %298 = arith.addf %178, %297 : vector<8x32xf32>
    %cst_89 = arith.constant dense<0.000000e+00> : vector<8xf32>
    %299 = vector.multi_reduction <add>, %298, %cst_89 [1] : vector<8x32xf32> to vector<8xf32>
    %300 = vector.shape_cast %299 : vector<8xf32> to vector<8x1xf32>
    %cst_90 = arith.constant 3.200000e+01 : f32
    %301 = vector.broadcast %cst_90 : f32 to vector<8x1xf32>
    %302 = arith.divf %300, %301 : vector<8x1xf32>
    %303 = vector.broadcast %302 : vector<8x1xf32> to vector<8x32xf32>
    %304 = arith.subf %298, %303 : vector<8x32xf32>
    %305 = arith.mulf %304, %304 : vector<8x32xf32>
    %cst_91 = arith.constant dense<0.000000e+00> : vector<8xf32>
    %306 = vector.multi_reduction <add>, %305, %cst_91 [1] : vector<8x32xf32> to vector<8xf32>
    %307 = vector.shape_cast %306 : vector<8xf32> to vector<8x1xf32>
    %cst_92 = arith.constant 3.200000e+01 : f32
    %308 = vector.broadcast %cst_92 : f32 to vector<8x1xf32>
    %309 = arith.divf %307, %308 : vector<8x1xf32>
    %310 = vector.broadcast %302 : vector<8x1xf32> to vector<8x32xf32>
    %311 = arith.subf %298, %310 : vector<8x32xf32>
    %cst_93 = arith.constant 9.99999974E-6 : f32
    %312 = vector.broadcast %cst_93 : f32 to vector<8x1xf32>
    %313 = arith.addf %309, %312 : vector<8x1xf32>
    %314 = math.rsqrt %313 : vector<8x1xf32>
    %315 = vector.broadcast %314 : vector<8x1xf32> to vector<8x32xf32>
    %316 = arith.mulf %311, %315 : vector<8x32xf32>
    %317 = vector.broadcast %184 : vector<1x32xf32> to vector<8x32xf32>
    %318 = arith.mulf %316, %317 : vector<8x32xf32>
    %319 = vector.broadcast %185 : vector<1x32xf32> to vector<8x32xf32>
    %320 = arith.addf %318, %319 : vector<8x32xf32>
    %c1_94 = arith.constant 1 : index
    %c0_95 = arith.constant 0 : index
    %c0_96 = arith.constant 0 : index
    %321 = vector.load %arg6[%c1_94, %c0_95, %c0_96] : memref<2x32x64xf32, #tpu.memory_space<vmem>>, vector<1x32x64xf32>
    %322 = vector.shape_cast %321 : vector<1x32x64xf32> to vector<32x64xf32>
    %cst_97 = arith.constant dense<0.000000e+00> : vector<8x64xf32>
    %323 = tpu.matmul %320, %322, %cst_97 {dimension_numbers = #tpu.dot_dimension_numbers<[1], [0], [0], [1], [0, 0, 1, 1], [], []>} : vector<8x32xf32>, vector<32x64xf32>, vector<8x64xf32> -> vector<8x64xf32>
    %c1_98 = arith.constant 1 : index
    %c0_99 = arith.constant 0 : index
    %c0_100 = arith.constant 0 : index
    %324 = vector.load %arg7[%c1_98, %c0_99, %c0_100] : memref<2x1x64xf32, #tpu.memory_space<vmem>>, vector<1x1x64xf32>
    %325 = vector.shape_cast %324 : vector<1x1x64xf32> to vector<1x64xf32>
    %326 = vector.broadcast %325 : vector<1x64xf32> to vector<8x64xf32>
    %327 = arith.addf %323, %326 : vector<8x64xf32>
    %cst_101 = arith.constant 5.000000e-01 : f32
    %328 = vector.broadcast %cst_101 : f32 to vector<8x64xf32>
    %329 = arith.mulf %328, %327 : vector<8x64xf32>
    %cst_102 = arith.constant 0.707106769 : f32
    %330 = vector.broadcast %cst_102 : f32 to vector<8x64xf32>
    %331 = arith.mulf %327, %330 : vector<8x64xf32>
    %332 = math.erf %331 : vector<8x64xf32>
    %cst_103 = arith.constant 1.000000e+00 : f32
    %333 = vector.broadcast %cst_103 : f32 to vector<8x64xf32>
    %334 = arith.addf %333, %332 : vector<8x64xf32>
    %335 = arith.mulf %329, %334 : vector<8x64xf32>
    %c1_104 = arith.constant 1 : index
    %c0_105 = arith.constant 0 : index
    %c0_106 = arith.constant 0 : index
    %336 = vector.load %arg8[%c1_104, %c0_105, %c0_106] : memref<2x64x32xf32, #tpu.memory_space<vmem>>, vector<1x64x32xf32>
    %337 = vector.shape_cast %336 : vector<1x64x32xf32> to vector<64x32xf32>
    %cst_107 = arith.constant dense<0.000000e+00> : vector<8x32xf32>
    %338 = tpu.matmul %335, %337, %cst_107 {dimension_numbers = #tpu.dot_dimension_numbers<[1], [0], [0], [1], [0, 0, 1, 1], [], []>} : vector<8x64xf32>, vector<64x32xf32>, vector<8x32xf32> -> vector<8x32xf32>
    %339 = vector.broadcast %188 : vector<1x32xf32> to vector<8x32xf32>
    %340 = arith.addf %338, %339 : vector<8x32xf32>
    %341 = vector.broadcast %186 : vector<1x32xf32> to vector<8x32xf32>
    %342 = arith.mulf %340, %341 : vector<8x32xf32>
    %343 = arith.addf %298, %342 : vector<8x32xf32>
    %c0_108 = arith.constant 0 : index
    %c0_109 = arith.constant 0 : index
    %344 = vector.load %arg10[%c0_108, %c0_109] : memref<2x32xf32, #tpu.memory_space<vmem>>, vector<2x32xf32>
    %345 = vector.shape_cast %343 : vector<8x32xf32> to vector<1x8x32xf32>
    %346 = vector.extract_strided_slice %345 {offsets = [0, 0, 0], sizes = [1, 1, 32], strides = [1, 1, 1]} : vector<1x8x32xf32> to vector<1x1x32xf32>
    %347 = vector.shape_cast %346 : vector<1x1x32xf32> to vector<1x32xf32>
    %348 = vector.extract_strided_slice %344 {offsets = [0, 0], sizes = [1, 32], strides = [1, 1]} : vector<2x32xf32> to vector<1x32xf32>
    %349 = vector.extract_strided_slice %344 {offsets = [1, 0], sizes = [1, 32], strides = [1, 1]} : vector<2x32xf32> to vector<1x32xf32>
    %cst_110 = arith.constant dense<0.000000e+00> : vector<1xf32>
    %350 = vector.multi_reduction <add>, %347, %cst_110 [1] : vector<1x32xf32> to vector<1xf32>
    %351 = vector.shape_cast %350 : vector<1xf32> to vector<1x1xf32>
    %cst_111 = arith.constant 3.200000e+01 : f32
    %352 = vector.broadcast %cst_111 : f32 to vector<1x1xf32>
    %353 = arith.divf %351, %352 : vector<1x1xf32>
    %354 = vector.broadcast %353 : vector<1x1xf32> to vector<1x32xf32>
    %355 = arith.subf %347, %354 : vector<1x32xf32>
    %356 = arith.mulf %355, %355 : vector<1x32xf32>
    %cst_112 = arith.constant dense<0.000000e+00> : vector<1xf32>
    %357 = vector.multi_reduction <add>, %356, %cst_112 [1] : vector<1x32xf32> to vector<1xf32>
    %358 = vector.shape_cast %357 : vector<1xf32> to vector<1x1xf32>
    %cst_113 = arith.constant 3.200000e+01 : f32
    %359 = vector.broadcast %cst_113 : f32 to vector<1x1xf32>
    %360 = arith.divf %358, %359 : vector<1x1xf32>
    %361 = vector.broadcast %353 : vector<1x1xf32> to vector<1x32xf32>
    %362 = arith.subf %347, %361 : vector<1x32xf32>
    %cst_114 = arith.constant 9.99999974E-6 : f32
    %363 = vector.broadcast %cst_114 : f32 to vector<1x1xf32>
    %364 = arith.addf %360, %363 : vector<1x1xf32>
    %365 = math.rsqrt %364 : vector<1x1xf32>
    %366 = vector.broadcast %365 : vector<1x1xf32> to vector<1x32xf32>
    %367 = arith.mulf %362, %366 : vector<1x32xf32>
    %368 = arith.mulf %367, %348 : vector<1x32xf32>
    %369 = arith.addf %368, %349 : vector<1x32xf32>
    %c0_115 = arith.constant 0 : index
    %c0_116 = arith.constant 0 : index
    %370 = vector.load %arg11[%c0_115, %c0_116] : memref<32x128xf32, #tpu.memory_space<vmem>>, vector<32x128xf32>
    %cst_117 = arith.constant dense<0.000000e+00> : vector<1x128xf32>
    %371 = tpu.matmul %369, %370, %cst_117 {dimension_numbers = #tpu.dot_dimension_numbers<[1], [0], [0], [1], [0, 0, 1, 1], [], []>} : vector<1x32xf32>, vector<32x128xf32>, vector<1x128xf32> -> vector<1x128xf32>
    %c0_118 = arith.constant 0 : index
    %c0_119 = arith.constant 0 : index
    %372 = vector.load %arg12[%c0_118, %c0_119] : memref<1x128xf32, #tpu.memory_space<vmem>>, vector<1x128xf32>
    %373 = arith.addf %371, %372 : vector<1x128xf32>
    %cst_120 = arith.constant 0.000000e+00 : f32
    %374 = vector.broadcast %cst_120 : f32 to vector<7x128xf32>
    %375 = tpu.concatenate %373, %374 in 0 : vector<1x128xf32>, vector<7x128xf32> -> vector<8x128xf32>
    %c0_121 = arith.constant 0 : index
    %c0_122 = arith.constant 0 : index
    %376 = vector.load %arg13[%c0_121, %c0_122] : memref<8x128xf32, #tpu.memory_space<vmem>>, vector<8x128xf32>
    tpu.vector_store %arg13[%c0_121, %c0_122], %375 {strides = array<i32>} : memref<8x128xf32, #tpu.memory_space<vmem>>, vector<8x128xf32>,
    return
  }
  func.func @transform_0(%arg0: i32) -> (i32, i32) {
    %c0_i32 = arith.constant 0 : i32
    %c0_i32_0 = arith.constant 0 : i32
    return %arg0, %c0_i32 : i32, i32
  }
  func.func @transform_1(%arg0: i32) -> (i32, i32) {
    %c0_i32 = arith.constant 0 : i32
    %c0_i32_0 = arith.constant 0 : i32
    %c0_i32_1 = arith.constant 0 : i32
    return %c0_i32, %c0_i32_0 : i32, i32
  }
  func.func @transform_2(%arg0: i32) -> (i32, i32) {
    %c0_i32 = arith.constant 0 : i32
    %c0_i32_0 = arith.constant 0 : i32
    %c0_i32_1 = arith.constant 0 : i32
    return %c0_i32, %c0_i32_0 : i32, i32
  }
  func.func @transform_3(%arg0: i32) -> (i32, i32, i32) {
    %c0_i32 = arith.constant 0 : i32
    %c0_i32_0 = arith.constant 0 : i32
    %c0_i32_1 = arith.constant 0 : i32
    %c0_i32_2 = arith.constant 0 : i32
    return %c0_i32, %c0_i32_0, %c0_i32_1 : i32, i32, i32
  }
  func.func @transform_4(%arg0: i32) -> (i32, i32, i32) {
    %c0_i32 = arith.constant 0 : i32
    %c0_i32_0 = arith.constant 0 : i32
    %c0_i32_1 = arith.constant 0 : i32
    %c0_i32_2 = arith.constant 0 : i32
    return %c0_i32, %c0_i32_0, %c0_i32_1 : i32, i32, i32
  }
  func.func @transform_5(%arg0: i32) -> (i32, i32, i32) {
    %c0_i32 = arith.constant 0 : i32
    %c0_i32_0 = arith.constant 0 : i32
    %c0_i32_1 = arith.constant 0 : i32
    %c0_i32_2 = arith.constant 0 : i32
    return %c0_i32, %c0_i32_0, %c0_i32_1 : i32, i32, i32
  }
  func.func @transform_6(%arg0: i32) -> (i32, i32, i32) {
    %c0_i32 = arith.constant 0 : i32
    %c0_i32_0 = arith.constant 0 : i32
    %c0_i32_1 = arith.constant 0 : i32
    %c0_i32_2 = arith.constant 0 : i32
    return %c0_i32, %c0_i32_0, %c0_i32_1 : i32, i32, i32
  }
  func.func @transform_7(%arg0: i32) -> (i32, i32, i32) {
    %c0_i32 = arith.constant 0 : i32
    %c0_i32_0 = arith.constant 0 : i32
    %c0_i32_1 = arith.constant 0 : i32
    %c0_i32_2 = arith.constant 0 : i32
    return %c0_i32, %c0_i32_0, %c0_i32_1 : i32, i32, i32
  }
  func.func @transform_8(%arg0: i32) -> (i32, i32, i32) {
    %c0_i32 = arith.constant 0 : i32
    %c0_i32_0 = arith.constant 0 : i32
    %c0_i32_1 = arith.constant 0 : i32
    %c0_i32_2 = arith.constant 0 : i32
    return %c0_i32, %c0_i32_0, %c0_i32_1 : i32, i32, i32
  }
  func.func @transform_9(%arg0: i32) -> (i32, i32) {
    %c0_i32 = arith.constant 0 : i32
    %c0_i32_0 = arith.constant 0 : i32
    %c0_i32_1 = arith.constant 0 : i32
    return %c0_i32, %c0_i32_0 : i32, i32
  }
  func.func @transform_10(%arg0: i32) -> (i32, i32) {
    %c0_i32 = arith.constant 0 : i32
    %c0_i32_0 = arith.constant 0 : i32
    %c0_i32_1 = arith.constant 0 : i32
    return %c0_i32, %c0_i32_0 : i32, i32
  }
  func.func @transform_11(%arg0: i32) -> (i32, i32) {
    %c0_i32 = arith.constant 0 : i32
    %c0_i32_0 = arith.constant 0 : i32
    %c0_i32_1 = arith.constant 0 : i32
    return %c0_i32, %c0_i32_0 : i32, i32
  }
  func.func @transform_12(%arg0: i32) -> (i32, i32) {
    %c0_i32 = arith.constant 0 : i32
    %c0_i32_0 = arith.constant 0 : i32
    return %arg0, %c0_i32 : i32, i32
  }
}

</mosaic_0001>

<llo_original>
// kernel: vit_forward.1
$region0: #{vit_forward.1}
  #allocation0 [shape = 'u32[]', space=smem, size = 0x4, offset = 0x4, fixed_abs, tag = 'smem constant byte address 0x4 - core index']
  #allocation1 [shape = 'u32[144,128]{1,0:T(1,128)}', space=vmem, size = 0x12000, scoped, tag = 'internal scratch']
  %s0 = inlined_call_operand.vmem [shape: f32[16,768], index: 0, kind: input, shape index: {}]
  %s1 = inlined_call_operand.vmem [shape: f32[768,32], index: 1, kind: input, shape index: {}]
  %s2 = inlined_call_operand.vmem [shape: f32[8,32], index: 2, kind: input, shape index: {}]
  %s3 = inlined_call_operand.vmem [shape: f32[2,32,128], index: 3, kind: input, shape index: {}]
  %s4 = inlined_call_operand.vmem [shape: f32[2,32,32], index: 4, kind: input, shape index: {}]
  %s5 = inlined_call_operand.vmem [shape: f32[2,32,64], index: 5, kind: input, shape index: {}]
  %s6 = inlined_call_operand.vmem [shape: f32[2,1,64], index: 6, kind: input, shape index: {}]
  %s7 = inlined_call_operand.vmem [shape: f32[2,64,32], index: 7, kind: input, shape index: {}]
  %s8 = inlined_call_operand.vmem [shape: f32[2,8,32], index: 8, kind: input, shape index: {}]
  %s9 = inlined_call_operand.vmem [shape: f32[2,32], index: 9, kind: input, shape index: {}]
  %s10 = inlined_call_operand.vmem [shape: f32[32,128], index: 10, kind: input, shape index: {}]
  %s11 = inlined_call_operand.vmem [shape: f32[1,128], index: 11, kind: input, shape index: {}]
  %s12 = inlined_call_operand.vmem [shape: f32[16,128], index: 12, kind: output, shape index: {}]
  %s13 = sld [smem:[#allocation0]]
  $region81: #{vit_forward.1} parent=0
    _
  %s15 = ssub.s32 1, %s13
  %s16 = scalar_select 0, %s15, %s13
  loop: start=0, step=1, limit=4
  $region2: #{vit_forward.1} parent=0 // loop_pre_header
    _
  $region3: #{vit_forward.1} parent=0 // loop_header
    %s18 = sphi 0, %s22
    %p19 = scmp.ge.s32.totalorder %s18, 4
    %s28 = sphi 0, %s30
    %s31 = sphi 0, %s28
    %s32 = sphi 0, %s31
    %s48 = sphi 0, %s32
    %s52 = sphi 0, %s52
    %s54 = sphi 0, %s52
    %s55 = sphi 0, %s54
    %s69 = sphi 0, %s55
    %s73 = sphi 0, %s73
    %s75 = sphi 0, %s73
    %s76 = sphi 0, %s75
    %s90 = sphi 0, %s76
    %s94 = sphi 0, %s94
    %s96 = sphi 0, %s94
    %s97 = sphi 0, %s96
    %s111 = sphi 0, %s97
    %s115 = sphi 0, %s115
    %s117 = sphi 0, %s115
    %s118 = sphi 0, %s117
    %s132 = sphi 0, %s118
    %s136 = sphi 0, %s136
    %s138 = sphi 0, %s136
    %s139 = sphi 0, %s138
    %s153 = sphi 0, %s139
    %s157 = sphi 0, %s157
    %s159 = sphi 0, %s157
    %s160 = sphi 0, %s159
    %s174 = sphi 0, %s160
    %s178 = sphi 0, %s178
    %s180 = sphi 0, %s178
    %s181 = sphi 0, %s180
    %s195 = sphi 0, %s181
    %s199 = sphi 0, %s199
    %s201 = sphi 0, %s199
    %s202 = sphi 0, %s201
    %s216 = sphi 0, %s202
    %s220 = sphi 0, %s220
    %s222 = sphi 0, %s220
    %s223 = sphi 0, %s222
    %s237 = sphi 0, %s223
    %s241 = sphi 0, %s241
    %s243 = sphi 0, %s241
    %s244 = sphi 0, %s243
    %s258 = sphi 0, %s244
    %s262 = sphi 0, %s262
    %s264 = sphi 0, %s262
    %s265 = sphi 0, %s264
    %s279 = sphi 0, %s265
    %s285 = sphi 0, %s287
    %s288 = sphi 0, %s285
    %s289 = sphi 0, %s288
    %s305 = sphi 0, %s289
  $region4: #{vit_forward.1} parent=0 // loop_header_branch
    %21 = sbr.rel (%p19) target = $region8
  $region5: #{vit_forward.1} parent=0 // loop_body
    %s23 = ssub.s32 %s18, 1
    %s24 = ssub.s32 %s18, 2
    %s25 = sadd.s32 %s18, 1
    %s26 = ssub.s32 %s18, %s25
    %p27 = scmp.eq.s32.totalorder %s26, 0
    %s29 = sadd.s32 %s28, 1
    %s30 = scalar_select %p27, %s28, %s29
    %p33 = pneg %p27
    %p34 = scmp.eq.s32.totalorder %s18, 1
    %p35 = por %p33, %p34
    %p36 = scmp.ne.s32.totalorder %s28, %s31
    %p37 = scmp.eq.s32.totalorder %s18, 0
    %p38 = por %p36, %p37
    %p39 = scmp.ne.s32.totalorder %s28, %s31
    %p40 = scmp.eq.s32.totalorder %s23, 1
    %p41 = por %p39, %p40
    %p42 = scmp.ne.s32.totalorder %s31, %s32
    %p43 = scmp.eq.s32.totalorder %s23, 0
    %p44 = por %p42, %p43
    %p45 = scmp.ne.s32.totalorder %s31, %s32
    %p46 = scmp.eq.s32.totalorder %s24, 1
    %p47 = por %p45, %p46
    %p49 = scmp.ne.s32.totalorder %s32, %s48
    %p50 = scmp.eq.s32.totalorder %s24, 0
    %p51 = por %p49, %p50
    %s53 = sadd.s32 %s52, 1
    %p56 = scmp.eq.s32.totalorder %s18, 1
    %p57 = scmp.ne.s32.totalorder %s52, %s54
    %p58 = scmp.eq.s32.totalorder %s18, 0
    %p59 = por %p57, %p58
    %p60 = scmp.ne.s32.totalorder %s52, %s54
    %p61 = scmp.eq.s32.totalorder %s23, 1
    %p62 = por %p60, %p61
    %p63 = scmp.ne.s32.totalorder %s54, %s55
    %p64 = scmp.eq.s32.totalorder %s23, 0
    %p65 = por %p63, %p64
    %p66 = scmp.ne.s32.totalorder %s54, %s55
    %p67 = scmp.eq.s32.totalorder %s24, 1
    %p68 = por %p66, %p67
    %p70 = scmp.ne.s32.totalorder %s55, %s69
    %p71 = scmp.eq.s32.totalorder %s24, 0
    %p72 = por %p70, %p71
    %s74 = sadd.s32 %s73, 1
    %p77 = scmp.eq.s32.totalorder %s18, 1
    %p78 = scmp.ne.s32.totalorder %s73, %s75
    %p79 = scmp.eq.s32.totalorder %s18, 0
    %p80 = por %p78, %p79
    %p81 = scmp.ne.s32.totalorder %s73, %s75
    %p82 = scmp.eq.s32.totalorder %s23, 1
    %p83 = por %p81, %p82
    %p84 = scmp.ne.s32.totalorder %s75, %s76
    %p85 = scmp.eq.s32.totalorder %s23, 0
    %p86 = por %p84, %p85
    %p87 = scmp.ne.s32.totalorder %s75, %s76
    %p88 = scmp.eq.s32.totalorder %s24, 1
    %p89 = por %p87, %p88
    %p91 = scmp.ne.s32.totalorder %s76, %s90
    %p92 = scmp.eq.s32.totalorder %s24, 0
    %p93 = por %p91, %p92
    %s95 = sadd.s32 %s94, 1
    %p98 = scmp.eq.s32.totalorder %s18, 1
    %p99 = scmp.ne.s32.totalorder %s94, %s96
    %p100 = scmp.eq.s32.totalorder %s18, 0
    %p101 = por %p99, %p100
    %p102 = scmp.ne.s32.totalorder %s94, %s96
    %p103 = scmp.eq.s32.totalorder %s23, 1
    %p104 = por %p102, %p103
    %p105 = scmp.ne.s32.totalorder %s96, %s97
    %p106 = scmp.eq.s32.totalorder %s23, 0
    %p107 = por %p105, %p106
    %p108 = scmp.ne.s32.totalorder %s96, %s97
    %p109 = scmp.eq.s32.totalorder %s24, 1
    %p110 = por %p108, %p109
    %p112 = scmp.ne.s32.totalorder %s97, %s111
    %p113 = scmp.eq.s32.totalorder %s24, 0
    %p114 = por %p112, %p113
    %s116 = sadd.s32 %s115, 1
    %p119 = scmp.eq.s32.totalorder %s18, 1
    %p120 = scmp.ne.s32.totalorder %s115, %s117
    %p121 = scmp.eq.s32.totalorder %s18, 0
    %p122 = por %p120, %p121
    %p123 = scmp.ne.s32.totalorder %s115, %s117
    %p124 = scmp.eq.s32.totalorder %s23, 1
    %p125 = por %p123, %p124
    %p126 = scmp.ne.s32.totalorder %s117, %s118
    %p127 = scmp.eq.s32.totalorder %s23, 0
    %p128 = por %p126, %p127
    %p129 = scmp.ne.s32.totalorder %s117, %s118
    %p130 = scmp.eq.s32.totalorder %s24, 1
    %p131 = por %p129, %p130
    %p133 = scmp.ne.s32.totalorder %s118, %s132
    %p134 = scmp.eq.s32.totalorder %s24, 0
    %p135 = por %p133, %p134
    %s137 = sadd.s32 %s136, 1
    %p140 = scmp.eq.s32.totalorder %s18, 1
    %p141 = scmp.ne.s32.totalorder %s136, %s138
    %p142 = scmp.eq.s32.totalorder %s18, 0
    %p143 = por %p141, %p142
    %p144 = scmp.ne.s32.totalorder %s136, %s138
    %p145 = scmp.eq.s32.totalorder %s23, 1
    %p146 = por %p144, %p145
    %p147 = scmp.ne.s32.totalorder %s138, %s139
    %p148 = scmp.eq.s32.totalorder %s23, 0
    %p149 = por %p147, %p148
    %p150 = scmp.ne.s32.totalorder %s138, %s139
    %p151 = scmp.eq.s32.totalorder %s24, 1
    %p152 = por %p150, %p151
    %p154 = scmp.ne.s32.totalorder %s139, %s153
    %p155 = scmp.eq.s32.totalorder %s24, 0
    %p156 = por %p154, %p155
    %s158 = sadd.s32 %s157, 1
    %p161 = scmp.eq.s32.totalorder %s18, 1
    %p162 = scmp.ne.s32.totalorder %s157, %s159
    %p163 = scmp.eq.s32.totalorder %s18, 0
    %p164 = por %p162, %p163
    %p165 = scmp.ne.s32.totalorder %s157, %s159
    %p166 = scmp.eq.s32.totalorder %s23, 1
    %p167 = por %p165, %p166
    %p168 = scmp.ne.s32.totalorder %s159, %s160
    %p169 = scmp.eq.s32.totalorder %s23, 0
    %p170 = por %p168, %p169
    %p171 = scmp.ne.s32.totalorder %s159, %s160
    %p172 = scmp.eq.s32.totalorder %s24, 1
    %p173 = por %p171, %p172
    %p175 = scmp.ne.s32.totalorder %s160, %s174
    %p176 = scmp.eq.s32.totalorder %s24, 0
    %p177 = por %p175, %p176
    %s179 = sadd.s32 %s178, 1
    %p182 = scmp.eq.s32.totalorder %s18, 1
    %p183 = scmp.ne.s32.totalorder %s178, %s180
    %p184 = scmp.eq.s32.totalorder %s18, 0
    %p185 = por %p183, %p184
    %p186 = scmp.ne.s32.totalorder %s178, %s180
    %p187 = scmp.eq.s32.totalorder %s23, 1
    %p188 = por %p186, %p187
    %p189 = scmp.ne.s32.totalorder %s180, %s181
    %p190 = scmp.eq.s32.totalorder %s23, 0
    %p191 = por %p189, %p190
    %p192 = scmp.ne.s32.totalorder %s180, %s181
    %p193 = scmp.eq.s32.totalorder %s24, 1
    %p194 = por %p192, %p193
    %p196 = scmp.ne.s32.totalorder %s181, %s195
    %p197 = scmp.eq.s32.totalorder %s24, 0
    %p198 = por %p196, %p197
    %s200 = sadd.s32 %s199, 1
    %p203 = scmp.eq.s32.totalorder %s18, 1
    %p204 = scmp.ne.s32.totalorder %s199, %s201
    %p205 = scmp.eq.s32.totalorder %s18, 0
    %p206 = por %p204, %p205
    %p207 = scmp.ne.s32.totalorder %s199, %s201
    %p208 = scmp.eq.s32.totalorder %s23, 1
    %p209 = por %p207, %p208
    %p210 = scmp.ne.s32.totalorder %s201, %s202
    %p211 = scmp.eq.s32.totalorder %s23, 0
    %p212 = por %p210, %p211
    %p213 = scmp.ne.s32.totalorder %s201, %s202
    %p214 = scmp.eq.s32.totalorder %s24, 1
    %p215 = por %p213, %p214
    %p217 = scmp.ne.s32.totalorder %s202, %s216
    %p218 = scmp.eq.s32.totalorder %s24, 0
    %p219 = por %p217, %p218
    %s221 = sadd.s32 %s220, 1
    %p224 = scmp.eq.s32.totalorder %s18, 1
    %p225 = scmp.ne.s32.totalorder %s220, %s222
    %p226 = scmp.eq.s32.totalorder %s18, 0
    %p227 = por %p225, %p226
    %p228 = scmp.ne.s32.totalorder %s220, %s222
    %p229 = scmp.eq.s32.totalorder %s23, 1
    %p230 = por %p228, %p229
    %p231 = scmp.ne.s32.totalorder %s222, %s223
    %p232 = scmp.eq.s32.totalorder %s23, 0
    %p233 = por %p231, %p232
    %p234 = scmp.ne.s32.totalorder %s222, %s223
    %p235 = scmp.eq.s32.totalorder %s24, 1
    %p236 = por %p234, %p235
    %p238 = scmp.ne.s32.totalorder %s223, %s237
    %p239 = scmp.eq.s32.totalorder %s24, 0
    %p240 = por %p238, %p239
    %s242 = sadd.s32 %s241, 1
    %p245 = scmp.eq.s32.totalorder %s18, 1
    %p246 = scmp.ne.s32.totalorder %s241, %s243
    %p247 = scmp.eq.s32.totalorder %s18, 0
    %p248 = por %p246, %p247
    %p249 = scmp.ne.s32.totalorder %s241, %s243
    %p250 = scmp.eq.s32.totalorder %s23, 1
    %p251 = por %p249, %p250
    %p252 = scmp.ne.s32.totalorder %s243, %s244
    %p253 = scmp.eq.s32.totalorder %s23, 0
    %p254 = por %p252, %p253
    %p255 = scmp.ne.s32.totalorder %s243, %s244
    %p256 = scmp.eq.s32.totalorder %s24, 1
    %p257 = por %p255, %p256
    %p259 = scmp.ne.s32.totalorder %s244, %s258
    %p260 = scmp.eq.s32.totalorder %s24, 0
    %p261 = por %p259, %p260
    %s263 = sadd.s32 %s262, 1
    %p266 = scmp.eq.s32.totalorder %s18, 1
    %p267 = scmp.ne.s32.totalorder %s262, %s264
    %p268 = scmp.eq.s32.totalorder %s18, 0
    %p269 = por %p267, %p268
    %p270 = scmp.ne.s32.totalorder %s262, %s264
    %p271 = scmp.eq.s32.totalorder %s23, 1
    %p272 = por %p270, %p271
    %p273 = scmp.ne.s32.totalorder %s264, %s265
    %p274 = scmp.eq.s32.totalorder %s23, 0
    %p275 = por %p273, %p274
    %p276 = scmp.ne.s32.totalorder %s264, %s265
    %p277 = scmp.eq.s32.totalorder %s24, 1
    %p278 = por %p276, %p277
    %p280 = scmp.ne.s32.totalorder %s265, %s279
    %p281 = scmp.eq.s32.totalorder %s24, 0
    %p282 = por %p280, %p281
    %s283 = ssub.s32 %s18, %s25
    %p284 = scmp.eq.s32.totalorder %s283, 0
    %s286 = sadd.s32 %s285, 1
    %s287 = scalar_select %p284, %s285, %s286
    %p290 = pneg %p284
    %p291 = scmp.eq.s32.totalorder %s18, 1
    %p292 = por %p290, %p291
    %p293 = scmp.ne.s32.totalorder %s285, %s288
    %p294 = scmp.eq.s32.totalorder %s18, 0
    %p295 = por %p293, %p294
    %p296 = scmp.ne.s32.totalorder %s285, %s288
    %p297 = scmp.eq.s32.totalorder %s23, 1
    %p298 = por %p296, %p297
    %p299 = scmp.ne.s32.totalorder %s288, %s289
    %p300 = scmp.eq.s32.totalorder %s23, 0
    %p301 = por %p299, %p300
    %p302 = scmp.ne.s32.totalorder %s288, %s289
    %p303 = scmp.eq.s32.totalorder %s24, 1
    %p304 = por %p302, %p303
    %p306 = scmp.ne.s32.totalorder %s289, %s305
    %p307 = scmp.eq.s32.totalorder %s24, 0
    %p308 = por %p306, %p307
    %p309 = scmp.le.s32.totalorder 1, %s18
    %p310 = scmp.lt.s32.totalorder %s18, 3
    %p311 = pnand %p309, %p310
    %p312 = pneg %p311
    // Predicated region
    $region9: #{vit_forward.1} parent=5 // pred_check
      _
    $region10: #{vit_forward.1} parent=5 // pred_check_branch
      %314 = sbr.rel (%p311) target = $region12
    $region11: #{vit_forward.1} parent=5 // pred_region
      %s315 = ssub.s32 %s18, 1
      // Predicated region
      $region13: #{vit_forward.1} parent=11 // pred_check
        %p316 = pneg %p65
      $region14: #{vit_forward.1} parent=11 // pred_check_branch
        %318 = sbr.rel (%p316) target = $region16
      $region15: #{vit_forward.1} parent=11 // pred_region
        _
      $region16: #{vit_forward.1} parent=11 // pred_fallthru
        _
      // Predicated region
      $region17: #{vit_forward.1} parent=11 // pred_check
        %p319 = pneg %p86
      $region18: #{vit_forward.1} parent=11 // pred_check_branch
        %321 = sbr.rel (%p319) target = $region20
      $region19: #{vit_forward.1} parent=11 // pred_region
        _
      $region20: #{vit_forward.1} parent=11 // pred_fallthru
        _
      // Predicated region
      $region21: #{vit_forward.1} parent=11 // pred_check
        %p322 = pneg %p107
      $region22: #{vit_forward.1} parent=11 // pred_check_branch
        %324 = sbr.rel (%p322) target = $region24
      $region23: #{vit_forward.1} parent=11 // pred_region
        _
      $region24: #{vit_forward.1} parent=11 // pred_fallthru
        _
      // Predicated region
      $region25: #{vit_forward.1} parent=11 // pred_check
        %p325 = pneg %p128
      $region26: #{vit_forward.1} parent=11 // pred_check_branch
        %327 = sbr.rel (%p325) target = $region28
      $region27: #{vit_forward.1} parent=11 // pred_region
        _
      $region28: #{vit_forward.1} parent=11 // pred_fallthru
        _
      // Predicated region
      $region29: #{vit_forward.1} parent=11 // pred_check
        %p328 = pneg %p149
      $region30: #{vit_forward.1} parent=11 // pred_check_branch
        %330 = sbr.rel (%p328) target = $region32
      $region31: #{vit_forward.1} parent=11 // pred_region
        _
      $region32: #{vit_forward.1} parent=11 // pred_fallthru
        _
      // Predicated region
      $region33: #{vit_forward.1} parent=11 // pred_check
        %p331 = pneg %p170
      $region34: #{vit_forward.1} parent=11 // pred_check_branch
        %333 = sbr.rel (%p331) target = $region36
      $region35: #{vit_forward.1} parent=11 // pred_region
        _
      $region36: #{vit_forward.1} parent=11 // pred_fallthru
        _
      // Predicated region
      $region37: #{vit_forward.1} parent=11 // pred_check
        %p334 = pneg %p191
      $region38: #{vit_forward.1} parent=11 // pred_check_branch
        %336 = sbr.rel (%p334) target = $region40
      $region39: #{vit_forward.1} parent=11 // pred_region
        _
      $region40: #{vit_forward.1} parent=11 // pred_fallthru
        _
      // Predicated region
      $region41: #{vit_forward.1} parent=11 // pred_check
        %p337 = pneg %p212
      $region42: #{vit_forward.1} parent=11 // pred_check_branch
        %339 = sbr.rel (%p337) target = $region44
      $region43: #{vit_forward.1} parent=11 // pred_region
        _
      $region44: #{vit_forward.1} parent=11 // pred_fallthru
        _
      // Predicated region
      $region45: #{vit_forward.1} parent=11 // pred_check
        %p340 = pneg %p233
      $region46: #{vit_forward.1} parent=11 // pred_check_branch
        %342 = sbr.rel (%p340) target = $region48
      $region47: #{vit_forward.1} parent=11 // pred_region
        _
      $region48: #{vit_forward.1} parent=11 // pred_fallthru
        _
      // Predicated region
      $region49: #{vit_forward.1} parent=11 // pred_check
        %p343 = pneg %p254
      $region50: #{vit_forward.1} parent=11 // pred_check_branch
        %345 = sbr.rel (%p343) target = $region52
      $region51: #{vit_forward.1} parent=11 // pred_region
        _
      $region52: #{vit_forward.1} parent=11 // pred_fallthru
        _
      // Predicated region
      $region53: #{vit_forward.1} parent=11 // pred_check
        %p346 = pneg %p275
      $region54: #{vit_forward.1} parent=11 // pred_check_branch
        %348 = sbr.rel (%p346) target = $region56
      $region55: #{vit_forward.1} parent=11 // pred_region
        _
      $region56: #{vit_forward.1} parent=11 // pred_fallthru
        _
    $region12: #{vit_forward.1} parent=5 // pred_fallthru
      _
    %p349 = scmp.lt.s32.totalorder %s18, 2
    // Predicated region
    $region57: #{vit_forward.1} parent=5 // pred_check
      %p350 = pneg %p349
    $region58: #{vit_forward.1} parent=5 // pred_check_branch
      %352 = sbr.rel (%p350) target = $region60
    $region59: #{vit_forward.1} parent=5 // pred_region
      // Predicated region
      $region61: #{vit_forward.1} parent=59 // pred_check
        %p353 = pneg %p38
      $region62: #{vit_forward.1} parent=59 // pred_check_branch
        %355 = sbr.rel (%p353) target = $region64
      $region63: #{vit_forward.1} parent=59 // pred_region
        %p356 = scmp.lt.s32.totalorder %s18, 1
        %s357 = scalar_select %p356, %s18, 1
        %s358 = smul.addr %s357, 6
        %s359 = smul.addr %s358, 8
        %s360 = scalar_lea.vmem %s0, %s359
      $region64: #{vit_forward.1} parent=59 // pred_fallthru
        _
    $region60: #{vit_forward.1} parent=5 // pred_fallthru
      _
    %p361 = scmp.le.s32.totalorder 1, %s18
    %p362 = scmp.lt.s32.totalorder %s18, 3
    %p363 = pnand %p361, %p362
    %p364 = pneg %p363
    // Predicated region
    $region65: #{vit_forward.1} parent=5 // pred_check
      _
    $region66: #{vit_forward.1} parent=5 // pred_check_branch
      %366 = sbr.rel (%p363) target = $region68
    $region67: #{vit_forward.1} parent=5 // pred_region
      %s367 = ssub.s32 %s18, 1
      %p368 = scmp.lt.s32.totalorder %s23, 1
      %s369 = scalar_select %p368, %s23, 1
      %s370 = smul.addr %s369, 6
      %s371 = smul.addr %s370, 8
      %s372 = scalar_lea.vmem %s0, %s371
      %p373 = pneg %p44
      %p374 = pneg %p41
      %p375 = pneg %p65
      %p376 = pneg %p62
      %p377 = pneg %p86
      %p378 = pneg %p83
      %p379 = pneg %p107
      %p380 = pneg %p104
      %p381 = pneg %p128
      %p382 = pneg %p125
      %p383 = pneg %p149
      %p384 = pneg %p146
      %p385 = pneg %p170
      %p386 = pneg %p167
      %p387 = pneg %p191
      %p388 = pneg %p188
      %p389 = pneg %p212
      %p390 = pneg %p209
      %p391 = pneg %p233
      %p392 = pneg %p230
      %p393 = pneg %p254
      %p394 = pneg %p251
      %p395 = pneg %p275
      %p396 = pneg %p272
      %p397 = pneg %p301
      %p398 = pneg %p298
      %p399 = scmp.lt.s32.totalorder %s23, 1
      %s400 = scalar_select %p399, %s23, 1
      %s401 = smul.addr %s400, 8
      %s402 = scalar_lea.vmem %s12, %s401
      %p403 = scmp.lt.s32.totalorder %s23, 1
      %s404 = scalar_select %p403, %s23, 1
      %s405 = smul.addr %s404, 6
      %s406 = smul.addr %s405, 8
      %s407 = scalar_lea.vmem %s0, %s406
      %p408 = scmp.lt.s32.totalorder %s23, 1
      %s409 = scalar_select %p408, %s23, 1
      %s410 = smul.addr %s409, 8
      %s411 = scalar_lea.vmem %s12, %s410
      %v412 = vld [vmem:[%s407] sm:$0xff]
      %v413 = vld [vmem:[%s407 + $0x8] sm:$0xff]
      %v414 = vld [vmem:[%s407 + $0x10] sm:$0xff]
      %v415 = vld [vmem:[%s407 + $0x18] sm:$0xff]
      %v416 = vld [vmem:[%s407 + $0x20] sm:$0xff]
      %v417 = vld [vmem:[%s407 + $0x28] sm:$0xff]
      %v418 = vld [vmem:[%s1] sm:$0xff]
      %v419 = vld [vmem:[%s1 + $0x8] sm:$0xff]
      %v420 = vld [vmem:[%s1 + $0x10] sm:$0xff]
      %v421 = vld [vmem:[%s1 + $0x18] sm:$0xff]
      %v422 = vld [vmem:[%s1 + $0x20] sm:$0xff]
      %v423 = vld [vmem:[%s1 + $0x28] sm:$0xff]
      %v424 = vld [vmem:[%s1 + $0x30] sm:$0xff]
      %v425 = vld [vmem:[%s1 + $0x38] sm:$0xff]
      %v426 = vld [vmem:[%s1 + $0x40] sm:$0xff]
      %v427 = vld [vmem:[%s1 + $0x48] sm:$0xff]
      %v428 = vld [vmem:[%s1 + $0x50] sm:$0xff]
      %v429 = vld [vmem:[%s1 + $0x58] sm:$0xff]
      %v430 = vld [vmem:[%s1 + $0x60] sm:$0xff]
      %v431 = vld [vmem:[%s1 + $0x68] sm:$0xff]
      %v432 = vld [vmem:[%s1 + $0x70] sm:$0xff]
      %v433 = vld [vmem:[%s1 + $0x78] sm:$0xff]
      %v434 = vld [vmem:[%s1 + $0x80] sm:$0xff]
      %v435 = vld [vmem:[%s1 + $0x88] sm:$0xff]
      %v436 = vld [vmem:[%s1 + $0x90] sm:$0xff]
      %v437 = vld [vmem:[%s1 + $0x98] sm:$0xff]
      %v438 = vld [vmem:[%s1 + $0xa0] sm:$0xff]
      %v439 = vld [vmem:[%s1 + $0xa8] sm:$0xff]
      %v440 = vld [vmem:[%s1 + $0xb0] sm:$0xff]
      %v441 = vld [vmem:[%s1 + $0xb8] sm:$0xff]
      %v442 = vld [vmem:[%s1 + $0xc0] sm:$0xff]
      %v443 = vld [vmem:[%s1 + $0xc8] sm:$0xff]
      %v444 = vld [vmem:[%s1 + $0xd0] sm:$0xff]
      %v445 = vld [vmem:[%s1 + $0xd8] sm:$0xff]
      %v446 = vld [vmem:[%s1 + $0xe0] sm:$0xff]
      %v447 = vld [vmem:[%s1 + $0xe8] sm:$0xff]
      %v448 = vld [vmem:[%s1 + $0xf0] sm:$0xff]
      %v449 = vld [vmem:[%s1 + $0xf8] sm:$0xff]
      %v450 = vld [vmem:[%s1 + $0x100] sm:$0xff]
      %v451 = vld [vmem:[%s1 + $0x108] sm:$0xff]
      %v452 = vld [vmem:[%s1 + $0x110] sm:$0xff]
      %v453 = vld [vmem:[%s1 + $0x118] sm:$0xff]
      %v454 = vld [vmem:[%s1 + $0x120] sm:$0xff]
      %v455 = vld [vmem:[%s1 + $0x128] sm:$0xff]
      %v456 = vld [vmem:[%s1 + $0x130] sm:$0xff]
      %v457 = vld [vmem:[%s1 + $0x138] sm:$0xff]
      %v458 = vld [vmem:[%s1 + $0x140] sm:$0xff]
      %v459 = vld [vmem:[%s1 + $0x148] sm:$0xff]
      %v460 = vld [vmem:[%s1 + $0x150] sm:$0xff]
      %v461 = vld [vmem:[%s1 + $0x158] sm:$0xff]
      %v462 = vld [vmem:[%s1 + $0x160] sm:$0xff]
      %v463 = vld [vmem:[%s1 + $0x168] sm:$0xff]
      %v464 = vld [vmem:[%s1 + $0x170] sm:$0xff]
      %v465 = vld [vmem:[%s1 + $0x178] sm:$0xff]
      %v466 = vld [vmem:[%s1 + $0x180] sm:$0xff]
      %v467 = vld [vmem:[%s1 + $0x188] sm:$0xff]
      %v468 = vld [vmem:[%s1 + $0x190] sm:$0xff]
      %v469 = vld [vmem:[%s1 + $0x198] sm:$0xff]
      %v470 = vld [vmem:[%s1 + $0x1a0] sm:$0xff]
      %v471 = vld [vmem:[%s1 + $0x1a8] sm:$0xff]
      %v472 = vld [vmem:[%s1 + $0x1b0] sm:$0xff]
      %v473 = vld [vmem:[%s1 + $0x1b8] sm:$0xff]
      %v474 = vld [vmem:[%s1 + $0x1c0] sm:$0xff]
      %v475 = vld [vmem:[%s1 + $0x1c8] sm:$0xff]
      %v476 = vld [vmem:[%s1 + $0x1d0] sm:$0xff]
      %v477 = vld [vmem:[%s1 + $0x1d8] sm:$0xff]
      %v478 = vld [vmem:[%s1 + $0x1e0] sm:$0xff]
      %v479 = vld [vmem:[%s1 + $0x1e8] sm:$0xff]
      %v480 = vld [vmem:[%s1 + $0x1f0] sm:$0xff]
      %v481 = vld [vmem:[%s1 + $0x1f8] sm:$0xff]
      %v482 = vld [vmem:[%s1 + $0x200] sm:$0xff]
      %v483 = vld [vmem:[%s1 + $0x208] sm:$0xff]
      %v484 = vld [vmem:[%s1 + $0x210] sm:$0xff]
      %v485 = vld [vmem:[%s1 + $0x218] sm:$0xff]
      %v486 = vld [vmem:[%s1 + $0x220] sm:$0xff]
      %v487 = vld [vmem:[%s1 + $0x228] sm:$0xff]
      %v488 = vld [vmem:[%s1 + $0x230] sm:$0xff]
      %v489 = vld [vmem:[%s1 + $0x238] sm:$0xff]
      %v490 = vld [vmem:[%s1 + $0x240] sm:$0xff]
      %v491 = vld [vmem:[%s1 + $0x248] sm:$0xff]
      %v492 = vld [vmem:[%s1 + $0x250] sm:$0xff]
      %v493 = vld [vmem:[%s1 + $0x258] sm:$0xff]
      %v494 = vld [vmem:[%s1 + $0x260] sm:$0xff]
      %v495 = vld [vmem:[%s1 + $0x268] sm:$0xff]
      %v496 = vld [vmem:[%s1 + $0x270] sm:$0xff]
      %v497 = vld [vmem:[%s1 + $0x278] sm:$0xff]
      %v498 = vld [vmem:[%s1 + $0x280] sm:$0xff]
      %v499 = vld [vmem:[%s1 + $0x288] sm:$0xff]
      %v500 = vld [vmem:[%s1 + $0x290] sm:$0xff]
      %v501 = vld [vmem:[%s1 + $0x298] sm:$0xff]
      %v502 = vld [vmem:[%s1 + $0x2a0] sm:$0xff]
      %v503 = vld [vmem:[%s1 + $0x2a8] sm:$0xff]
      %v504 = vld [vmem:[%s1 + $0x2b0] sm:$0xff]
      %v505 = vld [vmem:[%s1 + $0x2b8] sm:$0xff]
      %v506 = vld [vmem:[%s1 + $0x2c0] sm:$0xff]
      %v507 = vld [vmem:[%s1 + $0x2c8] sm:$0xff]
      %v508 = vld [vmem:[%s1 + $0x2d0] sm:$0xff]
      %v509 = vld [vmem:[%s1 + $0x2d8] sm:$0xff]
      %v510 = vld [vmem:[%s1 + $0x2e0] sm:$0xff]
      %v511 = vld [vmem:[%s1 + $0x2e8] sm:$0xff]
      %v512 = vld [vmem:[%s1 + $0x2f0] sm:$0xff]
      %v513 = vld [vmem:[%s1 + $0x2f8] sm:$0xff]
      %514 = vmatprep.subr.mxu0 0.0
      %515 = vmatpush1.msra.mxu0 %v433
      %516 = vmatprep.subr.mxu0 0.0
      %517 = vmatpush1.msra.mxu0 %v432
      %518 = vmatprep.subr.mxu0 0.0
      %519 = vmatpush1.msra.mxu0 %v431
      %520 = vmatprep.subr.mxu0 0.0
      %521 = vmatpush1.msra.mxu0 %v430
      %522 = vmatprep.subr.mxu0 0.0
      %523 = vmatpush1.msra.mxu0 %v429
      %524 = vmatprep.subr.mxu0 0.0
      %525 = vmatpush1.msra.mxu0 %v428
      %526 = vmatprep.subr.mxu0 0.0
      %527 = vmatpush1.msra.mxu0 %v427
      %528 = vmatprep.subr.mxu0 0.0
      %529 = vmatpush1.msra.mxu0 %v426
      %530 = vmatprep.subr.mxu0 0.0
      %531 = vmatpush1.msra.mxu0 %v425
      %532 = vmatprep.subr.mxu0 0.0
      %533 = vmatpush1.msra.mxu0 %v424
      %534 = vmatprep.subr.mxu0 0.0
      %535 = vmatpush1.msra.mxu0 %v423
      %536 = vmatprep.subr.mxu0 0.0
      %537 = vmatpush1.msra.mxu0 %v422
      %538 = vmatprep.subr.mxu0 0.0
      %539 = vmatpush1.msra.mxu0 %v421
      %540 = vmatprep.subr.mxu0 0.0
      %541 = vmatpush1.msra.mxu0 %v420
      %542 = vmatprep.subr.mxu0 0.0
      %543 = vmatpush1.msra.mxu0 %v419
      %544 = vmatprep.subr.mxu0 0.0
      %545 = vmatpush1.msra.mxu0 %v418
      %546 = vmatprep.subr.mxu0 0.0
      %547 = vmatpush2.msra.mxu0 %v449
      %548 = vmatprep.subr.mxu0 0.0
      %549 = vmatpush2.msra.mxu0 %v448
      %550 = vmatprep.subr.mxu0 0.0
      %551 = vmatpush2.msra.mxu0 %v447
      %552 = vmatprep.subr.mxu0 0.0
      %553 = vmatpush2.msra.mxu0 %v446
      %554 = vmatprep.subr.mxu0 0.0
      %555 = vmatpush2.msra.mxu0 %v445
      %556 = vmatprep.subr.mxu0 0.0
      %557 = vmatpush2.msra.mxu0 %v444
      %558 = vmatprep.subr.mxu0 0.0
      %559 = vmatpush2.msra.mxu0 %v443
      %560 = vmatprep.subr.mxu0 0.0
      %561 = vmatpush2.msra.mxu0 %v442
      %562 = vmatprep.subr.mxu0 0.0
      %563 = vmatpush2.msra.mxu0 %v441
      %564 = vmatprep.subr.mxu0 0.0
      %565 = vmatpush2.msra.mxu0 %v440
      %566 = vmatprep.subr.mxu0 0.0
      %567 = vmatpush2.msra.mxu0 %v439
      %568 = vmatprep.subr.mxu0 0.0
      %569 = vmatpush2.msra.mxu0 %v438
      %570 = vmatprep.subr.mxu0 0.0
      %571 = vmatpush2.msra.mxu0 %v437
      %572 = vmatprep.subr.mxu0 0.0
      %573 = vmatpush2.msra.mxu0 %v436
      %574 = vmatprep.subr.mxu0 0.0
      %575 = vmatpush2.msra.mxu0 %v435
      %576 = vmatprep.subr.mxu0 0.0
      %577 = vmatpush2.msra.mxu0 %v434
      %578 = vmatprep.mubr.f32.mxu0 %v413
      %579 = vmatmul.mubr.f32.gmra.mxu0 %v412
      %v580 = vpop.f32.mrf.mxu0
      %v581 = vadd.f32 0.0, %v580
      %v582 = vpop.f32.mrf.mxu0
      %583 = vdwg.mxu0
      %584 = vmatprep.subr.mxu0 0.0
      %585 = vmatpush1.msra.mxu0 %v465
      %586 = vmatprep.subr.mxu0 0.0
      %587 = vmatpush1.msra.mxu0 %v464
      %588 = vmatprep.subr.mxu0 0.0
      %589 = vmatpush1.msra.mxu0 %v463
      %590 = vmatprep.subr.mxu0 0.0
      %591 = vmatpush1.msra.mxu0 %v462
      %592 = vmatprep.subr.mxu0 0.0
      %593 = vmatpush1.msra.mxu0 %v461
      %594 = vmatprep.subr.mxu0 0.0
      %595 = vmatpush1.msra.mxu0 %v460
      %596 = vmatprep.subr.mxu0 0.0
      %597 = vmatpush1.msra.mxu0 %v459
      %598 = vmatprep.subr.mxu0 0.0
      %599 = vmatpush1.msra.mxu0 %v458
      %600 = vmatprep.subr.mxu0 0.0
      %601 = vmatpush1.msra.mxu0 %v457
      %602 = vmatprep.subr.mxu0 0.0
      %603 = vmatpush1.msra.mxu0 %v456
      %604 = vmatprep.subr.mxu0 0.0
      %605 = vmatpush1.msra.mxu0 %v455
      %606 = vmatprep.subr.mxu0 0.0
      %607 = vmatpush1.msra.mxu0 %v454
      %608 = vmatprep.subr.mxu0 0.0
      %609 = vmatpush1.msra.mxu0 %v453
      %610 = vmatprep.subr.mxu0 0.0
      %611 = vmatpush1.msra.mxu0 %v452
      %612 = vmatprep.subr.mxu0 0.0
      %613 = vmatpush1.msra.mxu0 %v451
      %614 = vmatprep.subr.mxu0 0.0
      %615 = vmatpush1.msra.mxu0 %v450
      %616 = vmatprep.subr.mxu0 0.0
      %617 = vmatpush2.msra.mxu0 %v481
      %618 = vmatprep.subr.mxu0 0.0
      %619 = vmatpush2.msra.mxu0 %v480
      %620 = vmatprep.subr.mxu0 0.0
      %621 = vmatpush2.msra.mxu0 %v479
      %622 = vmatprep.subr.mxu0 0.0
      %623 = vmatpush2.msra.mxu0 %v478
      %624 = vmatprep.subr.mxu0 0.0
      %625 = vmatpush2.msra.mxu0 %v477
      %626 = vmatprep.subr.mxu0 0.0
      %627 = vmatpush2.msra.mxu0 %v476
      %628 = vmatprep.subr.mxu0 0.0
      %629 = vmatpush2.msra.mxu0 %v475
      %630 = vmatprep.subr.mxu0 0.0
      %631 = vmatpush2.msra.mxu0 %v474
      %632 = vmatprep.subr.mxu0 0.0
      %633 = vmatpush2.msra.mxu0 %v473
      %634 = vmatprep.subr.mxu0 0.0
      %635 = vmatpush2.msra.mxu0 %v472
      %636 = vmatprep.subr.mxu0 0.0
      %637 = vmatpush2.msra.mxu0 %v471
      %638 = vmatprep.subr.mxu0 0.0
      %639 = vmatpush2.msra.mxu0 %v470
      %640 = vmatprep.subr.mxu0 0.0
      %641 = vmatpush2.msra.mxu0 %v469
      %642 = vmatprep.subr.mxu0 0.0
      %643 = vmatpush2.msra.mxu0 %v468
      %644 = vmatprep.subr.mxu0 0.0
      %645 = vmatpush2.msra.mxu0 %v467
      %646 = vmatprep.subr.mxu0 0.0
      %647 = vmatpush2.msra.mxu0 %v466
      %648 = vmatprep.mubr.f32.mxu0 %v415
      %649 = vmatmul.mubr.f32.gmra.mxu0 %v414
      %v650 = vpop.f32.mrf.mxu0
      %v651 = vadd.f32 %v581, %v650
      %v652 = vpop.f32.mrf.mxu0
      %653 = vdwg.mxu0
      %654 = vmatprep.subr.mxu0 0.0
      %655 = vmatpush1.msra.mxu0 %v497
      %656 = vmatprep.subr.mxu0 0.0
      %657 = vmatpush1.msra.mxu0 %v496
      %658 = vmatprep.subr.mxu0 0.0
      %659 = vmatpush1.msra.mxu0 %v495
      %660 = vmatprep.subr.mxu0 0.0
      %661 = vmatpush1.msra.mxu0 %v494
      %662 = vmatprep.subr.mxu0 0.0
      %663 = vmatpush1.msra.mxu0 %v493
      %664 = vmatprep.subr.mxu0 0.0
      %665 = vmatpush1.msra.mxu0 %v492
      %666 = vmatprep.subr.mxu0 0.0
      %667 = vmatpush1.msra.mxu0 %v491
      %668 = vmatprep.subr.mxu0 0.0
      %669 = vmatpush1.msra.mxu0 %v490
      %670 = vmatprep.subr.mxu0 0.0
      %671 = vmatpush1.msra.mxu0 %v489
      %672 = vmatprep.subr.mxu0 0.0
      %673 = vmatpush1.msra.mxu0 %v488
      %674 = vmatprep.subr.mxu0 0.0
      %675 = vmatpush1.msra.mxu0 %v487
      %676 = vmatprep.subr.mxu0 0.0
      %677 = vmatpush1.msra.mxu0 %v486
      %678 = vmatprep.subr.mxu0 0.0
      %679 = vmatpush1.msra.mxu0 %v485
      %680 = vmatprep.subr.mxu0 0.0
      %681 = vmatpush1.msra.mxu0 %v484
      %682 = vmatprep.subr.mxu0 0.0
      %683 = vmatpush1.msra.mxu0 %v483
      %684 = vmatprep.subr.mxu0 0.0
      %685 = vmatpush1.msra.mxu0 %v482
      %686 = vmatprep.subr.mxu0 0.0
      %687 = vmatpush2.msra.mxu0 %v513
      %688 = vmatprep.subr.mxu0 0.0
      %689 = vmatpush2.msra.mxu0 %v512
      %690 = vmatprep.subr.mxu0 0.0
      %691 = vmatpush2.msra.mxu0 %v511
      %692 = vmatprep.subr.mxu0 0.0
      %693 = vmatpush2.msra.mxu0 %v510
      %694 = vmatprep.subr.mxu0 0.0
      %695 = vmatpush2.msra.mxu0 %v509
      %696 = vmatprep.subr.mxu0 0.0
      %697 = vmatpush2.msra.mxu0 %v508
      %698 = vmatprep.subr.mxu0 0.0
      %699 = vmatpush2.msra.mxu0 %v507
      %700 = vmatprep.subr.mxu0 0.0
      %701 = vmatpush2.msra.mxu0 %v506
      %702 = vmatprep.subr.mxu0 0.0
      %703 = vmatpush2.msra.mxu0 %v505
      %704 = vmatprep.subr.mxu0 0.0
      %705 = vmatpush2.msra.mxu0 %v504
      %706 = vmatprep.subr.mxu0 0.0
      %707 = vmatpush2.msra.mxu0 %v503
      %708 = vmatprep.subr.mxu0 0.0
      %709 = vmatpush2.msra.mxu0 %v502
      %710 = vmatprep.subr.mxu0 0.0
      %711 = vmatpush2.msra.mxu0 %v501
      %712 = vmatprep.subr.mxu0 0.0
      %713 = vmatpush2.msra.mxu0 %v500
      %714 = vmatprep.subr.mxu0 0.0
      %715 = vmatpush2.msra.mxu0 %v499
      %716 = vmatprep.subr.mxu0 0.0
      %717 = vmatpush2.msra.mxu0 %v498
      %718 = vmatprep.mubr.f32.mxu0 %v417
      %719 = vmatmul.mubr.f32.gmra.mxu0 %v416
      %v720 = vpop.f32.mrf.mxu0
      %v721 = vadd.f32 %v651, %v720
      %v722 = vpop.f32.mrf.mxu0
      %723 = vdwg.mxu0
      %v724 = vld [vmem:[%s2] sm:$0xff]
      %v725 = vadd.f32 %v721, %v724
      %v726 = vlaneseq
      %v727 = vand.u32 %v726, 127
      %vm728 = vcmp.lt.s32.totalorder %v727, 5
      %v729 = vsel %vm728, 0.0, -1e+30
      %v730 = vld [vmem:[%s8] sm:$0xff]
      %vm731 = vcmask 261120
      %v732 = vsel %vm731, %v725, 0.0
      %733 = vadd.xlane.f32.xlu0 %v732
      %v734 = vpop.xlane.xlu0 %733
      %v735 = vrcp.pop 32.0
      %v736 = vmul.f32 %v734, %v735
      %v737 = vsub.f32 %v725, %v736
      %v738 = vmul.f32 %v737, %v737
      %v739 = vsel %vm731, %v738, 0.0
      %740 = vadd.xlane.f32.xlu0 %v739
      %v741 = vpop.xlane.xlu0 %740
      %v742 = vmul.f32 %v741, %v735
      %v743 = vadd.f32 %v742, 1e-05
      %v744 = vrsqrt.pop %v743
      %v745 = vmul.f32 %v737, %v744
      %v746 = vlaneseq
      %v747 = vshrl.u32 %v746, 7
      %v748 = vsub.s32 0, %v747
      %v749 = vrot.slane %v730, %v748
      %v750 = vmul.f32 %v745, %v749
      %v751 = vlaneseq
      %v752 = vshrl.u32 %v751, 7
      %v753 = vsub.s32 1, %v752
      %v754 = vrot.slane %v730, %v753
      %v755 = vadd.f32 %v750, %v754
      %v756 = vld [vmem:[%s3] sm:$0xff]
      %v757 = vld [vmem:[%s3 + $0x8] sm:$0xff]
      %v758 = vld [vmem:[%s3 + $0x10] sm:$0xff]
      %v759 = vld [vmem:[%s3 + $0x18] sm:$0xff]
      %v761 = vsel %vm731, %v755, 0
      %763 = vmatprep.subr.mxu0 0.0
      %764 = vmatpush1.msra.mxu0 0.0
      %765 = vmatprep.subr.mxu0 0.0
      %766 = vmatpush1.msra.mxu0 0.0
      %767 = vmatprep.subr.mxu0 0.0
      %768 = vmatpush1.msra.mxu0 0.0
      %769 = vmatprep.subr.mxu0 0.0
      %770 = vmatpush1.msra.mxu0 0.0
      %771 = vmatprep.subr.mxu0 0.0
      %772 = vmatpush1.msra.mxu0 0.0
      %773 = vmatprep.subr.mxu0 0.0
      %774 = vmatpush1.msra.mxu0 0.0
      %775 = vmatprep.subr.mxu0 0.0
      %776 = vmatpush1.msra.mxu0 0.0
      %777 = vmatprep.subr.mxu0 0.0
      %778 = vmatpush1.msra.mxu0 0.0
      %779 = vmatprep.subr.mxu0 0.0
      %780 = vmatpush1.msra.mxu0 0.0
      %781 = vmatprep.subr.mxu0 0.0
      %782 = vmatpush1.msra.mxu0 0.0
      %783 = vmatprep.subr.mxu0 0.0
      %784 = vmatpush1.msra.mxu0 0.0
      %785 = vmatprep.subr.mxu0 0.0
      %786 = vmatpush1.msra.mxu0 0.0
      %787 = vmatprep.subr.mxu0 0.0
      %788 = vmatpush1.msra.mxu0 %v759
      %789 = vmatprep.subr.mxu0 0.0
      %790 = vmatpush1.msra.mxu0 %v758
      %791 = vmatprep.subr.mxu0 0.0
      %792 = vmatpush1.msra.mxu0 %v757
      %793 = vmatprep.subr.mxu0 0.0
      %794 = vmatpush1.msra.mxu0 %v756
      %795 = vmatprep.subr.mxu0 0.0
      %796 = vmatpush2.msra.mxu0 0.0
      %797 = vmatprep.subr.mxu0 0.0
      %798 = vmatpush2.msra.mxu0 0.0
      %799 = vmatprep.subr.mxu0 0.0
      %800 = vmatpush2.msra.mxu0 0.0
      %801 = vmatprep.subr.mxu0 0.0
      %802 = vmatpush2.msra.mxu0 0.0
      %803 = vmatprep.subr.mxu0 0.0
      %804 = vmatpush2.msra.mxu0 0.0
      %805 = vmatprep.subr.mxu0 0.0
      %806 = vmatpush2.msra.mxu0 0.0
      %807 = vmatprep.subr.mxu0 0.0
      %808 = vmatpush2.msra.mxu0 0.0
      %809 = vmatprep.subr.mxu0 0.0
      %810 = vmatpush2.msra.mxu0 0.0
      %811 = vmatprep.subr.mxu0 0.0
      %812 = vmatpush2.msra.mxu0 0.0
      %813 = vmatprep.subr.mxu0 0.0
      %814 = vmatpush2.msra.mxu0 0.0
      %815 = vmatprep.subr.mxu0 0.0
      %816 = vmatpush2.msra.mxu0 0.0
      %817 = vmatprep.subr.mxu0 0.0
      %818 = vmatpush2.msra.mxu0 0.0
      %819 = vmatprep.subr.mxu0 0.0
      %820 = vmatpush2.msra.mxu0 0.0
      %821 = vmatprep.subr.mxu0 0.0
      %822 = vmatpush2.msra.mxu0 0.0
      %823 = vmatprep.subr.mxu0 0.0
      %824 = vmatpush2.msra.mxu0 0.0
      %825 = vmatprep.subr.mxu0 0.0
      %826 = vmatpush2.msra.mxu0 0.0
      %827 = vmatprep.mubr.f32.mxu0 0.0
      %828 = vmatmul.mubr.f32.gmra.mxu0 %v761
      %v829 = vpop.f32.mrf.mxu0
      %v830 = vadd.f32 0.0, %v829
      %v831 = vpop.f32.mrf.mxu0
      %832 = vdwg.mxu0
      %834 = vrot.lane.b32.xlu0 %v830, 96
      %v835 = vpop.permute.xlu0 %834
      %vm836 = vcmask 64512
      %v837 = vsel %vm836, %v830, 0
      %v839 = vsel %vm836, %v835, 0
      %841 = vmatprep.subr.mxu0 0.0
      %842 = vmatpush1.xpose.msra.mxu0 0.0
      %843 = vmatprep.subr.mxu0 0.0
      %844 = vmatpush1.xpose.msra.mxu0 0.0
      %845 = vmatprep.subr.mxu0 0.0
      %846 = vmatpush1.xpose.msra.mxu0 0.0
      %847 = vmatprep.subr.mxu0 0.0
      %848 = vmatpush1.xpose.msra.mxu0 0.0
      %849 = vmatprep.subr.mxu0 0.0
      %850 = vmatpush1.xpose.msra.mxu0 0.0
      %851 = vmatprep.subr.mxu0 0.0
      %852 = vmatpush1.xpose.msra.mxu0 0.0
      %853 = vmatprep.subr.mxu0 0.0
      %854 = vmatpush1.xpose.msra.mxu0 0.0
      %855 = vmatprep.subr.mxu0 0.0
      %856 = vmatpush1.xpose.msra.mxu0 0.0
      %857 = vmatprep.subr.mxu0 0.0
      %858 = vmatpush1.xpose.msra.mxu0 0.0
      %859 = vmatprep.subr.mxu0 0.0
      %860 = vmatpush1.xpose.msra.mxu0 0.0
      %861 = vmatprep.subr.mxu0 0.0
      %862 = vmatpush1.xpose.msra.mxu0 0.0
      %863 = vmatprep.subr.mxu0 0.0
      %864 = vmatpush1.xpose.msra.mxu0 0.0
      %865 = vmatprep.subr.mxu0 0.0
      %866 = vmatpush1.xpose.msra.mxu0 0.0
      %867 = vmatprep.subr.mxu0 0.0
      %868 = vmatpush1.xpose.msra.mxu0 0.0
      %869 = vmatprep.subr.mxu0 0.0
      %870 = vmatpush1.xpose.msra.mxu0 0.0
      %871 = vmatprep.subr.mxu0 0.0
      %872 = vmatpush1.xpose.msra.mxu0 %v839
      %873 = vmatprep.subr.mxu0 0.0
      %874 = vmatpush2.xpose.msra.mxu0 0.0
      %875 = vmatprep.subr.mxu0 0.0
      %876 = vmatpush2.xpose.msra.mxu0 0.0
      %877 = vmatprep.subr.mxu0 0.0
      %878 = vmatpush2.xpose.msra.mxu0 0.0
      %879 = vmatprep.subr.mxu0 0.0
      %880 = vmatpush2.xpose.msra.mxu0 0.0
      %881 = vmatprep.subr.mxu0 0.0
      %882 = vmatpush2.xpose.msra.mxu0 0.0
      %883 = vmatprep.subr.mxu0 0.0
      %884 = vmatpush2.xpose.msra.mxu0 0.0
      %885 = vmatprep.subr.mxu0 0.0
      %886 = vmatpush2.xpose.msra.mxu0 0.0
      %887 = vmatprep.subr.mxu0 0.0
      %888 = vmatpush2.xpose.msra.mxu0 0.0
      %889 = vmatprep.subr.mxu0 0.0
      %890 = vmatpush2.xpose.msra.mxu0 0.0
      %891 = vmatprep.subr.mxu0 0.0
      %892 = vmatpush2.xpose.msra.mxu0 0.0
      %893 = vmatprep.subr.mxu0 0.0
      %894 = vmatpush2.xpose.msra.mxu0 0.0
      %895 = vmatprep.subr.mxu0 0.0
      %896 = vmatpush2.xpose.msra.mxu0 0.0
      %897 = vmatprep.subr.mxu0 0.0
      %898 = vmatpush2.xpose.msra.mxu0 0.0
      %899 = vmatprep.subr.mxu0 0.0
      %900 = vmatpush2.xpose.msra.mxu0 0.0
      %901 = vmatprep.subr.mxu0 0.0
      %902 = vmatpush2.xpose.msra.mxu0 0.0
      %903 = vmatprep.subr.mxu0 0.0
      %904 = vmatpush2.xpose.msra.mxu0 0.0
      %905 = vmatprep.mubr.f32.mxu0 0.0
      %906 = vmatmul.mubr.f32.gmra.mxu0 %v837
      %v907 = vpop.f32.mrf.mxu0
      %v908 = vadd.f32 %v729, %v907
      %v909 = vpop.f32.mrf.mxu0
      %910 = vdwg.mxu0
      %v911 = vsel %vm836, %v908, -inf
      %912 = vmax.xlane.f32.xlu0 %v911
      %v913 = vpop.xlane.xlu0 %912
      %v914 = vsub.f32 %v908, %v913
      %v915 = vmul.f32 %v914, 1.442695
      %v916 = vpow.pop %v915
      %v917 = vsel %vm836, %v916, 0.0
      %918 = vadd.xlane.f32.xlu0 %v917
      %v919 = vpop.xlane.xlu0 %918
      %v920 = vrcp.pop %v919
      %v921 = vmul.f32 %v916, %v920
      %922 = vrot.lane.b32.xlu0 %v830, 64
      %v923 = vpop.permute.xlu0 %922
      %v926 = vsel %vm836, %v921, 0
      %928 = vmatprep.subr.mxu0 0.0
      %929 = vmatpush1.msra.mxu0 0.0
      %930 = vmatprep.subr.mxu0 0.0
      %931 = vmatpush1.msra.mxu0 0.0
      %932 = vmatprep.subr.mxu0 0.0
      %933 = vmatpush1.msra.mxu0 0.0
      %934 = vmatprep.subr.mxu0 0.0
      %935 = vmatpush1.msra.mxu0 0.0
      %936 = vmatprep.subr.mxu0 0.0
      %937 = vmatpush1.msra.mxu0 0.0
      %938 = vmatprep.subr.mxu0 0.0
      %939 = vmatpush1.msra.mxu0 0.0
      %940 = vmatprep.subr.mxu0 0.0
      %941 = vmatpush1.msra.mxu0 0.0
      %942 = vmatprep.subr.mxu0 0.0
      %943 = vmatpush1.msra.mxu0 0.0
      %944 = vmatprep.subr.mxu0 0.0
      %945 = vmatpush1.msra.mxu0 0.0
      %946 = vmatprep.subr.mxu0 0.0
      %947 = vmatpush1.msra.mxu0 0.0
      %948 = vmatprep.subr.mxu0 0.0
      %949 = vmatpush1.msra.mxu0 0.0
      %950 = vmatprep.subr.mxu0 0.0
      %951 = vmatpush1.msra.mxu0 0.0
      %952 = vmatprep.subr.mxu0 0.0
      %953 = vmatpush1.msra.mxu0 0.0
      %954 = vmatprep.subr.mxu0 0.0
      %955 = vmatpush1.msra.mxu0 0.0
      %956 = vmatprep.subr.mxu0 0.0
      %957 = vmatpush1.msra.mxu0 0.0
      %958 = vmatprep.subr.mxu0 0.0
      %959 = vmatpush1.msra.mxu0 %v923
      %960 = vmatprep.subr.mxu0 0.0
      %961 = vmatpush2.msra.mxu0 0.0
      %962 = vmatprep.subr.mxu0 0.0
      %963 = vmatpush2.msra.mxu0 0.0
      %964 = vmatprep.subr.mxu0 0.0
      %965 = vmatpush2.msra.mxu0 0.0
      %966 = vmatprep.subr.mxu0 0.0
      %967 = vmatpush2.msra.mxu0 0.0
      %968 = vmatprep.subr.mxu0 0.0
      %969 = vmatpush2.msra.mxu0 0.0
      %970 = vmatprep.subr.mxu0 0.0
      %971 = vmatpush2.msra.mxu0 0.0
      %972 = vmatprep.subr.mxu0 0.0
      %973 = vmatpush2.msra.mxu0 0.0
      %974 = vmatprep.subr.mxu0 0.0
      %975 = vmatpush2.msra.mxu0 0.0
      %976 = vmatprep.subr.mxu0 0.0
      %977 = vmatpush2.msra.mxu0 0.0
      %978 = vmatprep.subr.mxu0 0.0
      %979 = vmatpush2.msra.mxu0 0.0
      %980 = vmatprep.subr.mxu0 0.0
      %981 = vmatpush2.msra.mxu0 0.0
      %982 = vmatprep.subr.mxu0 0.0
      %983 = vmatpush2.msra.mxu0 0.0
      %984 = vmatprep.subr.mxu0 0.0
      %985 = vmatpush2.msra.mxu0 0.0
      %986 = vmatprep.subr.mxu0 0.0
      %987 = vmatpush2.msra.mxu0 0.0
      %988 = vmatprep.subr.mxu0 0.0
      %989 = vmatpush2.msra.mxu0 0.0
      %990 = vmatprep.subr.mxu0 0.0
      %991 = vmatpush2.msra.mxu0 0.0
      %992 = vmatprep.mubr.f32.mxu0 0.0
      %993 = vmatmul.mubr.f32.gmra.mxu0 %v926
      %v994 = vpop.f32.mrf.mxu0
      %v995 = vadd.f32 0.0, %v994
      %v996 = vpop.f32.mrf.mxu0
      %997 = vdwg.mxu0
      %998 = vrot.lane.b32.xlu0 %v830, 120
      %v999 = vpop.permute.xlu0 %998
      %1000 = vrot.lane.b32.xlu0 %v830, 88
      %v1001 = vpop.permute.xlu0 %1000
      %v1002 = vsel %vm836, %v999, 0
      %v1004 = vsel %vm836, %v1001, 0
      %1006 = vmatprep.subr.mxu0 0.0
      %1007 = vmatpush1.xpose.msra.mxu0 0.0
      %1008 = vmatprep.subr.mxu0 0.0
      %1009 = vmatpush1.xpose.msra.mxu0 0.0
      %1010 = vmatprep.subr.mxu0 0.0
      %1011 = vmatpush1.xpose.msra.mxu0 0.0
      %1012 = vmatprep.subr.mxu0 0.0
      %1013 = vmatpush1.xpose.msra.mxu0 0.0
      %1014 = vmatprep.subr.mxu0 0.0
      %1015 = vmatpush1.xpose.msra.mxu0 0.0
      %1016 = vmatprep.subr.mxu0 0.0
      %1017 = vmatpush1.xpose.msra.mxu0 0.0
      %1018 = vmatprep.subr.mxu0 0.0
      %1019 = vmatpush1.xpose.msra.mxu0 0.0
      %1020 = vmatprep.subr.mxu0 0.0
      %1021 = vmatpush1.xpose.msra.mxu0 0.0
      %1022 = vmatprep.subr.mxu0 0.0
      %1023 = vmatpush1.xpose.msra.mxu0 0.0
      %1024 = vmatprep.subr.mxu0 0.0
      %1025 = vmatpush1.xpose.msra.mxu0 0.0
      %1026 = vmatprep.subr.mxu0 0.0
      %1027 = vmatpush1.xpose.msra.mxu0 0.0
      %1028 = vmatprep.subr.mxu0 0.0
      %1029 = vmatpush1.xpose.msra.mxu0 0.0
      %1030 = vmatprep.subr.mxu0 0.0
      %1031 = vmatpush1.xpose.msra.mxu0 0.0
      %1032 = vmatprep.subr.mxu0 0.0
      %1033 = vmatpush1.xpose.msra.mxu0 0.0
      %1034 = vmatprep.subr.mxu0 0.0
      %1035 = vmatpush1.xpose.msra.mxu0 0.0
      %1036 = vmatprep.subr.mxu0 0.0
      %1037 = vmatpush1.xpose.msra.mxu0 %v1004
      %1038 = vmatprep.subr.mxu0 0.0
      %1039 = vmatpush2.xpose.msra.mxu0 0.0
      %1040 = vmatprep.subr.mxu0 0.0
      %1041 = vmatpush2.xpose.msra.mxu0 0.0
      %1042 = vmatprep.subr.mxu0 0.0
      %1043 = vmatpush2.xpose.msra.mxu0 0.0
      %1044 = vmatprep.subr.mxu0 0.0
      %1045 = vmatpush2.xpose.msra.mxu0 0.0
      %1046 = vmatprep.subr.mxu0 0.0
      %1047 = vmatpush2.xpose.msra.mxu0 0.0
      %1048 = vmatprep.subr.mxu0 0.0
      %1049 = vmatpush2.xpose.msra.mxu0 0.0
      %1050 = vmatprep.subr.mxu0 0.0
      %1051 = vmatpush2.xpose.msra.mxu0 0.0
      %1052 = vmatprep.subr.mxu0 0.0
      %1053 = vmatpush2.xpose.msra.mxu0 0.0
      %1054 = vmatprep.subr.mxu0 0.0
      %1055 = vmatpush2.xpose.msra.mxu0 0.0
      %1056 = vmatprep.subr.mxu0 0.0
      %1057 = vmatpush2.xpose.msra.mxu0 0.0
      %1058 = vmatprep.subr.mxu0 0.0
      %1059 = vmatpush2.xpose.msra.mxu0 0.0
      %1060 = vmatprep.subr.mxu0 0.0
      %1061 = vmatpush2.xpose.msra.mxu0 0.0
      %1062 = vmatprep.subr.mxu0 0.0
      %1063 = vmatpush2.xpose.msra.mxu0 0.0
      %1064 = vmatprep.subr.mxu0 0.0
      %1065 = vmatpush2.xpose.msra.mxu0 0.0
      %1066 = vmatprep.subr.mxu0 0.0
      %1067 = vmatpush2.xpose.msra.mxu0 0.0
      %1068 = vmatprep.subr.mxu0 0.0
      %1069 = vmatpush2.xpose.msra.mxu0 0.0
      %1070 = vmatprep.mubr.f32.mxu0 0.0
      %1071 = vmatmul.mubr.f32.gmra.mxu0 %v1002
      %v1072 = vpop.f32.mrf.mxu0
      %v1073 = vadd.f32 %v729, %v1072
      %v1074 = vpop.f32.mrf.mxu0
      %1075 = vdwg.mxu0
      %v1076 = vsel %vm836, %v1073, -inf
      %1077 = vmax.xlane.f32.xlu0 %v1076
      %v1078 = vpop.xlane.xlu0 %1077
      %v1079 = vsub.f32 %v1073, %v1078
      %v1080 = vmul.f32 %v1079, 1.442695
      %v1081 = vpow.pop %v1080
      %v1082 = vsel %vm836, %v1081, 0.0
      %1083 = vadd.xlane.f32.xlu0 %v1082
      %v1084 = vpop.xlane.xlu0 %1083
      %v1085 = vrcp.pop %v1084
      %v1086 = vmul.f32 %v1081, %v1085
      %1087 = vrot.lane.b32.xlu0 %v830, 56
      %v1088 = vpop.permute.xlu0 %1087
      %v1091 = vsel %vm836, %v1086, 0
      %1093 = vmatprep.subr.mxu0 0.0
      %1094 = vmatpush1.msra.mxu0 0.0
      %1095 = vmatprep.subr.mxu0 0.0
      %1096 = vmatpush1.msra.mxu0 0.0
      %1097 = vmatprep.subr.mxu0 0.0
      %1098 = vmatpush1.msra.mxu0 0.0
      %1099 = vmatprep.subr.mxu0 0.0
      %1100 = vmatpush1.msra.mxu0 0.0
      %1101 = vmatprep.subr.mxu0 0.0
      %1102 = vmatpush1.msra.mxu0 0.0
      %1103 = vmatprep.subr.mxu0 0.0
      %1104 = vmatpush1.msra.mxu0 0.0
      %1105 = vmatprep.subr.mxu0 0.0
      %1106 = vmatpush1.msra.mxu0 0.0
      %1107 = vmatprep.subr.mxu0 0.0
      %1108 = vmatpush1.msra.mxu0 0.0
      %1109 = vmatprep.subr.mxu0 0.0
      %1110 = vmatpush1.msra.mxu0 0.0
      %1111 = vmatprep.subr.mxu0 0.0
      %1112 = vmatpush1.msra.mxu0 0.0
      %1113 = vmatprep.subr.mxu0 0.0
      %1114 = vmatpush1.msra.mxu0 0.0
      %1115 = vmatprep.subr.mxu0 0.0
      %1116 = vmatpush1.msra.mxu0 0.0
      %1117 = vmatprep.subr.mxu0 0.0
      %1118 = vmatpush1.msra.mxu0 0.0
      %1119 = vmatprep.subr.mxu0 0.0
      %1120 = vmatpush1.msra.mxu0 0.0
      %1121 = vmatprep.subr.mxu0 0.0
      %1122 = vmatpush1.msra.mxu0 0.0
      %1123 = vmatprep.subr.mxu0 0.0
      %1124 = vmatpush1.msra.mxu0 %v1088
      %1125 = vmatprep.subr.mxu0 0.0
      %1126 = vmatpush2.msra.mxu0 0.0
      %1127 = vmatprep.subr.mxu0 0.0
      %1128 = vmatpush2.msra.mxu0 0.0
      %1129 = vmatprep.subr.mxu0 0.0
      %1130 = vmatpush2.msra.mxu0 0.0
      %1131 = vmatprep.subr.mxu0 0.0
      %1132 = vmatpush2.msra.mxu0 0.0
      %1133 = vmatprep.subr.mxu0 0.0
      %1134 = vmatpush2.msra.mxu0 0.0
      %1135 = vmatprep.subr.mxu0 0.0
      %1136 = vmatpush2.msra.mxu0 0.0
      %1137 = vmatprep.subr.mxu0 0.0
      %1138 = vmatpush2.msra.mxu0 0.0
      %1139 = vmatprep.subr.mxu0 0.0
      %1140 = vmatpush2.msra.mxu0 0.0
      %1141 = vmatprep.subr.mxu0 0.0
      %1142 = vmatpush2.msra.mxu0 0.0
      %1143 = vmatprep.subr.mxu0 0.0
      %1144 = vmatpush2.msra.mxu0 0.0
      %1145 = vmatprep.subr.mxu0 0.0
      %1146 = vmatpush2.msra.mxu0 0.0
      %1147 = vmatprep.subr.mxu0 0.0
      %1148 = vmatpush2.msra.mxu0 0.0
      %1149 = vmatprep.subr.mxu0 0.0
      %1150 = vmatpush2.msra.mxu0 0.0
      %1151 = vmatprep.subr.mxu0 0.0
      %1152 = vmatpush2.msra.mxu0 0.0
      %1153 = vmatprep.subr.mxu0 0.0
      %1154 = vmatpush2.msra.mxu0 0.0
      %1155 = vmatprep.subr.mxu0 0.0
      %1156 = vmatpush2.msra.mxu0 0.0
      %1157 = vmatprep.mubr.f32.mxu0 0.0
      %1158 = vmatmul.mubr.f32.gmra.mxu0 %v1091
      %v1159 = vpop.f32.mrf.mxu0
      %v1160 = vadd.f32 0.0, %v1159
      %v1161 = vpop.f32.mrf.mxu0
      %1162 = vdwg.mxu0
      %1163 = vrot.lane.b32.xlu0 %v830, 112
      %v1164 = vpop.permute.xlu0 %1163
      %1165 = vrot.lane.b32.xlu0 %v830, 80
      %v1166 = vpop.permute.xlu0 %1165
      %v1167 = vsel %vm836, %v1164, 0
      %v1169 = vsel %vm836, %v1166, 0
      %1171 = vmatprep.subr.mxu0 0.0
      %1172 = vmatpush1.xpose.msra.mxu0 0.0
      %1173 = vmatprep.subr.mxu0 0.0
      %1174 = vmatpush1.xpose.msra.mxu0 0.0
      %1175 = vmatprep.subr.mxu0 0.0
      %1176 = vmatpush1.xpose.msra.mxu0 0.0
      %1177 = vmatprep.subr.mxu0 0.0
      %1178 = vmatpush1.xpose.msra.mxu0 0.0
      %1179 = vmatprep.subr.mxu0 0.0
      %1180 = vmatpush1.xpose.msra.mxu0 0.0
      %1181 = vmatprep.subr.mxu0 0.0
      %1182 = vmatpush1.xpose.msra.mxu0 0.0
      %1183 = vmatprep.subr.mxu0 0.0
      %1184 = vmatpush1.xpose.msra.mxu0 0.0
      %1185 = vmatprep.subr.mxu0 0.0
      %1186 = vmatpush1.xpose.msra.mxu0 0.0
      %1187 = vmatprep.subr.mxu0 0.0
      %1188 = vmatpush1.xpose.msra.mxu0 0.0
      %1189 = vmatprep.subr.mxu0 0.0
      %1190 = vmatpush1.xpose.msra.mxu0 0.0
      %1191 = vmatprep.subr.mxu0 0.0
      %1192 = vmatpush1.xpose.msra.mxu0 0.0
      %1193 = vmatprep.subr.mxu0 0.0
      %1194 = vmatpush1.xpose.msra.mxu0 0.0
      %1195 = vmatprep.subr.mxu0 0.0
      %1196 = vmatpush1.xpose.msra.mxu0 0.0
      %1197 = vmatprep.subr.mxu0 0.0
      %1198 = vmatpush1.xpose.msra.mxu0 0.0
      %1199 = vmatprep.subr.mxu0 0.0
      %1200 = vmatpush1.xpose.msra.mxu0 0.0
      %1201 = vmatprep.subr.mxu0 0.0
      %1202 = vmatpush1.xpose.msra.mxu0 %v1169
      %1203 = vmatprep.subr.mxu0 0.0
      %1204 = vmatpush2.xpose.msra.mxu0 0.0
      %1205 = vmatprep.subr.mxu0 0.0
      %1206 = vmatpush2.xpose.msra.mxu0 0.0
      %1207 = vmatprep.subr.mxu0 0.0
      %1208 = vmatpush2.xpose.msra.mxu0 0.0
      %1209 = vmatprep.subr.mxu0 0.0
      %1210 = vmatpush2.xpose.msra.mxu0 0.0
      %1211 = vmatprep.subr.mxu0 0.0
      %1212 = vmatpush2.xpose.msra.mxu0 0.0
      %1213 = vmatprep.subr.mxu0 0.0
      %1214 = vmatpush2.xpose.msra.mxu0 0.0
      %1215 = vmatprep.subr.mxu0 0.0
      %1216 = vmatpush2.xpose.msra.mxu0 0.0
      %1217 = vmatprep.subr.mxu0 0.0
      %1218 = vmatpush2.xpose.msra.mxu0 0.0
      %1219 = vmatprep.subr.mxu0 0.0
      %1220 = vmatpush2.xpose.msra.mxu0 0.0
      %1221 = vmatprep.subr.mxu0 0.0
      %1222 = vmatpush2.xpose.msra.mxu0 0.0
      %1223 = vmatprep.subr.mxu0 0.0
      %1224 = vmatpush2.xpose.msra.mxu0 0.0
      %1225 = vmatprep.subr.mxu0 0.0
      %1226 = vmatpush2.xpose.msra.mxu0 0.0
      %1227 = vmatprep.subr.mxu0 0.0
      %1228 = vmatpush2.xpose.msra.mxu0 0.0
      %1229 = vmatprep.subr.mxu0 0.0
      %1230 = vmatpush2.xpose.msra.mxu0 0.0
      %1231 = vmatprep.subr.mxu0 0.0
      %1232 = vmatpush2.xpose.msra.mxu0 0.0
      %1233 = vmatprep.subr.mxu0 0.0
      %1234 = vmatpush2.xpose.msra.mxu0 0.0
      %1235 = vmatprep.mubr.f32.mxu0 0.0
      %1236 = vmatmul.mubr.f32.gmra.mxu0 %v1167
      %v1237 = vpop.f32.mrf.mxu0
      %v1238 = vadd.f32 %v729, %v1237
      %v1239 = vpop.f32.mrf.mxu0
      %1240 = vdwg.mxu0
      %v1241 = vsel %vm836, %v1238, -inf
      %1242 = vmax.xlane.f32.xlu0 %v1241
      %v1243 = vpop.xlane.xlu0 %1242
      %v1244 = vsub.f32 %v1238, %v1243
      %v1245 = vmul.f32 %v1244, 1.442695
      %v1246 = vpow.pop %v1245
      %v1247 = vsel %vm836, %v1246, 0.0
      %1248 = vadd.xlane.f32.xlu0 %v1247
      %v1249 = vpop.xlane.xlu0 %1248
      %v1250 = vrcp.pop %v1249
      %v1251 = vmul.f32 %v1246, %v1250
      %1252 = vrot.lane.b32.xlu0 %v830, 48
      %v1253 = vpop.permute.xlu0 %1252
      %v1256 = vsel %vm836, %v1251, 0
      %1258 = vmatprep.subr.mxu0 0.0
      %1259 = vmatpush1.msra.mxu0 0.0
      %1260 = vmatprep.subr.mxu0 0.0
      %1261 = vmatpush1.msra.mxu0 0.0
      %1262 = vmatprep.subr.mxu0 0.0
      %1263 = vmatpush1.msra.mxu0 0.0
      %1264 = vmatprep.subr.mxu0 0.0
      %1265 = vmatpush1.msra.mxu0 0.0
      %1266 = vmatprep.subr.mxu0 0.0
      %1267 = vmatpush1.msra.mxu0 0.0
      %1268 = vmatprep.subr.mxu0 0.0
      %1269 = vmatpush1.msra.mxu0 0.0
      %1270 = vmatprep.subr.mxu0 0.0
      %1271 = vmatpush1.msra.mxu0 0.0
      %1272 = vmatprep.subr.mxu0 0.0
      %1273 = vmatpush1.msra.mxu0 0.0
      %1274 = vmatprep.subr.mxu0 0.0
      %1275 = vmatpush1.msra.mxu0 0.0
      %1276 = vmatprep.subr.mxu0 0.0
      %1277 = vmatpush1.msra.mxu0 0.0
      %1278 = vmatprep.subr.mxu0 0.0
      %1279 = vmatpush1.msra.mxu0 0.0
      %1280 = vmatprep.subr.mxu0 0.0
      %1281 = vmatpush1.msra.mxu0 0.0
      %1282 = vmatprep.subr.mxu0 0.0
      %1283 = vmatpush1.msra.mxu0 0.0
      %1284 = vmatprep.subr.mxu0 0.0
      %1285 = vmatpush1.msra.mxu0 0.0
      %1286 = vmatprep.subr.mxu0 0.0
      %1287 = vmatpush1.msra.mxu0 0.0
      %1288 = vmatprep.subr.mxu0 0.0
      %1289 = vmatpush1.msra.mxu0 %v1253
      %1290 = vmatprep.subr.mxu0 0.0
      %1291 = vmatpush2.msra.mxu0 0.0
      %1292 = vmatprep.subr.mxu0 0.0
      %1293 = vmatpush2.msra.mxu0 0.0
      %1294 = vmatprep.subr.mxu0 0.0
      %1295 = vmatpush2.msra.mxu0 0.0
      %1296 = vmatprep.subr.mxu0 0.0
      %1297 = vmatpush2.msra.mxu0 0.0
      %1298 = vmatprep.subr.mxu0 0.0
      %1299 = vmatpush2.msra.mxu0 0.0
      %1300 = vmatprep.subr.mxu0 0.0
      %1301 = vmatpush2.msra.mxu0 0.0
      %1302 = vmatprep.subr.mxu0 0.0
      %1303 = vmatpush2.msra.mxu0 0.0
      %1304 = vmatprep.subr.mxu0 0.0
      %1305 = vmatpush2.msra.mxu0 0.0
      %1306 = vmatprep.subr.mxu0 0.0
      %1307 = vmatpush2.msra.mxu0 0.0
      %1308 = vmatprep.subr.mxu0 0.0
      %1309 = vmatpush2.msra.mxu0 0.0
      %1310 = vmatprep.subr.mxu0 0.0
      %1311 = vmatpush2.msra.mxu0 0.0
      %1312 = vmatprep.subr.mxu0 0.0
      %1313 = vmatpush2.msra.mxu0 0.0
      %1314 = vmatprep.subr.mxu0 0.0
      %1315 = vmatpush2.msra.mxu0 0.0
      %1316 = vmatprep.subr.mxu0 0.0
      %1317 = vmatpush2.msra.mxu0 0.0
      %1318 = vmatprep.subr.mxu0 0.0
      %1319 = vmatpush2.msra.mxu0 0.0
      %1320 = vmatprep.subr.mxu0 0.0
      %1321 = vmatpush2.msra.mxu0 0.0
      %1322 = vmatprep.mubr.f32.mxu0 0.0
      %1323 = vmatmul.mubr.f32.gmra.mxu0 %v1256
      %v1324 = vpop.f32.mrf.mxu0
      %v1325 = vadd.f32 0.0, %v1324
      %v1326 = vpop.f32.mrf.mxu0
      %1327 = vdwg.mxu0
      %1328 = vrot.lane.b32.xlu0 %v830, 104
      %v1329 = vpop.permute.xlu0 %1328
      %1330 = vrot.lane.b32.xlu0 %v830, 72
      %v1331 = vpop.permute.xlu0 %1330
      %v1332 = vsel %vm836, %v1329, 0
      %v1334 = vsel %vm836, %v1331, 0
      %1336 = vmatprep.subr.mxu0 0.0
      %1337 = vmatpush1.xpose.msra.mxu0 0.0
      %1338 = vmatprep.subr.mxu0 0.0
      %1339 = vmatpush1.xpose.msra.mxu0 0.0
      %1340 = vmatprep.subr.mxu0 0.0
      %1341 = vmatpush1.xpose.msra.mxu0 0.0
      %1342 = vmatprep.subr.mxu0 0.0
      %1343 = vmatpush1.xpose.msra.mxu0 0.0
      %1344 = vmatprep.subr.mxu0 0.0
      %1345 = vmatpush1.xpose.msra.mxu0 0.0
      %1346 = vmatprep.subr.mxu0 0.0
      %1347 = vmatpush1.xpose.msra.mxu0 0.0
      %1348 = vmatprep.subr.mxu0 0.0
      %1349 = vmatpush1.xpose.msra.mxu0 0.0
      %1350 = vmatprep.subr.mxu0 0.0
      %1351 = vmatpush1.xpose.msra.mxu0 0.0
      %1352 = vmatprep.subr.mxu0 0.0
      %1353 = vmatpush1.xpose.msra.mxu0 0.0
      %1354 = vmatprep.subr.mxu0 0.0
      %1355 = vmatpush1.xpose.msra.mxu0 0.0
      %1356 = vmatprep.subr.mxu0 0.0
      %1357 = vmatpush1.xpose.msra.mxu0 0.0
      %1358 = vmatprep.subr.mxu0 0.0
      %1359 = vmatpush1.xpose.msra.mxu0 0.0
      %1360 = vmatprep.subr.mxu0 0.0
      %1361 = vmatpush1.xpose.msra.mxu0 0.0
      %1362 = vmatprep.subr.mxu0 0.0
      %1363 = vmatpush1.xpose.msra.mxu0 0.0
      %1364 = vmatprep.subr.mxu0 0.0
      %1365 = vmatpush1.xpose.msra.mxu0 0.0
      %1366 = vmatprep.subr.mxu0 0.0
      %1367 = vmatpush1.xpose.msra.mxu0 %v1334
      %1368 = vmatprep.subr.mxu0 0.0
      %1369 = vmatpush2.xpose.msra.mxu0 0.0
      %1370 = vmatprep.subr.mxu0 0.0
      %1371 = vmatpush2.xpose.msra.mxu0 0.0
      %1372 = vmatprep.subr.mxu0 0.0
      %1373 = vmatpush2.xpose.msra.mxu0 0.0
      %1374 = vmatprep.subr.mxu0 0.0
      %1375 = vmatpush2.xpose.msra.mxu0 0.0
      %1376 = vmatprep.subr.mxu0 0.0
      %1377 = vmatpush2.xpose.msra.mxu0 0.0
      %1378 = vmatprep.subr.mxu0 0.0
      %1379 = vmatpush2.xpose.msra.mxu0 0.0
      %1380 = vmatprep.subr.mxu0 0.0
      %1381 = vmatpush2.xpose.msra.mxu0 0.0
      %1382 = vmatprep.subr.mxu0 0.0
      %1383 = vmatpush2.xpose.msra.mxu0 0.0
      %1384 = vmatprep.subr.mxu0 0.0
      %1385 = vmatpush2.xpose.msra.mxu0 0.0
      %1386 = vmatprep.subr.mxu0 0.0
      %1387 = vmatpush2.xpose.msra.mxu0 0.0
      %1388 = vmatprep.subr.mxu0 0.0
      %1389 = vmatpush2.xpose.msra.mxu0 0.0
      %1390 = vmatprep.subr.mxu0 0.0
      %1391 = vmatpush2.xpose.msra.mxu0 0.0
      %1392 = vmatprep.subr.mxu0 0.0
      %1393 = vmatpush2.xpose.msra.mxu0 0.0
      %1394 = vmatprep.subr.mxu0 0.0
      %1395 = vmatpush2.xpose.msra.mxu0 0.0
      %1396 = vmatprep.subr.mxu0 0.0
      %1397 = vmatpush2.xpose.msra.mxu0 0.0
      %1398 = vmatprep.subr.mxu0 0.0
      %1399 = vmatpush2.xpose.msra.mxu0 0.0
      %1400 = vmatprep.mubr.f32.mxu0 0.0
      %1401 = vmatmul.mubr.f32.gmra.mxu0 %v1332
      %v1402 = vpop.f32.mrf.mxu0
      %v1403 = vadd.f32 %v729, %v1402
      %v1404 = vpop.f32.mrf.mxu0
      %1405 = vdwg.mxu0
      %v1406 = vsel %vm836, %v1403, -inf
      %1407 = vmax.xlane.f32.xlu0 %v1406
      %v1408 = vpop.xlane.xlu0 %1407
      %v1409 = vsub.f32 %v1403, %v1408
      %v1410 = vmul.f32 %v1409, 1.442695
      %v1411 = vpow.pop %v1410
      %v1412 = vsel %vm836, %v1411, 0.0
      %1413 = vadd.xlane.f32.xlu0 %v1412
      %v1414 = vpop.xlane.xlu0 %1413
      %v1415 = vrcp.pop %v1414
      %v1416 = vmul.f32 %v1411, %v1415
      %1417 = vrot.lane.b32.xlu0 %v830, 40
      %v1418 = vpop.permute.xlu0 %1417
      %v1421 = vsel %vm836, %v1416, 0
      %1423 = vmatprep.subr.mxu0 0.0
      %1424 = vmatpush1.msra.mxu0 0.0
      %1425 = vmatprep.subr.mxu0 0.0
      %1426 = vmatpush1.msra.mxu0 0.0
      %1427 = vmatprep.subr.mxu0 0.0
      %1428 = vmatpush1.msra.mxu0 0.0
      %1429 = vmatprep.subr.mxu0 0.0
      %1430 = vmatpush1.msra.mxu0 0.0
      %1431 = vmatprep.subr.mxu0 0.0
      %1432 = vmatpush1.msra.mxu0 0.0
      %1433 = vmatprep.subr.mxu0 0.0
      %1434 = vmatpush1.msra.mxu0 0.0
      %1435 = vmatprep.subr.mxu0 0.0
      %1436 = vmatpush1.msra.mxu0 0.0
      %1437 = vmatprep.subr.mxu0 0.0
      %1438 = vmatpush1.msra.mxu0 0.0
      %1439 = vmatprep.subr.mxu0 0.0
      %1440 = vmatpush1.msra.mxu0 0.0
      %1441 = vmatprep.subr.mxu0 0.0
      %1442 = vmatpush1.msra.mxu0 0.0
      %1443 = vmatprep.subr.mxu0 0.0
      %1444 = vmatpush1.msra.mxu0 0.0
      %1445 = vmatprep.subr.mxu0 0.0
      %1446 = vmatpush1.msra.mxu0 0.0
      %1447 = vmatprep.subr.mxu0 0.0
      %1448 = vmatpush1.msra.mxu0 0.0
      %1449 = vmatprep.subr.mxu0 0.0
      %1450 = vmatpush1.msra.mxu0 0.0
      %1451 = vmatprep.subr.mxu0 0.0
      %1452 = vmatpush1.msra.mxu0 0.0
      %1453 = vmatprep.subr.mxu0 0.0
      %1454 = vmatpush1.msra.mxu0 %v1418
      %1455 = vmatprep.subr.mxu0 0.0
      %1456 = vmatpush2.msra.mxu0 0.0
      %1457 = vmatprep.subr.mxu0 0.0
      %1458 = vmatpush2.msra.mxu0 0.0
      %1459 = vmatprep.subr.mxu0 0.0
      %1460 = vmatpush2.msra.mxu0 0.0
      %1461 = vmatprep.subr.mxu0 0.0
      %1462 = vmatpush2.msra.mxu0 0.0
      %1463 = vmatprep.subr.mxu0 0.0
      %1464 = vmatpush2.msra.mxu0 0.0
      %1465 = vmatprep.subr.mxu0 0.0
      %1466 = vmatpush2.msra.mxu0 0.0
      %1467 = vmatprep.subr.mxu0 0.0
      %1468 = vmatpush2.msra.mxu0 0.0
      %1469 = vmatprep.subr.mxu0 0.0
      %1470 = vmatpush2.msra.mxu0 0.0
      %1471 = vmatprep.subr.mxu0 0.0
      %1472 = vmatpush2.msra.mxu0 0.0
      %1473 = vmatprep.subr.mxu0 0.0
      %1474 = vmatpush2.msra.mxu0 0.0
      %1475 = vmatprep.subr.mxu0 0.0
      %1476 = vmatpush2.msra.mxu0 0.0
      %1477 = vmatprep.subr.mxu0 0.0
      %1478 = vmatpush2.msra.mxu0 0.0
      %1479 = vmatprep.subr.mxu0 0.0
      %1480 = vmatpush2.msra.mxu0 0.0
      %1481 = vmatprep.subr.mxu0 0.0
      %1482 = vmatpush2.msra.mxu0 0.0
      %1483 = vmatprep.subr.mxu0 0.0
      %1484 = vmatpush2.msra.mxu0 0.0
      %1485 = vmatprep.subr.mxu0 0.0
      %1486 = vmatpush2.msra.mxu0 0.0
      %1487 = vmatprep.mubr.f32.mxu0 0.0
      %1488 = vmatmul.mubr.f32.gmra.mxu0 %v1421
      %v1489 = vpop.f32.mrf.mxu0
      %v1490 = vadd.f32 0.0, %v1489
      %v1491 = vpop.f32.mrf.mxu0
      %1492 = vdwg.mxu0
      %1494 = vrot.lane.b32.xlu0 %v1160, 8
      %v1495 = vpop.permute.xlu0 %1494
      %1498 = vrot.lane.b32.xlu0 %v1325, 16
      %v1499 = vpop.permute.xlu0 %1498
      %1502 = vrot.lane.b32.xlu0 %v1490, 24
      %v1503 = vpop.permute.xlu0 %1502
      %v1505 = vsel %vm836, %v995, %v1495
      %vm1506 = vcmask 130048
      %v1507 = vsel %vm1506, %v1505, %v1499
      %vm1508 = vcmask 195584
      %v1509 = vsel %vm1508, %v1507, %v1503
      %v1510 = vld [vmem:[%s4] sm:$0xff]
      %v1511 = vld [vmem:[%s4 + $0x8] sm:$0xff]
      %v1512 = vld [vmem:[%s4 + $0x10] sm:$0xff]
      %v1513 = vld [vmem:[%s4 + $0x18] sm:$0xff]
      %v1514 = vlaneseq
      %v1515 = vshrl.u32 %v1514, 7
      %v1516 = vsub.s32 6, %v1515
      %v1517 = vrot.slane %v730, %v1516
      %v1519 = vsel %vm731, %v1509, 0
      %1521 = vmatprep.subr.mxu0 0.0
      %1522 = vmatpush1.msra.mxu0 0.0
      %1523 = vmatprep.subr.mxu0 0.0
      %1524 = vmatpush1.msra.mxu0 0.0
      %1525 = vmatprep.subr.mxu0 0.0
      %1526 = vmatpush1.msra.mxu0 0.0
      %1527 = vmatprep.subr.mxu0 0.0
      %1528 = vmatpush1.msra.mxu0 0.0
      %1529 = vmatprep.subr.mxu0 0.0
      %1530 = vmatpush1.msra.mxu0 0.0
      %1531 = vmatprep.subr.mxu0 0.0
      %1532 = vmatpush1.msra.mxu0 0.0
      %1533 = vmatprep.subr.mxu0 0.0
      %1534 = vmatpush1.msra.mxu0 0.0
      %1535 = vmatprep.subr.mxu0 0.0
      %1536 = vmatpush1.msra.mxu0 0.0
      %1537 = vmatprep.subr.mxu0 0.0
      %1538 = vmatpush1.msra.mxu0 0.0
      %1539 = vmatprep.subr.mxu0 0.0
      %1540 = vmatpush1.msra.mxu0 0.0
      %1541 = vmatprep.subr.mxu0 0.0
      %1542 = vmatpush1.msra.mxu0 0.0
      %1543 = vmatprep.subr.mxu0 0.0
      %1544 = vmatpush1.msra.mxu0 0.0
      %1545 = vmatprep.subr.mxu0 0.0
      %1546 = vmatpush1.msra.mxu0 %v1513
      %1547 = vmatprep.subr.mxu0 0.0
      %1548 = vmatpush1.msra.mxu0 %v1512
      %1549 = vmatprep.subr.mxu0 0.0
      %1550 = vmatpush1.msra.mxu0 %v1511
      %1551 = vmatprep.subr.mxu0 0.0
      %1552 = vmatpush1.msra.mxu0 %v1510
      %1553 = vmatprep.subr.mxu0 0.0
      %1554 = vmatpush2.msra.mxu0 0.0
      %1555 = vmatprep.subr.mxu0 0.0
      %1556 = vmatpush2.msra.mxu0 0.0
      %1557 = vmatprep.subr.mxu0 0.0
      %1558 = vmatpush2.msra.mxu0 0.0
      %1559 = vmatprep.subr.mxu0 0.0
      %1560 = vmatpush2.msra.mxu0 0.0
      %1561 = vmatprep.subr.mxu0 0.0
      %1562 = vmatpush2.msra.mxu0 0.0
      %1563 = vmatprep.subr.mxu0 0.0
      %1564 = vmatpush2.msra.mxu0 0.0
      %1565 = vmatprep.subr.mxu0 0.0
      %1566 = vmatpush2.msra.mxu0 0.0
      %1567 = vmatprep.subr.mxu0 0.0
      %1568 = vmatpush2.msra.mxu0 0.0
      %1569 = vmatprep.subr.mxu0 0.0
      %1570 = vmatpush2.msra.mxu0 0.0
      %1571 = vmatprep.subr.mxu0 0.0
      %1572 = vmatpush2.msra.mxu0 0.0
      %1573 = vmatprep.subr.mxu0 0.0
      %1574 = vmatpush2.msra.mxu0 0.0
      %1575 = vmatprep.subr.mxu0 0.0
      %1576 = vmatpush2.msra.mxu0 0.0
      %1577 = vmatprep.subr.mxu0 0.0
      %1578 = vmatpush2.msra.mxu0 0.0
      %1579 = vmatprep.subr.mxu0 0.0
      %1580 = vmatpush2.msra.mxu0 0.0
      %1581 = vmatprep.subr.mxu0 0.0
      %1582 = vmatpush2.msra.mxu0 0.0
      %1583 = vmatprep.subr.mxu0 0.0
      %1584 = vmatpush2.msra.mxu0 0.0
      %1585 = vmatprep.mubr.f32.mxu0 0.0
      %1586 = vmatmul.mubr.f32.gmra.mxu0 %v1519
      %v1587 = vpop.f32.mrf.mxu0
      %v1588 = vadd.f32 %v1517, %v1587
      %v1589 = vpop.f32.mrf.mxu0
      %1590 = vdwg.mxu0
      %v1591 = vlaneseq
      %v1592 = vshrl.u32 %v1591, 7
      %v1593 = vsub.s32 2, %v1592
      %v1594 = vrot.slane %v730, %v1593
      %v1595 = vmul.f32 %v1588, %v1594
      %v1596 = vadd.f32 %v725, %v1595
      %v1597 = vsel %vm731, %v1596, 0.0
      %1598 = vadd.xlane.f32.xlu0 %v1597
      %v1599 = vpop.xlane.xlu0 %1598
      %v1600 = vmul.f32 %v1599, %v735
      %v1601 = vsub.f32 %v1596, %v1600
      %v1602 = vmul.f32 %v1601, %v1601
      %v1603 = vsel %vm731, %v1602, 0.0
      %1604 = vadd.xlane.f32.xlu0 %v1603
      %v1605 = vpop.xlane.xlu0 %1604
      %v1606 = vmul.f32 %v1605, %v735
      %v1607 = vadd.f32 %v1606, 1e-05
      %v1608 = vrsqrt.pop %v1607
      %v1609 = vmul.f32 %v1601, %v1608
      %v1610 = vlaneseq
      %v1611 = vshrl.u32 %v1610, 7
      %v1612 = vsub.s32 3, %v1611
      %v1613 = vrot.slane %v730, %v1612
      %v1614 = vmul.f32 %v1609, %v1613
      %v1615 = vlaneseq
      %v1616 = vshrl.u32 %v1615, 7
      %v1617 = vsub.s32 4, %v1616
      %v1618 = vrot.slane %v730, %v1617
      %v1619 = vadd.f32 %v1614, %v1618
      %v1620 = vld [vmem:[%s5] sm:$0xff]
      %v1621 = vld [vmem:[%s5 + $0x8] sm:$0xff]
      %v1622 = vld [vmem:[%s5 + $0x10] sm:$0xff]
      %v1623 = vld [vmem:[%s5 + $0x18] sm:$0xff]
      %v1624 = vld [vmem:[%s6] sm:$0x1]
      %v1626 = vlaneseq
      %v1627 = vshrl.u32 %v1626, 7
      %v1628 = vsub.s32 0, %v1627
      %v1629 = vrot.slane %v1624, %v1628
      %v1632 = vsel %vm731, %v1619, 0
      %1634 = vmatprep.subr.mxu0 0.0
      %1635 = vmatpush1.msra.mxu0 0.0
      %1636 = vmatprep.subr.mxu0 0.0
      %1637 = vmatpush1.msra.mxu0 0.0
      %1638 = vmatprep.subr.mxu0 0.0
      %1639 = vmatpush1.msra.mxu0 0.0
      %1640 = vmatprep.subr.mxu0 0.0
      %1641 = vmatpush1.msra.mxu0 0.0
      %1642 = vmatprep.subr.mxu0 0.0
      %1643 = vmatpush1.msra.mxu0 0.0
      %1644 = vmatprep.subr.mxu0 0.0
      %1645 = vmatpush1.msra.mxu0 0.0
      %1646 = vmatprep.subr.mxu0 0.0
      %1647 = vmatpush1.msra.mxu0 0.0
      %1648 = vmatprep.subr.mxu0 0.0
      %1649 = vmatpush1.msra.mxu0 0.0
      %1650 = vmatprep.subr.mxu0 0.0
      %1651 = vmatpush1.msra.mxu0 0.0
      %1652 = vmatprep.subr.mxu0 0.0
      %1653 = vmatpush1.msra.mxu0 0.0
      %1654 = vmatprep.subr.mxu0 0.0
      %1655 = vmatpush1.msra.mxu0 0.0
      %1656 = vmatprep.subr.mxu0 0.0
      %1657 = vmatpush1.msra.mxu0 0.0
      %1658 = vmatprep.subr.mxu0 0.0
      %1659 = vmatpush1.msra.mxu0 %v1623
      %1660 = vmatprep.subr.mxu0 0.0
      %1661 = vmatpush1.msra.mxu0 %v1622
      %1662 = vmatprep.subr.mxu0 0.0
      %1663 = vmatpush1.msra.mxu0 %v1621
      %1664 = vmatprep.subr.mxu0 0.0
      %1665 = vmatpush1.msra.mxu0 %v1620
      %1666 = vmatprep.subr.mxu0 0.0
      %1667 = vmatpush2.msra.mxu0 0.0
      %1668 = vmatprep.subr.mxu0 0.0
      %1669 = vmatpush2.msra.mxu0 0.0
      %1670 = vmatprep.subr.mxu0 0.0
      %1671 = vmatpush2.msra.mxu0 0.0
      %1672 = vmatprep.subr.mxu0 0.0
      %1673 = vmatpush2.msra.mxu0 0.0
      %1674 = vmatprep.subr.mxu0 0.0
      %1675 = vmatpush2.msra.mxu0 0.0
      %1676 = vmatprep.subr.mxu0 0.0
      %1677 = vmatpush2.msra.mxu0 0.0
      %1678 = vmatprep.subr.mxu0 0.0
      %1679 = vmatpush2.msra.mxu0 0.0
      %1680 = vmatprep.subr.mxu0 0.0
      %1681 = vmatpush2.msra.mxu0 0.0
      %1682 = vmatprep.subr.mxu0 0.0
      %1683 = vmatpush2.msra.mxu0 0.0
      %1684 = vmatprep.subr.mxu0 0.0
      %1685 = vmatpush2.msra.mxu0 0.0
      %1686 = vmatprep.subr.mxu0 0.0
      %1687 = vmatpush2.msra.mxu0 0.0
      %1688 = vmatprep.subr.mxu0 0.0
      %1689 = vmatpush2.msra.mxu0 0.0
      %1690 = vmatprep.subr.mxu0 0.0
      %1691 = vmatpush2.msra.mxu0 0.0
      %1692 = vmatprep.subr.mxu0 0.0
      %1693 = vmatpush2.msra.mxu0 0.0
      %1694 = vmatprep.subr.mxu0 0.0
      %1695 = vmatpush2.msra.mxu0 0.0
      %1696 = vmatprep.subr.mxu0 0.0
      %1697 = vmatpush2.msra.mxu0 0.0
      %1698 = vmatprep.mubr.f32.mxu0 0.0
      %1699 = vmatmul.mubr.f32.gmra.mxu0 %v1632
      %v1700 = vpop.f32.mrf.mxu0
      %v1701 = vadd.f32 %v1629, %v1700
      %v1702 = vpop.f32.mrf.mxu0
      %1703 = vdwg.mxu0
      %v1704 = vmul.f32 %v1701, 0.5
      %v1705 = vmul.f32 %v1701, 0.70710677
      %v1706 = verf.f32.pop %v1705
      %v1707 = vadd.f32 %v1706, 1.0
      %v1708 = vmul.f32 %v1704, %v1707
      %v1709 = vld [vmem:[%s7] sm:$0xff]
      %v1710 = vld [vmem:[%s7 + $0x8] sm:$0xff]
      %v1711 = vld [vmem:[%s7 + $0x10] sm:$0xff]
      %v1712 = vld [vmem:[%s7 + $0x18] sm:$0xff]
      %v1713 = vld [vmem:[%s7 + $0x20] sm:$0xff]
      %v1714 = vld [vmem:[%s7 + $0x28] sm:$0xff]
      %v1715 = vld [vmem:[%s7 + $0x30] sm:$0xff]
      %v1716 = vld [vmem:[%s7 + $0x38] sm:$0xff]
      %v1717 = vlaneseq
      %v1718 = vshrl.u32 %v1717, 7
      %v1719 = vsub.s32 7, %v1718
      %v1720 = vrot.slane %v730, %v1719
      %vm1721 = vcmask 523264
      %v1723 = vsel %vm1721, %v1708, 0
      %1725 = vmatprep.subr.mxu0 0.0
      %1726 = vmatpush1.msra.mxu0 0.0
      %1727 = vmatprep.subr.mxu0 0.0
      %1728 = vmatpush1.msra.mxu0 0.0
      %1729 = vmatprep.subr.mxu0 0.0
      %1730 = vmatpush1.msra.mxu0 0.0
      %1731 = vmatprep.subr.mxu0 0.0
      %1732 = vmatpush1.msra.mxu0 0.0
      %1733 = vmatprep.subr.mxu0 0.0
      %1734 = vmatpush1.msra.mxu0 0.0
      %1735 = vmatprep.subr.mxu0 0.0
      %1736 = vmatpush1.msra.mxu0 0.0
      %1737 = vmatprep.subr.mxu0 0.0
      %1738 = vmatpush1.msra.mxu0 0.0
      %1739 = vmatprep.subr.mxu0 0.0
      %1740 = vmatpush1.msra.mxu0 0.0
      %1741 = vmatprep.subr.mxu0 0.0
      %1742 = vmatpush1.msra.mxu0 %v1716
      %1743 = vmatprep.subr.mxu0 0.0
      %1744 = vmatpush1.msra.mxu0 %v1715
      %1745 = vmatprep.subr.mxu0 0.0
      %1746 = vmatpush1.msra.mxu0 %v1714
      %1747 = vmatprep.subr.mxu0 0.0
      %1748 = vmatpush1.msra.mxu0 %v1713
      %1749 = vmatprep.subr.mxu0 0.0
      %1750 = vmatpush1.msra.mxu0 %v1712
      %1751 = vmatprep.subr.mxu0 0.0
      %1752 = vmatpush1.msra.mxu0 %v1711
      %1753 = vmatprep.subr.mxu0 0.0
      %1754 = vmatpush1.msra.mxu0 %v1710
      %1755 = vmatprep.subr.mxu0 0.0
      %1756 = vmatpush1.msra.mxu0 %v1709
      %1757 = vmatprep.subr.mxu0 0.0
      %1758 = vmatpush2.msra.mxu0 0.0
      %1759 = vmatprep.subr.mxu0 0.0
      %1760 = vmatpush2.msra.mxu0 0.0
      %1761 = vmatprep.subr.mxu0 0.0
      %1762 = vmatpush2.msra.mxu0 0.0
      %1763 = vmatprep.subr.mxu0 0.0
      %1764 = vmatpush2.msra.mxu0 0.0
      %1765 = vmatprep.subr.mxu0 0.0
      %1766 = vmatpush2.msra.mxu0 0.0
      %1767 = vmatprep.subr.mxu0 0.0
      %1768 = vmatpush2.msra.mxu0 0.0
      %1769 = vmatprep.subr.mxu0 0.0
      %1770 = vmatpush2.msra.mxu0 0.0
      %1771 = vmatprep.subr.mxu0 0.0
      %1772 = vmatpush2.msra.mxu0 0.0
      %1773 = vmatprep.subr.mxu0 0.0
      %1774 = vmatpush2.msra.mxu0 0.0
      %1775 = vmatprep.subr.mxu0 0.0
      %1776 = vmatpush2.msra.mxu0 0.0
      %1777 = vmatprep.subr.mxu0 0.0
      %1778 = vmatpush2.msra.mxu0 0.0
      %1779 = vmatprep.subr.mxu0 0.0
      %1780 = vmatpush2.msra.mxu0 0.0
      %1781 = vmatprep.subr.mxu0 0.0
      %1782 = vmatpush2.msra.mxu0 0.0
      %1783 = vmatprep.subr.mxu0 0.0
      %1784 = vmatpush2.msra.mxu0 0.0
      %1785 = vmatprep.subr.mxu0 0.0
      %1786 = vmatpush2.msra.mxu0 0.0
      %1787 = vmatprep.subr.mxu0 0.0
      %1788 = vmatpush2.msra.mxu0 0.0
      %1789 = vmatprep.mubr.f32.mxu0 0.0
      %1790 = vmatmul.mubr.f32.gmra.mxu0 %v1723
      %v1791 = vpop.f32.mrf.mxu0
      %v1792 = vadd.f32 %v1720, %v1791
      %v1793 = vpop.f32.mrf.mxu0
      %1794 = vdwg.mxu0
      %v1795 = vlaneseq
      %v1796 = vshrl.u32 %v1795, 7
      %v1797 = vsub.s32 5, %v1796
      %v1798 = vrot.slane %v730, %v1797
      %v1799 = vmul.f32 %v1792, %v1798
      %v1800 = vadd.f32 %v1596, %v1799
      %s1801 = scalar_lea.vmem %s8, 8
      %v1802 = vld [vmem:[%s1801] sm:$0xff]
      %v1803 = vsel %vm731, %v1800, 0.0
      %1804 = vadd.xlane.f32.xlu0 %v1803
      %v1805 = vpop.xlane.xlu0 %1804
      %v1806 = vmul.f32 %v1805, %v735
      %v1807 = vsub.f32 %v1800, %v1806
      %v1808 = vmul.f32 %v1807, %v1807
      %v1809 = vsel %vm731, %v1808, 0.0
      %1810 = vadd.xlane.f32.xlu0 %v1809
      %v1811 = vpop.xlane.xlu0 %1810
      %v1812 = vmul.f32 %v1811, %v735
      %v1813 = vadd.f32 %v1812, 1e-05
      %v1814 = vrsqrt.pop %v1813
      %v1815 = vmul.f32 %v1807, %v1814
      %v1816 = vlaneseq
      %v1817 = vshrl.u32 %v1816, 7
      %v1818 = vsub.s32 0, %v1817
      %v1819 = vrot.slane %v1802, %v1818
      %v1820 = vmul.f32 %v1815, %v1819
      %v1821 = vlaneseq
      %v1822 = vshrl.u32 %v1821, 7
      %v1823 = vsub.s32 1, %v1822
      %v1824 = vrot.slane %v1802, %v1823
      %v1825 = vadd.f32 %v1820, %v1824
      %s1826 = scalar_lea.vmem %s3, 32
      %v1827 = vld [vmem:[%s1826] sm:$0xff]
      %v1828 = vld [vmem:[%s1826 + $0x8] sm:$0xff]
      %v1829 = vld [vmem:[%s1826 + $0x10] sm:$0xff]
      %v1830 = vld [vmem:[%s1826 + $0x18] sm:$0xff]
      %v1832 = vsel %vm731, %v1825, 0
      %1834 = vmatprep.subr.mxu0 0.0
      %1835 = vmatpush1.msra.mxu0 0.0
      %1836 = vmatprep.subr.mxu0 0.0
      %1837 = vmatpush1.msra.mxu0 0.0
      %1838 = vmatprep.subr.mxu0 0.0
      %1839 = vmatpush1.msra.mxu0 0.0
      %1840 = vmatprep.subr.mxu0 0.0
      %1841 = vmatpush1.msra.mxu0 0.0
      %1842 = vmatprep.subr.mxu0 0.0
      %1843 = vmatpush1.msra.mxu0 0.0
      %1844 = vmatprep.subr.mxu0 0.0
      %1845 = vmatpush1.msra.mxu0 0.0
      %1846 = vmatprep.subr.mxu0 0.0
      %1847 = vmatpush1.msra.mxu0 0.0
      %1848 = vmatprep.subr.mxu0 0.0
      %1849 = vmatpush1.msra.mxu0 0.0
      %1850 = vmatprep.subr.mxu0 0.0
      %1851 = vmatpush1.msra.mxu0 0.0
      %1852 = vmatprep.subr.mxu0 0.0
      %1853 = vmatpush1.msra.mxu0 0.0
      %1854 = vmatprep.subr.mxu0 0.0
      %1855 = vmatpush1.msra.mxu0 0.0
      %1856 = vmatprep.subr.mxu0 0.0
      %1857 = vmatpush1.msra.mxu0 0.0
      %1858 = vmatprep.subr.mxu0 0.0
      %1859 = vmatpush1.msra.mxu0 %v1830
      %1860 = vmatprep.subr.mxu0 0.0
      %1861 = vmatpush1.msra.mxu0 %v1829
      %1862 = vmatprep.subr.mxu0 0.0
      %1863 = vmatpush1.msra.mxu0 %v1828
      %1864 = vmatprep.subr.mxu0 0.0
      %1865 = vmatpush1.msra.mxu0 %v1827
      %1866 = vmatprep.subr.mxu0 0.0
      %1867 = vmatpush2.msra.mxu0 0.0
      %1868 = vmatprep.subr.mxu0 0.0
      %1869 = vmatpush2.msra.mxu0 0.0
      %1870 = vmatprep.subr.mxu0 0.0
      %1871 = vmatpush2.msra.mxu0 0.0
      %1872 = vmatprep.subr.mxu0 0.0
      %1873 = vmatpush2.msra.mxu0 0.0
      %1874 = vmatprep.subr.mxu0 0.0
      %1875 = vmatpush2.msra.mxu0 0.0
      %1876 = vmatprep.subr.mxu0 0.0
      %1877 = vmatpush2.msra.mxu0 0.0
      %1878 = vmatprep.subr.mxu0 0.0
      %1879 = vmatpush2.msra.mxu0 0.0
      %1880 = vmatprep.subr.mxu0 0.0
      %1881 = vmatpush2.msra.mxu0 0.0
      %1882 = vmatprep.subr.mxu0 0.0
      %1883 = vmatpush2.msra.mxu0 0.0
      %1884 = vmatprep.subr.mxu0 0.0
      %1885 = vmatpush2.msra.mxu0 0.0
      %1886 = vmatprep.subr.mxu0 0.0
      %1887 = vmatpush2.msra.mxu0 0.0
      %1888 = vmatprep.subr.mxu0 0.0
      %1889 = vmatpush2.msra.mxu0 0.0
      %1890 = vmatprep.subr.mxu0 0.0
      %1891 = vmatpush2.msra.mxu0 0.0
      %1892 = vmatprep.subr.mxu0 0.0
      %1893 = vmatpush2.msra.mxu0 0.0
      %1894 = vmatprep.subr.mxu0 0.0
      %1895 = vmatpush2.msra.mxu0 0.0
      %1896 = vmatprep.subr.mxu0 0.0
      %1897 = vmatpush2.msra.mxu0 0.0
      %1898 = vmatprep.mubr.f32.mxu0 0.0
      %1899 = vmatmul.mubr.f32.gmra.mxu0 %v1832
      %v1900 = vpop.f32.mrf.mxu0
      %v1901 = vadd.f32 0.0, %v1900
      %v1902 = vpop.f32.mrf.mxu0
      %1903 = vdwg.mxu0
      %1905 = vrot.lane.b32.xlu0 %v1901, 96
      %v1906 = vpop.permute.xlu0 %1905
      %v1907 = vsel %vm836, %v1901, 0
      %v1909 = vsel %vm836, %v1906, 0
      %1911 = vmatprep.subr.mxu0 0.0
      %1912 = vmatpush1.xpose.msra.mxu0 0.0
      %1913 = vmatprep.subr.mxu0 0.0
      %1914 = vmatpush1.xpose.msra.mxu0 0.0
      %1915 = vmatprep.subr.mxu0 0.0
      %1916 = vmatpush1.xpose.msra.mxu0 0.0
      %1917 = vmatprep.subr.mxu0 0.0
      %1918 = vmatpush1.xpose.msra.mxu0 0.0
      %1919 = vmatprep.subr.mxu0 0.0
      %1920 = vmatpush1.xpose.msra.mxu0 0.0
      %1921 = vmatprep.subr.mxu0 0.0
      %1922 = vmatpush1.xpose.msra.mxu0 0.0
      %1923 = vmatprep.subr.mxu0 0.0
      %1924 = vmatpush1.xpose.msra.mxu0 0.0
      %1925 = vmatprep.subr.mxu0 0.0
      %1926 = vmatpush1.xpose.msra.mxu0 0.0
      %1927 = vmatprep.subr.mxu0 0.0
      %1928 = vmatpush1.xpose.msra.mxu0 0.0
      %1929 = vmatprep.subr.mxu0 0.0
      %1930 = vmatpush1.xpose.msra.mxu0 0.0
      %1931 = vmatprep.subr.mxu0 0.0
      %1932 = vmatpush1.xpose.msra.mxu0 0.0
      %1933 = vmatprep.subr.mxu0 0.0
      %1934 = vmatpush1.xpose.msra.mxu0 0.0
      %1935 = vmatprep.subr.mxu0 0.0
      %1936 = vmatpush1.xpose.msra.mxu0 0.0
      %1937 = vmatprep.subr.mxu0 0.0
      %1938 = vmatpush1.xpose.msra.mxu0 0.0
      %1939 = vmatprep.subr.mxu0 0.0
      %1940 = vmatpush1.xpose.msra.mxu0 0.0
      %1941 = vmatprep.subr.mxu0 0.0
      %1942 = vmatpush1.xpose.msra.mxu0 %v1909
      %1943 = vmatprep.subr.mxu0 0.0
      %1944 = vmatpush2.xpose.msra.mxu0 0.0
      %1945 = vmatprep.subr.mxu0 0.0
      %1946 = vmatpush2.xpose.msra.mxu0 0.0
      %1947 = vmatprep.subr.mxu0 0.0
      %1948 = vmatpush2.xpose.msra.mxu0 0.0
      %1949 = vmatprep.subr.mxu0 0.0
      %1950 = vmatpush2.xpose.msra.mxu0 0.0
      %1951 = vmatprep.subr.mxu0 0.0
      %1952 = vmatpush2.xpose.msra.mxu0 0.0
      %1953 = vmatprep.subr.mxu0 0.0
      %1954 = vmatpush2.xpose.msra.mxu0 0.0
      %1955 = vmatprep.subr.mxu0 0.0
      %1956 = vmatpush2.xpose.msra.mxu0 0.0
      %1957 = vmatprep.subr.mxu0 0.0
      %1958 = vmatpush2.xpose.msra.mxu0 0.0
      %1959 = vmatprep.subr.mxu0 0.0
      %1960 = vmatpush2.xpose.msra.mxu0 0.0
      %1961 = vmatprep.subr.mxu0 0.0
      %1962 = vmatpush2.xpose.msra.mxu0 0.0
      %1963 = vmatprep.subr.mxu0 0.0
      %1964 = vmatpush2.xpose.msra.mxu0 0.0
      %1965 = vmatprep.subr.mxu0 0.0
      %1966 = vmatpush2.xpose.msra.mxu0 0.0
      %1967 = vmatprep.subr.mxu0 0.0
      %1968 = vmatpush2.xpose.msra.mxu0 0.0
      %1969 = vmatprep.subr.mxu0 0.0
      %1970 = vmatpush2.xpose.msra.mxu0 0.0
      %1971 = vmatprep.subr.mxu0 0.0
      %1972 = vmatpush2.xpose.msra.mxu0 0.0
      %1973 = vmatprep.subr.mxu0 0.0
      %1974 = vmatpush2.xpose.msra.mxu0 0.0
      %1975 = vmatprep.mubr.f32.mxu0 0.0
      %1976 = vmatmul.mubr.f32.gmra.mxu0 %v1907
      %v1977 = vpop.f32.mrf.mxu0
      %v1978 = vadd.f32 %v729, %v1977
      %v1979 = vpop.f32.mrf.mxu0
      %1980 = vdwg.mxu0
      %v1981 = vsel %vm836, %v1978, -inf
      %1982 = vmax.xlane.f32.xlu0 %v1981
      %v1983 = vpop.xlane.xlu0 %1982
      %v1984 = vsub.f32 %v1978, %v1983
      %v1985 = vmul.f32 %v1984, 1.442695
      %v1986 = vpow.pop %v1985
      %v1987 = vsel %vm836, %v1986, 0.0
      %1988 = vadd.xlane.f32.xlu0 %v1987
      %v1989 = vpop.xlane.xlu0 %1988
      %v1990 = vrcp.pop %v1989
      %v1991 = vmul.f32 %v1986, %v1990
      %1992 = vrot.lane.b32.xlu0 %v1901, 64
      %v1993 = vpop.permute.xlu0 %1992
      %v1996 = vsel %vm836, %v1991, 0
      %1998 = vmatprep.subr.mxu0 0.0
      %1999 = vmatpush1.msra.mxu0 0.0
      %2000 = vmatprep.subr.mxu0 0.0
      %2001 = vmatpush1.msra.mxu0 0.0
      %2002 = vmatprep.subr.mxu0 0.0
      %2003 = vmatpush1.msra.mxu0 0.0
      %2004 = vmatprep.subr.mxu0 0.0
      %2005 = vmatpush1.msra.mxu0 0.0
      %2006 = vmatprep.subr.mxu0 0.0
      %2007 = vmatpush1.msra.mxu0 0.0
      %2008 = vmatprep.subr.mxu0 0.0
      %2009 = vmatpush1.msra.mxu0 0.0
      %2010 = vmatprep.subr.mxu0 0.0
      %2011 = vmatpush1.msra.mxu0 0.0
      %2012 = vmatprep.subr.mxu0 0.0
      %2013 = vmatpush1.msra.mxu0 0.0
      %2014 = vmatprep.subr.mxu0 0.0
      %2015 = vmatpush1.msra.mxu0 0.0
      %2016 = vmatprep.subr.mxu0 0.0
      %2017 = vmatpush1.msra.mxu0 0.0
      %2018 = vmatprep.subr.mxu0 0.0
      %2019 = vmatpush1.msra.mxu0 0.0
      %2020 = vmatprep.subr.mxu0 0.0
      %2021 = vmatpush1.msra.mxu0 0.0
      %2022 = vmatprep.subr.mxu0 0.0
      %2023 = vmatpush1.msra.mxu0 0.0
      %2024 = vmatprep.subr.mxu0 0.0
      %2025 = vmatpush1.msra.mxu0 0.0
      %2026 = vmatprep.subr.mxu0 0.0
      %2027 = vmatpush1.msra.mxu0 0.0
      %2028 = vmatprep.subr.mxu0 0.0
      %2029 = vmatpush1.msra.mxu0 %v1993
      %2030 = vmatprep.subr.mxu0 0.0
      %2031 = vmatpush2.msra.mxu0 0.0
      %2032 = vmatprep.subr.mxu0 0.0
      %2033 = vmatpush2.msra.mxu0 0.0
      %2034 = vmatprep.subr.mxu0 0.0
      %2035 = vmatpush2.msra.mxu0 0.0
      %2036 = vmatprep.subr.mxu0 0.0
      %2037 = vmatpush2.msra.mxu0 0.0
      %2038 = vmatprep.subr.mxu0 0.0
      %2039 = vmatpush2.msra.mxu0 0.0
      %2040 = vmatprep.subr.mxu0 0.0
      %2041 = vmatpush2.msra.mxu0 0.0
      %2042 = vmatprep.subr.mxu0 0.0
      %2043 = vmatpush2.msra.mxu0 0.0
      %2044 = vmatprep.subr.mxu0 0.0
      %2045 = vmatpush2.msra.mxu0 0.0
      %2046 = vmatprep.subr.mxu0 0.0
      %2047 = vmatpush2.msra.mxu0 0.0
      %2048 = vmatprep.subr.mxu0 0.0
      %2049 = vmatpush2.msra.mxu0 0.0
      %2050 = vmatprep.subr.mxu0 0.0
      %2051 = vmatpush2.msra.mxu0 0.0
      %2052 = vmatprep.subr.mxu0 0.0
      %2053 = vmatpush2.msra.mxu0 0.0
      %2054 = vmatprep.subr.mxu0 0.0
      %2055 = vmatpush2.msra.mxu0 0.0
      %2056 = vmatprep.subr.mxu0 0.0
      %2057 = vmatpush2.msra.mxu0 0.0
      %2058 = vmatprep.subr.mxu0 0.0
      %2059 = vmatpush2.msra.mxu0 0.0
      %2060 = vmatprep.subr.mxu0 0.0
      %2061 = vmatpush2.msra.mxu0 0.0
      %2062 = vmatprep.mubr.f32.mxu0 0.0
      %2063 = vmatmul.mubr.f32.gmra.mxu0 %v1996
      %v2064 = vpop.f32.mrf.mxu0
      %v2065 = vadd.f32 0.0, %v2064
      %v2066 = vpop.f32.mrf.mxu0
      %2067 = vdwg.mxu0
      %2068 = vrot.lane.b32.xlu0 %v1901, 120
      %v2069 = vpop.permute.xlu0 %2068
      %2070 = vrot.lane.b32.xlu0 %v1901, 88
      %v2071 = vpop.permute.xlu0 %2070
      %v2072 = vsel %vm836, %v2069, 0
      %v2074 = vsel %vm836, %v2071, 0
      %2076 = vmatprep.subr.mxu0 0.0
      %2077 = vmatpush1.xpose.msra.mxu0 0.0
      %2078 = vmatprep.subr.mxu0 0.0
      %2079 = vmatpush1.xpose.msra.mxu0 0.0
      %2080 = vmatprep.subr.mxu0 0.0
      %2081 = vmatpush1.xpose.msra.mxu0 0.0
      %2082 = vmatprep.subr.mxu0 0.0
      %2083 = vmatpush1.xpose.msra.mxu0 0.0
      %2084 = vmatprep.subr.mxu0 0.0
      %2085 = vmatpush1.xpose.msra.mxu0 0.0
      %2086 = vmatprep.subr.mxu0 0.0
      %2087 = vmatpush1.xpose.msra.mxu0 0.0
      %2088 = vmatprep.subr.mxu0 0.0
      %2089 = vmatpush1.xpose.msra.mxu0 0.0
      %2090 = vmatprep.subr.mxu0 0.0
      %2091 = vmatpush1.xpose.msra.mxu0 0.0
      %2092 = vmatprep.subr.mxu0 0.0
      %2093 = vmatpush1.xpose.msra.mxu0 0.0
      %2094 = vmatprep.subr.mxu0 0.0
      %2095 = vmatpush1.xpose.msra.mxu0 0.0
      %2096 = vmatprep.subr.mxu0 0.0
      %2097 = vmatpush1.xpose.msra.mxu0 0.0
      %2098 = vmatprep.subr.mxu0 0.0
      %2099 = vmatpush1.xpose.msra.mxu0 0.0
      %2100 = vmatprep.subr.mxu0 0.0
      %2101 = vmatpush1.xpose.msra.mxu0 0.0
      %2102 = vmatprep.subr.mxu0 0.0
      %2103 = vmatpush1.xpose.msra.mxu0 0.0
      %2104 = vmatprep.subr.mxu0 0.0
      %2105 = vmatpush1.xpose.msra.mxu0 0.0
      %2106 = vmatprep.subr.mxu0 0.0
      %2107 = vmatpush1.xpose.msra.mxu0 %v2074
      %2108 = vmatprep.subr.mxu0 0.0
      %2109 = vmatpush2.xpose.msra.mxu0 0.0
      %2110 = vmatprep.subr.mxu0 0.0
      %2111 = vmatpush2.xpose.msra.mxu0 0.0
      %2112 = vmatprep.subr.mxu0 0.0
      %2113 = vmatpush2.xpose.msra.mxu0 0.0
      %2114 = vmatprep.subr.mxu0 0.0
      %2115 = vmatpush2.xpose.msra.mxu0 0.0
      %2116 = vmatprep.subr.mxu0 0.0
      %2117 = vmatpush2.xpose.msra.mxu0 0.0
      %2118 = vmatprep.subr.mxu0 0.0
      %2119 = vmatpush2.xpose.msra.mxu0 0.0
      %2120 = vmatprep.subr.mxu0 0.0
      %2121 = vmatpush2.xpose.msra.mxu0 0.0
      %2122 = vmatprep.subr.mxu0 0.0
      %2123 = vmatpush2.xpose.msra.mxu0 0.0
      %2124 = vmatprep.subr.mxu0 0.0
      %2125 = vmatpush2.xpose.msra.mxu0 0.0
      %2126 = vmatprep.subr.mxu0 0.0
      %2127 = vmatpush2.xpose.msra.mxu0 0.0
      %2128 = vmatprep.subr.mxu0 0.0
      %2129 = vmatpush2.xpose.msra.mxu0 0.0
      %2130 = vmatprep.subr.mxu0 0.0
      %2131 = vmatpush2.xpose.msra.mxu0 0.0
      %2132 = vmatprep.subr.mxu0 0.0
      %2133 = vmatpush2.xpose.msra.mxu0 0.0
      %2134 = vmatprep.subr.mxu0 0.0
      %2135 = vmatpush2.xpose.msra.mxu0 0.0
      %2136 = vmatprep.subr.mxu0 0.0
      %2137 = vmatpush2.xpose.msra.mxu0 0.0
      %2138 = vmatprep.subr.mxu0 0.0
      %2139 = vmatpush2.xpose.msra.mxu0 0.0
      %2140 = vmatprep.mubr.f32.mxu0 0.0
      %2141 = vmatmul.mubr.f32.gmra.mxu0 %v2072
      %v2142 = vpop.f32.mrf.mxu0
      %v2143 = vadd.f32 %v729, %v2142
      %v2144 = vpop.f32.mrf.mxu0
      %2145 = vdwg.mxu0
      %v2146 = vsel %vm836, %v2143, -inf
      %2147 = vmax.xlane.f32.xlu0 %v2146
      %v2148 = vpop.xlane.xlu0 %2147
      %v2149 = vsub.f32 %v2143, %v2148
      %v2150 = vmul.f32 %v2149, 1.442695
      %v2151 = vpow.pop %v2150
      %v2152 = vsel %vm836, %v2151, 0.0
      %2153 = vadd.xlane.f32.xlu0 %v2152
      %v2154 = vpop.xlane.xlu0 %2153
      %v2155 = vrcp.pop %v2154
      %v2156 = vmul.f32 %v2151, %v2155
      %2157 = vrot.lane.b32.xlu0 %v1901, 56
      %v2158 = vpop.permute.xlu0 %2157
      %v2161 = vsel %vm836, %v2156, 0
      %2163 = vmatprep.subr.mxu0 0.0
      %2164 = vmatpush1.msra.mxu0 0.0
      %2165 = vmatprep.subr.mxu0 0.0
      %2166 = vmatpush1.msra.mxu0 0.0
      %2167 = vmatprep.subr.mxu0 0.0
      %2168 = vmatpush1.msra.mxu0 0.0
      %2169 = vmatprep.subr.mxu0 0.0
      %2170 = vmatpush1.msra.mxu0 0.0
      %2171 = vmatprep.subr.mxu0 0.0
      %2172 = vmatpush1.msra.mxu0 0.0
      %2173 = vmatprep.subr.mxu0 0.0
      %2174 = vmatpush1.msra.mxu0 0.0
      %2175 = vmatprep.subr.mxu0 0.0
      %2176 = vmatpush1.msra.mxu0 0.0
      %2177 = vmatprep.subr.mxu0 0.0
      %2178 = vmatpush1.msra.mxu0 0.0
      %2179 = vmatprep.subr.mxu0 0.0
      %2180 = vmatpush1.msra.mxu0 0.0
      %2181 = vmatprep.subr.mxu0 0.0
      %2182 = vmatpush1.msra.mxu0 0.0
      %2183 = vmatprep.subr.mxu0 0.0
      %2184 = vmatpush1.msra.mxu0 0.0
      %2185 = vmatprep.subr.mxu0 0.0
      %2186 = vmatpush1.msra.mxu0 0.0
      %2187 = vmatprep.subr.mxu0 0.0
      %2188 = vmatpush1.msra.mxu0 0.0
      %2189 = vmatprep.subr.mxu0 0.0
      %2190 = vmatpush1.msra.mxu0 0.0
      %2191 = vmatprep.subr.mxu0 0.0
      %2192 = vmatpush1.msra.mxu0 0.0
      %2193 = vmatprep.subr.mxu0 0.0
      %2194 = vmatpush1.msra.mxu0 %v2158
      %2195 = vmatprep.subr.mxu0 0.0
      %2196 = vmatpush2.msra.mxu0 0.0
      %2197 = vmatprep.subr.mxu0 0.0
      %2198 = vmatpush2.msra.mxu0 0.0
      %2199 = vmatprep.subr.mxu0 0.0
      %2200 = vmatpush2.msra.mxu0 0.0
      %2201 = vmatprep.subr.mxu0 0.0
      %2202 = vmatpush2.msra.mxu0 0.0
      %2203 = vmatprep.subr.mxu0 0.0
      %2204 = vmatpush2.msra.mxu0 0.0
      %2205 = vmatprep.subr.mxu0 0.0
      %2206 = vmatpush2.msra.mxu0 0.0
      %2207 = vmatprep.subr.mxu0 0.0
      %2208 = vmatpush2.msra.mxu0 0.0
      %2209 = vmatprep.subr.mxu0 0.0
      %2210 = vmatpush2.msra.mxu0 0.0
      %2211 = vmatprep.subr.mxu0 0.0
      %2212 = vmatpush2.msra.mxu0 0.0
      %2213 = vmatprep.subr.mxu0 0.0
      %2214 = vmatpush2.msra.mxu0 0.0
      %2215 = vmatprep.subr.mxu0 0.0
      %2216 = vmatpush2.msra.mxu0 0.0
      %2217 = vmatprep.subr.mxu0 0.0
      %2218 = vmatpush2.msra.mxu0 0.0
      %2219 = vmatprep.subr.mxu0 0.0
      %2220 = vmatpush2.msra.mxu0 0.0
      %2221 = vmatprep.subr.mxu0 0.0
      %2222 = vmatpush2.msra.mxu0 0.0
      %2223 = vmatprep.subr.mxu0 0.0
      %2224 = vmatpush2.msra.mxu0 0.0
      %2225 = vmatprep.subr.mxu0 0.0
      %2226 = vmatpush2.msra.mxu0 0.0
      %2227 = vmatprep.mubr.f32.mxu0 0.0
      %2228 = vmatmul.mubr.f32.gmra.mxu0 %v2161
      %v2229 = vpop.f32.mrf.mxu0
      %v2230 = vadd.f32 0.0, %v2229
      %v2231 = vpop.f32.mrf.mxu0
      %2232 = vdwg.mxu0
      %2233 = vrot.lane.b32.xlu0 %v1901, 112
      %v2234 = vpop.permute.xlu0 %2233
      %2235 = vrot.lane.b32.xlu0 %v1901, 80
      %v2236 = vpop.permute.xlu0 %2235
      %v2237 = vsel %vm836, %v2234, 0
      %v2239 = vsel %vm836, %v2236, 0
      %2241 = vmatprep.subr.mxu0 0.0
      %2242 = vmatpush1.xpose.msra.mxu0 0.0
      %2243 = vmatprep.subr.mxu0 0.0
      %2244 = vmatpush1.xpose.msra.mxu0 0.0
      %2245 = vmatprep.subr.mxu0 0.0
      %2246 = vmatpush1.xpose.msra.mxu0 0.0
      %2247 = vmatprep.subr.mxu0 0.0
      %2248 = vmatpush1.xpose.msra.mxu0 0.0
      %2249 = vmatprep.subr.mxu0 0.0
      %2250 = vmatpush1.xpose.msra.mxu0 0.0
      %2251 = vmatprep.subr.mxu0 0.0
      %2252 = vmatpush1.xpose.msra.mxu0 0.0
      %2253 = vmatprep.subr.mxu0 0.0
      %2254 = vmatpush1.xpose.msra.mxu0 0.0
      %2255 = vmatprep.subr.mxu0 0.0
      %2256 = vmatpush1.xpose.msra.mxu0 0.0
      %2257 = vmatprep.subr.mxu0 0.0
      %2258 = vmatpush1.xpose.msra.mxu0 0.0
      %2259 = vmatprep.subr.mxu0 0.0
      %2260 = vmatpush1.xpose.msra.mxu0 0.0
      %2261 = vmatprep.subr.mxu0 0.0
      %2262 = vmatpush1.xpose.msra.mxu0 0.0
      %2263 = vmatprep.subr.mxu0 0.0
      %2264 = vmatpush1.xpose.msra.mxu0 0.0
      %2265 = vmatprep.subr.mxu0 0.0
      %2266 = vmatpush1.xpose.msra.mxu0 0.0
      %2267 = vmatprep.subr.mxu0 0.0
      %2268 = vmatpush1.xpose.msra.mxu0 0.0
      %2269 = vmatprep.subr.mxu0 0.0
      %2270 = vmatpush1.xpose.msra.mxu0 0.0
      %2271 = vmatprep.subr.mxu0 0.0
      %2272 = vmatpush1.xpose.msra.mxu0 %v2239
      %2273 = vmatprep.subr.mxu0 0.0
      %2274 = vmatpush2.xpose.msra.mxu0 0.0
      %2275 = vmatprep.subr.mxu0 0.0
      %2276 = vmatpush2.xpose.msra.mxu0 0.0
      %2277 = vmatprep.subr.mxu0 0.0
      %2278 = vmatpush2.xpose.msra.mxu0 0.0
      %2279 = vmatprep.subr.mxu0 0.0
      %2280 = vmatpush2.xpose.msra.mxu0 0.0
      %2281 = vmatprep.subr.mxu0 0.0
      %2282 = vmatpush2.xpose.msra.mxu0 0.0
      %2283 = vmatprep.subr.mxu0 0.0
      %2284 = vmatpush2.xpose.msra.mxu0 0.0
      %2285 = vmatprep.subr.mxu0 0.0
      %2286 = vmatpush2.xpose.msra.mxu0 0.0
      %2287 = vmatprep.subr.mxu0 0.0
      %2288 = vmatpush2.xpose.msra.mxu0 0.0
      %2289 = vmatprep.subr.mxu0 0.0
      %2290 = vmatpush2.xpose.msra.mxu0 0.0
      %2291 = vmatprep.subr.mxu0 0.0
      %2292 = vmatpush2.xpose.msra.mxu0 0.0
      %2293 = vmatprep.subr.mxu0 0.0
      %2294 = vmatpush2.xpose.msra.mxu0 0.0
      %2295 = vmatprep.subr.mxu0 0.0
      %2296 = vmatpush2.xpose.msra.mxu0 0.0
      %2297 = vmatprep.subr.mxu0 0.0
      %2298 = vmatpush2.xpose.msra.mxu0 0.0
      %2299 = vmatprep.subr.mxu0 0.0
      %2300 = vmatpush2.xpose.msra.mxu0 0.0
      %2301 = vmatprep.subr.mxu0 0.0
      %2302 = vmatpush2.xpose.msra.mxu0 0.0
      %2303 = vmatprep.subr.mxu0 0.0
      %2304 = vmatpush2.xpose.msra.mxu0 0.0
      %2305 = vmatprep.mubr.f32.mxu0 0.0
      %2306 = vmatmul.mubr.f32.gmra.mxu0 %v2237
      %v2307 = vpop.f32.mrf.mxu0
      %v2308 = vadd.f32 %v729, %v2307
      %v2309 = vpop.f32.mrf.mxu0
      %2310 = vdwg.mxu0
      %v2311 = vsel %vm836, %v2308, -inf
      %2312 = vmax.xlane.f32.xlu0 %v2311
      %v2313 = vpop.xlane.xlu0 %2312
      %v2314 = vsub.f32 %v2308, %v2313
      %v2315 = vmul.f32 %v2314, 1.442695
      %v2316 = vpow.pop %v2315
      %v2317 = vsel %vm836, %v2316, 0.0
      %2318 = vadd.xlane.f32.xlu0 %v2317
      %v2319 = vpop.xlane.xlu0 %2318
      %v2320 = vrcp.pop %v2319
      %v2321 = vmul.f32 %v2316, %v2320
      %2322 = vrot.lane.b32.xlu0 %v1901, 48
      %v2323 = vpop.permute.xlu0 %2322
      %v2326 = vsel %vm836, %v2321, 0
      %2328 = vmatprep.subr.mxu0 0.0
      %2329 = vmatpush1.msra.mxu0 0.0
      %2330 = vmatprep.subr.mxu0 0.0
      %2331 = vmatpush1.msra.mxu0 0.0
      %2332 = vmatprep.subr.mxu0 0.0
      %2333 = vmatpush1.msra.mxu0 0.0
      %2334 = vmatprep.subr.mxu0 0.0
      %2335 = vmatpush1.msra.mxu0 0.0
      %2336 = vmatprep.subr.mxu0 0.0
      %2337 = vmatpush1.msra.mxu0 0.0
      %2338 = vmatprep.subr.mxu0 0.0
      %2339 = vmatpush1.msra.mxu0 0.0
      %2340 = vmatprep.subr.mxu0 0.0
      %2341 = vmatpush1.msra.mxu0 0.0
      %2342 = vmatprep.subr.mxu0 0.0
      %2343 = vmatpush1.msra.mxu0 0.0
      %2344 = vmatprep.subr.mxu0 0.0
      %2345 = vmatpush1.msra.mxu0 0.0
      %2346 = vmatprep.subr.mxu0 0.0
      %2347 = vmatpush1.msra.mxu0 0.0
      %2348 = vmatprep.subr.mxu0 0.0
      %2349 = vmatpush1.msra.mxu0 0.0
      %2350 = vmatprep.subr.mxu0 0.0
      %2351 = vmatpush1.msra.mxu0 0.0
      %2352 = vmatprep.subr.mxu0 0.0
      %2353 = vmatpush1.msra.mxu0 0.0
      %2354 = vmatprep.subr.mxu0 0.0
      %2355 = vmatpush1.msra.mxu0 0.0
      %2356 = vmatprep.subr.mxu0 0.0
      %2357 = vmatpush1.msra.mxu0 0.0
      %2358 = vmatprep.subr.mxu0 0.0
      %2359 = vmatpush1.msra.mxu0 %v2323
      %2360 = vmatprep.subr.mxu0 0.0
      %2361 = vmatpush2.msra.mxu0 0.0
      %2362 = vmatprep.subr.mxu0 0.0
      %2363 = vmatpush2.msra.mxu0 0.0
      %2364 = vmatprep.subr.mxu0 0.0
      %2365 = vmatpush2.msra.mxu0 0.0
      %2366 = vmatprep.subr.mxu0 0.0
      %2367 = vmatpush2.msra.mxu0 0.0
      %2368 = vmatprep.subr.mxu0 0.0
      %2369 = vmatpush2.msra.mxu0 0.0
      %2370 = vmatprep.subr.mxu0 0.0
      %2371 = vmatpush2.msra.mxu0 0.0
      %2372 = vmatprep.subr.mxu0 0.0
      %2373 = vmatpush2.msra.mxu0 0.0
      %2374 = vmatprep.subr.mxu0 0.0
      %2375 = vmatpush2.msra.mxu0 0.0
      %2376 = vmatprep.subr.mxu0 0.0
      %2377 = vmatpush2.msra.mxu0 0.0
      %2378 = vmatprep.subr.mxu0 0.0
      %2379 = vmatpush2.msra.mxu0 0.0
      %2380 = vmatprep.subr.mxu0 0.0
      %2381 = vmatpush2.msra.mxu0 0.0
      %2382 = vmatprep.subr.mxu0 0.0
      %2383 = vmatpush2.msra.mxu0 0.0
      %2384 = vmatprep.subr.mxu0 0.0
      %2385 = vmatpush2.msra.mxu0 0.0
      %2386 = vmatprep.subr.mxu0 0.0
      %2387 = vmatpush2.msra.mxu0 0.0
      %2388 = vmatprep.subr.mxu0 0.0
      %2389 = vmatpush2.msra.mxu0 0.0
      %2390 = vmatprep.subr.mxu0 0.0
      %2391 = vmatpush2.msra.mxu0 0.0
      %2392 = vmatprep.mubr.f32.mxu0 0.0
      %2393 = vmatmul.mubr.f32.gmra.mxu0 %v2326
      %v2394 = vpop.f32.mrf.mxu0
      %v2395 = vadd.f32 0.0, %v2394
      %v2396 = vpop.f32.mrf.mxu0
      %2397 = vdwg.mxu0
      %2398 = vrot.lane.b32.xlu0 %v1901, 104
      %v2399 = vpop.permute.xlu0 %2398
      %2400 = vrot.lane.b32.xlu0 %v1901, 72
      %v2401 = vpop.permute.xlu0 %2400
      %v2402 = vsel %vm836, %v2399, 0
      %v2404 = vsel %vm836, %v2401, 0
      %2406 = vmatprep.subr.mxu0 0.0
      %2407 = vmatpush1.xpose.msra.mxu0 0.0
      %2408 = vmatprep.subr.mxu0 0.0
      %2409 = vmatpush1.xpose.msra.mxu0 0.0
      %2410 = vmatprep.subr.mxu0 0.0
      %2411 = vmatpush1.xpose.msra.mxu0 0.0
      %2412 = vmatprep.subr.mxu0 0.0
      %2413 = vmatpush1.xpose.msra.mxu0 0.0
      %2414 = vmatprep.subr.mxu0 0.0
      %2415 = vmatpush1.xpose.msra.mxu0 0.0
      %2416 = vmatprep.subr.mxu0 0.0
      %2417 = vmatpush1.xpose.msra.mxu0 0.0
      %2418 = vmatprep.subr.mxu0 0.0
      %2419 = vmatpush1.xpose.msra.mxu0 0.0
      %2420 = vmatprep.subr.mxu0 0.0
      %2421 = vmatpush1.xpose.msra.mxu0 0.0
      %2422 = vmatprep.subr.mxu0 0.0
      %2423 = vmatpush1.xpose.msra.mxu0 0.0
      %2424 = vmatprep.subr.mxu0 0.0
      %2425 = vmatpush1.xpose.msra.mxu0 0.0
      %2426 = vmatprep.subr.mxu0 0.0
      %2427 = vmatpush1.xpose.msra.mxu0 0.0
      %2428 = vmatprep.subr.mxu0 0.0
      %2429 = vmatpush1.xpose.msra.mxu0 0.0
      %2430 = vmatprep.subr.mxu0 0.0
      %2431 = vmatpush1.xpose.msra.mxu0 0.0
      %2432 = vmatprep.subr.mxu0 0.0
      %2433 = vmatpush1.xpose.msra.mxu0 0.0
      %2434 = vmatprep.subr.mxu0 0.0
      %2435 = vmatpush1.xpose.msra.mxu0 0.0
      %2436 = vmatprep.subr.mxu0 0.0
      %2437 = vmatpush1.xpose.msra.mxu0 %v2404
      %2438 = vmatprep.subr.mxu0 0.0
      %2439 = vmatpush2.xpose.msra.mxu0 0.0
      %2440 = vmatprep.subr.mxu0 0.0
      %2441 = vmatpush2.xpose.msra.mxu0 0.0
      %2442 = vmatprep.subr.mxu0 0.0
      %2443 = vmatpush2.xpose.msra.mxu0 0.0
      %2444 = vmatprep.subr.mxu0 0.0
      %2445 = vmatpush2.xpose.msra.mxu0 0.0
      %2446 = vmatprep.subr.mxu0 0.0
      %2447 = vmatpush2.xpose.msra.mxu0 0.0
      %2448 = vmatprep.subr.mxu0 0.0
      %2449 = vmatpush2.xpose.msra.mxu0 0.0
      %2450 = vmatprep.subr.mxu0 0.0
      %2451 = vmatpush2.xpose.msra.mxu0 0.0
      %2452 = vmatprep.subr.mxu0 0.0
      %2453 = vmatpush2.xpose.msra.mxu0 0.0
      %2454 = vmatprep.subr.mxu0 0.0
      %2455 = vmatpush2.xpose.msra.mxu0 0.0
      %2456 = vmatprep.subr.mxu0 0.0
      %2457 = vmatpush2.xpose.msra.mxu0 0.0
      %2458 = vmatprep.subr.mxu0 0.0
      %2459 = vmatpush2.xpose.msra.mxu0 0.0
      %2460 = vmatprep.subr.mxu0 0.0
      %2461 = vmatpush2.xpose.msra.mxu0 0.0
      %2462 = vmatprep.subr.mxu0 0.0
      %2463 = vmatpush2.xpose.msra.mxu0 0.0
      %2464 = vmatprep.subr.mxu0 0.0
      %2465 = vmatpush2.xpose.msra.mxu0 0.0
      %2466 = vmatprep.subr.mxu0 0.0
      %2467 = vmatpush2.xpose.msra.mxu0 0.0
      %2468 = vmatprep.subr.mxu0 0.0
      %2469 = vmatpush2.xpose.msra.mxu0 0.0
      %2470 = vmatprep.mubr.f32.mxu0 0.0
      %2471 = vmatmul.mubr.f32.gmra.mxu0 %v2402
      %v2472 = vpop.f32.mrf.mxu0
      %v2473 = vadd.f32 %v729, %v2472
      %v2474 = vpop.f32.mrf.mxu0
      %2475 = vdwg.mxu0
      %v2476 = vsel %vm836, %v2473, -inf
      %2477 = vmax.xlane.f32.xlu0 %v2476
      %v2478 = vpop.xlane.xlu0 %2477
      %v2479 = vsub.f32 %v2473, %v2478
      %v2480 = vmul.f32 %v2479, 1.442695
      %v2481 = vpow.pop %v2480
      %v2482 = vsel %vm836, %v2481, 0.0
      %2483 = vadd.xlane.f32.xlu0 %v2482
      %v2484 = vpop.xlane.xlu0 %2483
      %v2485 = vrcp.pop %v2484
      %v2486 = vmul.f32 %v2481, %v2485
      %2487 = vrot.lane.b32.xlu0 %v1901, 40
      %v2488 = vpop.permute.xlu0 %2487
      %v2491 = vsel %vm836, %v2486, 0
      %2493 = vmatprep.subr.mxu0 0.0
      %2494 = vmatpush1.msra.mxu0 0.0
      %2495 = vmatprep.subr.mxu0 0.0
      %2496 = vmatpush1.msra.mxu0 0.0
      %2497 = vmatprep.subr.mxu0 0.0
      %2498 = vmatpush1.msra.mxu0 0.0
      %2499 = vmatprep.subr.mxu0 0.0
      %2500 = vmatpush1.msra.mxu0 0.0
      %2501 = vmatprep.subr.mxu0 0.0
      %2502 = vmatpush1.msra.mxu0 0.0
      %2503 = vmatprep.subr.mxu0 0.0
      %2504 = vmatpush1.msra.mxu0 0.0
      %2505 = vmatprep.subr.mxu0 0.0
      %2506 = vmatpush1.msra.mxu0 0.0
      %2507 = vmatprep.subr.mxu0 0.0
      %2508 = vmatpush1.msra.mxu0 0.0
      %2509 = vmatprep.subr.mxu0 0.0
      %2510 = vmatpush1.msra.mxu0 0.0
      %2511 = vmatprep.subr.mxu0 0.0
      %2512 = vmatpush1.msra.mxu0 0.0
      %2513 = vmatprep.subr.mxu0 0.0
      %2514 = vmatpush1.msra.mxu0 0.0
      %2515 = vmatprep.subr.mxu0 0.0
      %2516 = vmatpush1.msra.mxu0 0.0
      %2517 = vmatprep.subr.mxu0 0.0
      %2518 = vmatpush1.msra.mxu0 0.0
      %2519 = vmatprep.subr.mxu0 0.0
      %2520 = vmatpush1.msra.mxu0 0.0
      %2521 = vmatprep.subr.mxu0 0.0
      %2522 = vmatpush1.msra.mxu0 0.0
      %2523 = vmatprep.subr.mxu0 0.0
      %2524 = vmatpush1.msra.mxu0 %v2488
      %2525 = vmatprep.subr.mxu0 0.0
      %2526 = vmatpush2.msra.mxu0 0.0
      %2527 = vmatprep.subr.mxu0 0.0
      %2528 = vmatpush2.msra.mxu0 0.0
      %2529 = vmatprep.subr.mxu0 0.0
      %2530 = vmatpush2.msra.mxu0 0.0
      %2531 = vmatprep.subr.mxu0 0.0
      %2532 = vmatpush2.msra.mxu0 0.0
      %2533 = vmatprep.subr.mxu0 0.0
      %2534 = vmatpush2.msra.mxu0 0.0
      %2535 = vmatprep.subr.mxu0 0.0
      %2536 = vmatpush2.msra.mxu0 0.0
      %2537 = vmatprep.subr.mxu0 0.0
      %2538 = vmatpush2.msra.mxu0 0.0
      %2539 = vmatprep.subr.mxu0 0.0
      %2540 = vmatpush2.msra.mxu0 0.0
      %2541 = vmatprep.subr.mxu0 0.0
      %2542 = vmatpush2.msra.mxu0 0.0
      %2543 = vmatprep.subr.mxu0 0.0
      %2544 = vmatpush2.msra.mxu0 0.0
      %2545 = vmatprep.subr.mxu0 0.0
      %2546 = vmatpush2.msra.mxu0 0.0
      %2547 = vmatprep.subr.mxu0 0.0
      %2548 = vmatpush2.msra.mxu0 0.0
      %2549 = vmatprep.subr.mxu0 0.0
      %2550 = vmatpush2.msra.mxu0 0.0
      %2551 = vmatprep.subr.mxu0 0.0
      %2552 = vmatpush2.msra.mxu0 0.0
      %2553 = vmatprep.subr.mxu0 0.0
      %2554 = vmatpush2.msra.mxu0 0.0
      %2555 = vmatprep.subr.mxu0 0.0
      %2556 = vmatpush2.msra.mxu0 0.0
      %2557 = vmatprep.mubr.f32.mxu0 0.0
      %2558 = vmatmul.mubr.f32.gmra.mxu0 %v2491
      %v2559 = vpop.f32.mrf.mxu0
      %v2560 = vadd.f32 0.0, %v2559
      %v2561 = vpop.f32.mrf.mxu0
      %2562 = vdwg.mxu0
      %2564 = vrot.lane.b32.xlu0 %v2230, 8
      %v2565 = vpop.permute.xlu0 %2564
      %2568 = vrot.lane.b32.xlu0 %v2395, 16
      %v2569 = vpop.permute.xlu0 %2568
      %2572 = vrot.lane.b32.xlu0 %v2560, 24
      %v2573 = vpop.permute.xlu0 %2572
      %v2575 = vsel %vm836, %v2065, %v2565
      %v2576 = vsel %vm1506, %v2575, %v2569
      %v2577 = vsel %vm1508, %v2576, %v2573
      %s2578 = scalar_lea.vmem %s4, 32
      %v2579 = vld [vmem:[%s2578] sm:$0xff]
      %v2580 = vld [vmem:[%s2578 + $0x8] sm:$0xff]
      %v2581 = vld [vmem:[%s2578 + $0x10] sm:$0xff]
      %v2582 = vld [vmem:[%s2578 + $0x18] sm:$0xff]
      %v2583 = vlaneseq
      %v2584 = vshrl.u32 %v2583, 7
      %v2585 = vsub.s32 6, %v2584
      %v2586 = vrot.slane %v1802, %v2585
      %v2588 = vsel %vm731, %v2577, 0
      %2590 = vmatprep.subr.mxu0 0.0
      %2591 = vmatpush1.msra.mxu0 0.0
      %2592 = vmatprep.subr.mxu0 0.0
      %2593 = vmatpush1.msra.mxu0 0.0
      %2594 = vmatprep.subr.mxu0 0.0
      %2595 = vmatpush1.msra.mxu0 0.0
      %2596 = vmatprep.subr.mxu0 0.0
      %2597 = vmatpush1.msra.mxu0 0.0
      %2598 = vmatprep.subr.mxu0 0.0
      %2599 = vmatpush1.msra.mxu0 0.0
      %2600 = vmatprep.subr.mxu0 0.0
      %2601 = vmatpush1.msra.mxu0 0.0
      %2602 = vmatprep.subr.mxu0 0.0
      %2603 = vmatpush1.msra.mxu0 0.0
      %2604 = vmatprep.subr.mxu0 0.0
      %2605 = vmatpush1.msra.mxu0 0.0
      %2606 = vmatprep.subr.mxu0 0.0
      %2607 = vmatpush1.msra.mxu0 0.0
      %2608 = vmatprep.subr.mxu0 0.0
      %2609 = vmatpush1.msra.mxu0 0.0
      %2610 = vmatprep.subr.mxu0 0.0
      %2611 = vmatpush1.msra.mxu0 0.0
      %2612 = vmatprep.subr.mxu0 0.0
      %2613 = vmatpush1.msra.mxu0 0.0
      %2614 = vmatprep.subr.mxu0 0.0
      %2615 = vmatpush1.msra.mxu0 %v2582
      %2616 = vmatprep.subr.mxu0 0.0
      %2617 = vmatpush1.msra.mxu0 %v2581
      %2618 = vmatprep.subr.mxu0 0.0
      %2619 = vmatpush1.msra.mxu0 %v2580
      %2620 = vmatprep.subr.mxu0 0.0
      %2621 = vmatpush1.msra.mxu0 %v2579
      %2622 = vmatprep.subr.mxu0 0.0
      %2623 = vmatpush2.msra.mxu0 0.0
      %2624 = vmatprep.subr.mxu0 0.0
      %2625 = vmatpush2.msra.mxu0 0.0
      %2626 = vmatprep.subr.mxu0 0.0
      %2627 = vmatpush2.msra.mxu0 0.0
      %2628 = vmatprep.subr.mxu0 0.0
      %2629 = vmatpush2.msra.mxu0 0.0
      %2630 = vmatprep.subr.mxu0 0.0
      %2631 = vmatpush2.msra.mxu0 0.0
      %2632 = vmatprep.subr.mxu0 0.0
      %2633 = vmatpush2.msra.mxu0 0.0
      %2634 = vmatprep.subr.mxu0 0.0
      %2635 = vmatpush2.msra.mxu0 0.0
      %2636 = vmatprep.subr.mxu0 0.0
      %2637 = vmatpush2.msra.mxu0 0.0
      %2638 = vmatprep.subr.mxu0 0.0
      %2639 = vmatpush2.msra.mxu0 0.0
      %2640 = vmatprep.subr.mxu0 0.0
      %2641 = vmatpush2.msra.mxu0 0.0
      %2642 = vmatprep.subr.mxu0 0.0
      %2643 = vmatpush2.msra.mxu0 0.0
      %2644 = vmatprep.subr.mxu0 0.0
      %2645 = vmatpush2.msra.mxu0 0.0
      %2646 = vmatprep.subr.mxu0 0.0
      %2647 = vmatpush2.msra.mxu0 0.0
      %2648 = vmatprep.subr.mxu0 0.0
      %2649 = vmatpush2.msra.mxu0 0.0
      %2650 = vmatprep.subr.mxu0 0.0
      %2651 = vmatpush2.msra.mxu0 0.0
      %2652 = vmatprep.subr.mxu0 0.0
      %2653 = vmatpush2.msra.mxu0 0.0
      %2654 = vmatprep.mubr.f32.mxu0 0.0
      %2655 = vmatmul.mubr.f32.gmra.mxu0 %v2588
      %v2656 = vpop.f32.mrf.mxu0
      %v2657 = vadd.f32 %v2586, %v2656
      %v2658 = vpop.f32.mrf.mxu0
      %2659 = vdwg.mxu0
      %v2660 = vlaneseq
      %v2661 = vshrl.u32 %v2660, 7
      %v2662 = vsub.s32 2, %v2661
      %v2663 = vrot.slane %v1802, %v2662
      %v2664 = vmul.f32 %v2657, %v2663
      %v2665 = vadd.f32 %v1800, %v2664
      %v2666 = vsel %vm731, %v2665, 0.0
      %2667 = vadd.xlane.f32.xlu0 %v2666
      %v2668 = vpop.xlane.xlu0 %2667
      %v2669 = vmul.f32 %v2668, %v735
      %v2670 = vsub.f32 %v2665, %v2669
      %v2671 = vmul.f32 %v2670, %v2670
      %v2672 = vsel %vm731, %v2671, 0.0
      %2673 = vadd.xlane.f32.xlu0 %v2672
      %v2674 = vpop.xlane.xlu0 %2673
      %v2675 = vmul.f32 %v2674, %v735
      %v2676 = vadd.f32 %v2675, 1e-05
      %v2677 = vrsqrt.pop %v2676
      %v2678 = vmul.f32 %v2670, %v2677
      %v2679 = vlaneseq
      %v2680 = vshrl.u32 %v2679, 7
      %v2681 = vsub.s32 3, %v2680
      %v2682 = vrot.slane %v1802, %v2681
      %v2683 = vmul.f32 %v2678, %v2682
      %v2684 = vlaneseq
      %v2685 = vshrl.u32 %v2684, 7
      %v2686 = vsub.s32 4, %v2685
      %v2687 = vrot.slane %v1802, %v2686
      %v2688 = vadd.f32 %v2683, %v2687
      %s2689 = scalar_lea.vmem %s5, 32
      %v2690 = vld [vmem:[%s2689] sm:$0xff]
      %v2691 = vld [vmem:[%s2689 + $0x8] sm:$0xff]
      %v2692 = vld [vmem:[%s2689 + $0x10] sm:$0xff]
      %v2693 = vld [vmem:[%s2689 + $0x18] sm:$0xff]
      %s2694 = scalar_lea.vmem %s6, 1
      %v2695 = vld [vmem:[%s2694] sm:$0x1]
      %v2697 = vlaneseq
      %v2698 = vshrl.u32 %v2697, 7
      %v2699 = vsub.s32 0, %v2698
      %v2700 = vrot.slane %v2695, %v2699
      %v2703 = vsel %vm731, %v2688, 0
      %2705 = vmatprep.subr.mxu0 0.0
      %2706 = vmatpush1.msra.mxu0 0.0
      %2707 = vmatprep.subr.mxu0 0.0
      %2708 = vmatpush1.msra.mxu0 0.0
      %2709 = vmatprep.subr.mxu0 0.0
      %2710 = vmatpush1.msra.mxu0 0.0
      %2711 = vmatprep.subr.mxu0 0.0
      %2712 = vmatpush1.msra.mxu0 0.0
      %2713 = vmatprep.subr.mxu0 0.0
      %2714 = vmatpush1.msra.mxu0 0.0
      %2715 = vmatprep.subr.mxu0 0.0
      %2716 = vmatpush1.msra.mxu0 0.0
      %2717 = vmatprep.subr.mxu0 0.0
      %2718 = vmatpush1.msra.mxu0 0.0
      %2719 = vmatprep.subr.mxu0 0.0
      %2720 = vmatpush1.msra.mxu0 0.0
      %2721 = vmatprep.subr.mxu0 0.0
      %2722 = vmatpush1.msra.mxu0 0.0
      %2723 = vmatprep.subr.mxu0 0.0
      %2724 = vmatpush1.msra.mxu0 0.0
      %2725 = vmatprep.subr.mxu0 0.0
      %2726 = vmatpush1.msra.mxu0 0.0
      %2727 = vmatprep.subr.mxu0 0.0
      %2728 = vmatpush1.msra.mxu0 0.0
      %2729 = vmatprep.subr.mxu0 0.0
      %2730 = vmatpush1.msra.mxu0 %v2693
      %2731 = vmatprep.subr.mxu0 0.0
      %2732 = vmatpush1.msra.mxu0 %v2692
      %2733 = vmatprep.subr.mxu0 0.0
      %2734 = vmatpush1.msra.mxu0 %v2691
      %2735 = vmatprep.subr.mxu0 0.0
      %2736 = vmatpush1.msra.mxu0 %v2690
      %2737 = vmatprep.subr.mxu0 0.0
      %2738 = vmatpush2.msra.mxu0 0.0
      %2739 = vmatprep.subr.mxu0 0.0
      %2740 = vmatpush2.msra.mxu0 0.0
      %2741 = vmatprep.subr.mxu0 0.0
      %2742 = vmatpush2.msra.mxu0 0.0
      %2743 = vmatprep.subr.mxu0 0.0
      %2744 = vmatpush2.msra.mxu0 0.0
      %2745 = vmatprep.subr.mxu0 0.0
      %2746 = vmatpush2.msra.mxu0 0.0
      %2747 = vmatprep.subr.mxu0 0.0
      %2748 = vmatpush2.msra.mxu0 0.0
      %2749 = vmatprep.subr.mxu0 0.0
      %2750 = vmatpush2.msra.mxu0 0.0
      %2751 = vmatprep.subr.mxu0 0.0
      %2752 = vmatpush2.msra.mxu0 0.0
      %2753 = vmatprep.subr.mxu0 0.0
      %2754 = vmatpush2.msra.mxu0 0.0
      %2755 = vmatprep.subr.mxu0 0.0
      %2756 = vmatpush2.msra.mxu0 0.0
      %2757 = vmatprep.subr.mxu0 0.0
      %2758 = vmatpush2.msra.mxu0 0.0
      %2759 = vmatprep.subr.mxu0 0.0
      %2760 = vmatpush2.msra.mxu0 0.0
      %2761 = vmatprep.subr.mxu0 0.0
      %2762 = vmatpush2.msra.mxu0 0.0
      %2763 = vmatprep.subr.mxu0 0.0
      %2764 = vmatpush2.msra.mxu0 0.0
      %2765 = vmatprep.subr.mxu0 0.0
      %2766 = vmatpush2.msra.mxu0 0.0
      %2767 = vmatprep.subr.mxu0 0.0
      %2768 = vmatpush2.msra.mxu0 0.0
      %2769 = vmatprep.mubr.f32.mxu0 0.0
      %2770 = vmatmul.mubr.f32.gmra.mxu0 %v2703
      %v2771 = vpop.f32.mrf.mxu0
      %v2772 = vadd.f32 %v2700, %v2771
      %v2773 = vpop.f32.mrf.mxu0
      %2774 = vdwg.mxu0
      %v2775 = vmul.f32 %v2772, 0.5
      %v2776 = vmul.f32 %v2772, 0.70710677
      %v2777 = verf.f32.pop %v2776
      %v2778 = vadd.f32 %v2777, 1.0
      %v2779 = vmul.f32 %v2775, %v2778
      %s2780 = scalar_lea.vmem %s7, 64
      %v2781 = vld [vmem:[%s2780] sm:$0xff]
      %v2782 = vld [vmem:[%s2780 + $0x8] sm:$0xff]
      %v2783 = vld [vmem:[%s2780 + $0x10] sm:$0xff]
      %v2784 = vld [vmem:[%s2780 + $0x18] sm:$0xff]
      %v2785 = vld [vmem:[%s2780 + $0x20] sm:$0xff]
      %v2786 = vld [vmem:[%s2780 + $0x28] sm:$0xff]
      %v2787 = vld [vmem:[%s2780 + $0x30] sm:$0xff]
      %v2788 = vld [vmem:[%s2780 + $0x38] sm:$0xff]
      %v2789 = vlaneseq
      %v2790 = vshrl.u32 %v2789, 7
      %v2791 = vsub.s32 7, %v2790
      %v2792 = vrot.slane %v1802, %v2791
      %v2794 = vsel %vm1721, %v2779, 0
      %2796 = vmatprep.subr.mxu0 0.0
      %2797 = vmatpush1.msra.mxu0 0.0
      %2798 = vmatprep.subr.mxu0 0.0
      %2799 = vmatpush1.msra.mxu0 0.0
      %2800 = vmatprep.subr.mxu0 0.0
      %2801 = vmatpush1.msra.mxu0 0.0
      %2802 = vmatprep.subr.mxu0 0.0
      %2803 = vmatpush1.msra.mxu0 0.0
      %2804 = vmatprep.subr.mxu0 0.0
      %2805 = vmatpush1.msra.mxu0 0.0
      %2806 = vmatprep.subr.mxu0 0.0
      %2807 = vmatpush1.msra.mxu0 0.0
      %2808 = vmatprep.subr.mxu0 0.0
      %2809 = vmatpush1.msra.mxu0 0.0
      %2810 = vmatprep.subr.mxu0 0.0
      %2811 = vmatpush1.msra.mxu0 0.0
      %2812 = vmatprep.subr.mxu0 0.0
      %2813 = vmatpush1.msra.mxu0 %v2788
      %2814 = vmatprep.subr.mxu0 0.0
      %2815 = vmatpush1.msra.mxu0 %v2787
      %2816 = vmatprep.subr.mxu0 0.0
      %2817 = vmatpush1.msra.mxu0 %v2786
      %2818 = vmatprep.subr.mxu0 0.0
      %2819 = vmatpush1.msra.mxu0 %v2785
      %2820 = vmatprep.subr.mxu0 0.0
      %2821 = vmatpush1.msra.mxu0 %v2784
      %2822 = vmatprep.subr.mxu0 0.0
      %2823 = vmatpush1.msra.mxu0 %v2783
      %2824 = vmatprep.subr.mxu0 0.0
      %2825 = vmatpush1.msra.mxu0 %v2782
      %2826 = vmatprep.subr.mxu0 0.0
      %2827 = vmatpush1.msra.mxu0 %v2781
      %2828 = vmatprep.subr.mxu0 0.0
      %2829 = vmatpush2.msra.mxu0 0.0
      %2830 = vmatprep.subr.mxu0 0.0
      %2831 = vmatpush2.msra.mxu0 0.0
      %2832 = vmatprep.subr.mxu0 0.0
      %2833 = vmatpush2.msra.mxu0 0.0
      %2834 = vmatprep.subr.mxu0 0.0
      %2835 = vmatpush2.msra.mxu0 0.0
      %2836 = vmatprep.subr.mxu0 0.0
      %2837 = vmatpush2.msra.mxu0 0.0
      %2838 = vmatprep.subr.mxu0 0.0
      %2839 = vmatpush2.msra.mxu0 0.0
      %2840 = vmatprep.subr.mxu0 0.0
      %2841 = vmatpush2.msra.mxu0 0.0
      %2842 = vmatprep.subr.mxu0 0.0
      %2843 = vmatpush2.msra.mxu0 0.0
      %2844 = vmatprep.subr.mxu0 0.0
      %2845 = vmatpush2.msra.mxu0 0.0
      %2846 = vmatprep.subr.mxu0 0.0
      %2847 = vmatpush2.msra.mxu0 0.0
      %2848 = vmatprep.subr.mxu0 0.0
      %2849 = vmatpush2.msra.mxu0 0.0
      %2850 = vmatprep.subr.mxu0 0.0
      %2851 = vmatpush2.msra.mxu0 0.0
      %2852 = vmatprep.subr.mxu0 0.0
      %2853 = vmatpush2.msra.mxu0 0.0
      %2854 = vmatprep.subr.mxu0 0.0
      %2855 = vmatpush2.msra.mxu0 0.0
      %2856 = vmatprep.subr.mxu0 0.0
      %2857 = vmatpush2.msra.mxu0 0.0
      %2858 = vmatprep.subr.mxu0 0.0
      %2859 = vmatpush2.msra.mxu0 0.0
      %2860 = vmatprep.mubr.f32.mxu0 0.0
      %2861 = vmatmul.mubr.f32.gmra.mxu0 %v2794
      %v2862 = vpop.f32.mrf.mxu0
      %v2863 = vadd.f32 %v2792, %v2862
      %v2864 = vpop.f32.mrf.mxu0
      %2865 = vdwg.mxu0
      %v2866 = vlaneseq
      %v2867 = vshrl.u32 %v2866, 7
      %v2868 = vsub.s32 5, %v2867
      %v2869 = vrot.slane %v1802, %v2868
      %v2870 = vmul.f32 %v2863, %v2869
      %v2871 = vadd.f32 %v2665, %v2870
      %v2872 = vld [vmem:[%s9] sm:$0x3]
      %vm2873 = vcmask 253952
      %v2874 = vsel %vm2873, %v2871, 0.0
      %2875 = vadd.xlane.f32.xlu0 %v2874
      %v2876 = vpop.xlane.xlu0 %2875
      %v2877 = vmul.f32 %v2876, %v735
      %v2878 = vsub.f32 %v2871, %v2877
      %v2879 = vmul.f32 %v2878, %v2878
      %v2880 = vsel %vm2873, %v2879, 0.0
      %2881 = vadd.xlane.f32.xlu0 %v2880
      %v2882 = vpop.xlane.xlu0 %2881
      %v2883 = vmul.f32 %v2882, %v735
      %v2884 = vadd.f32 %v2883, 1e-05
      %v2885 = vrsqrt.pop %v2884
      %v2886 = vmul.f32 %v2878, %v2885
      %v2887 = vmul.f32 %v2886, %v2872
      %v2889 = vrot.slane %v2872, 1
      %v2891 = vadd.f32 %v2887, %v2889
      %v2892 = vld [vmem:[%s10] sm:$0xff]
      %v2893 = vld [vmem:[%s10 + $0x8] sm:$0xff]
      %v2894 = vld [vmem:[%s10 + $0x10] sm:$0xff]
      %v2895 = vld [vmem:[%s10 + $0x18] sm:$0xff]
      %v2896 = vld [vmem:[%s11] sm:$0x1]
      %v2898 = vsel %vm731, %v2891, 0
      %2900 = vmatprep.subr.mxu0 0.0
      %2901 = vmatpush1.msra.mxu0 0.0
      %2902 = vmatprep.subr.mxu0 0.0
      %2903 = vmatpush1.msra.mxu0 0.0
      %2904 = vmatprep.subr.mxu0 0.0
      %2905 = vmatpush1.msra.mxu0 0.0
      %2906 = vmatprep.subr.mxu0 0.0
      %2907 = vmatpush1.msra.mxu0 0.0
      %2908 = vmatprep.subr.mxu0 0.0
      %2909 = vmatpush1.msra.mxu0 0.0
      %2910 = vmatprep.subr.mxu0 0.0
      %2911 = vmatpush1.msra.mxu0 0.0
      %2912 = vmatprep.subr.mxu0 0.0
      %2913 = vmatpush1.msra.mxu0 0.0
      %2914 = vmatprep.subr.mxu0 0.0
      %2915 = vmatpush1.msra.mxu0 0.0
      %2916 = vmatprep.subr.mxu0 0.0
      %2917 = vmatpush1.msra.mxu0 0.0
      %2918 = vmatprep.subr.mxu0 0.0
      %2919 = vmatpush1.msra.mxu0 0.0
      %2920 = vmatprep.subr.mxu0 0.0
      %2921 = vmatpush1.msra.mxu0 0.0
      %2922 = vmatprep.subr.mxu0 0.0
      %2923 = vmatpush1.msra.mxu0 0.0
      %2924 = vmatprep.subr.mxu0 0.0
      %2925 = vmatpush1.msra.mxu0 %v2895
      %2926 = vmatprep.subr.mxu0 0.0
      %2927 = vmatpush1.msra.mxu0 %v2894
      %2928 = vmatprep.subr.mxu0 0.0
      %2929 = vmatpush1.msra.mxu0 %v2893
      %2930 = vmatprep.subr.mxu0 0.0
      %2931 = vmatpush1.msra.mxu0 %v2892
      %2932 = vmatprep.subr.mxu0 0.0
      %2933 = vmatpush2.msra.mxu0 0.0
      %2934 = vmatprep.subr.mxu0 0.0
      %2935 = vmatpush2.msra.mxu0 0.0
      %2936 = vmatprep.subr.mxu0 0.0
      %2937 = vmatpush2.msra.mxu0 0.0
      %2938 = vmatprep.subr.mxu0 0.0
      %2939 = vmatpush2.msra.mxu0 0.0
      %2940 = vmatprep.subr.mxu0 0.0
      %2941 = vmatpush2.msra.mxu0 0.0
      %2942 = vmatprep.subr.mxu0 0.0
      %2943 = vmatpush2.msra.mxu0 0.0
      %2944 = vmatprep.subr.mxu0 0.0
      %2945 = vmatpush2.msra.mxu0 0.0
      %2946 = vmatprep.subr.mxu0 0.0
      %2947 = vmatpush2.msra.mxu0 0.0
      %2948 = vmatprep.subr.mxu0 0.0
      %2949 = vmatpush2.msra.mxu0 0.0
      %2950 = vmatprep.subr.mxu0 0.0
      %2951 = vmatpush2.msra.mxu0 0.0
      %2952 = vmatprep.subr.mxu0 0.0
      %2953 = vmatpush2.msra.mxu0 0.0
      %2954 = vmatprep.subr.mxu0 0.0
      %2955 = vmatpush2.msra.mxu0 0.0
      %2956 = vmatprep.subr.mxu0 0.0
      %2957 = vmatpush2.msra.mxu0 0.0
      %2958 = vmatprep.subr.mxu0 0.0
      %2959 = vmatpush2.msra.mxu0 0.0
      %2960 = vmatprep.subr.mxu0 0.0
      %2961 = vmatpush2.msra.mxu0 0.0
      %2962 = vmatprep.subr.mxu0 0.0
      %2963 = vmatpush2.msra.mxu0 0.0
      %2964 = vmatprep.mubr.f32.mxu0 0.0
      %2965 = vmatmul.mubr.f32.gmra.mxu0 %v2898
      %v2966 = vpop.f32.mrf.mxu0
      %v2967 = vadd.f32 %v2896, %v2966
      %v2968 = vpop.f32.mrf.mxu0
      %2969 = vdwg.mxu0
      %vm2970 = vcmask 1040384
      %v2971 = vsel %vm2970, %v2967, 0.0
      %2972 = vst [vmem:[%s411] sm:$0xff] %v2971
      %p2973 = scmp.lt.s32.totalorder %s23, 1
      %s2974 = scalar_select %p2973, %s23, 1
      %s2975 = smul.addr %s2974, 8
      %s2976 = scalar_lea.vmem %s12, %s2975
      // Predicated region
      $region69: #{vit_forward.1} parent=67 // pred_check
        %p2977 = pneg %p298
      $region70: #{vit_forward.1} parent=67 // pred_check_branch
        %2979 = sbr.rel (%p2977) target = $region72
      $region71: #{vit_forward.1} parent=67 // pred_region
        _
      $region72: #{vit_forward.1} parent=67 // pred_fallthru
        _
    $region68: #{vit_forward.1} parent=5 // pred_fallthru
      _
    %p2980 = scmp.le.s32.totalorder 2, %s18
    // Predicated region
    $region73: #{vit_forward.1} parent=5 // pred_check
      %p2981 = pneg %p2980
    $region74: #{vit_forward.1} parent=5 // pred_check_branch
      %2983 = sbr.rel (%p2981) target = $region76
    $region75: #{vit_forward.1} parent=5 // pred_region
      %s2984 = ssub.s32 %s18, 2
      // Predicated region
      $region77: #{vit_forward.1} parent=75 // pred_check
        %p2985 = pneg %p304
      $region78: #{vit_forward.1} parent=75 // pred_check_branch
        %2987 = sbr.rel (%p2985) target = $region80
      $region79: #{vit_forward.1} parent=75 // pred_region
        %p2988 = scmp.lt.s32.totalorder %s24, 1
        %s2989 = scalar_select %p2988, %s24, 1
        %s2990 = smul.addr %s2989, 8
        %s2991 = scalar_lea.vmem %s12, %s2990
      $region80: #{vit_forward.1} parent=75 // pred_fallthru
        _
    $region76: #{vit_forward.1} parent=5 // pred_fallthru
      _
  $region6: #{vit_forward.1} parent=0 // loop_footer
    %s22 = sadd.s32 1, %s18
  $region7: #{vit_forward.1} parent=0 // loop_footer_branch
    %17 = sbr.rel target = $region3
  $region8: #{vit_forward.1} parent=0 // loop_exit
    _

</llo_original>
